<compile_context>
chip_gen: v6e
topology: v6e:2x2x1
jax: 0.10.0
libtpu: 0.0.40
codegen_flags: <defaults>
</compile_context>

<pallas_src>
import functools

import jax
import jax.numpy as jnp
from jax.experimental import pallas as pl
from jax.experimental.pallas import tpu as pltpu


# --------------------------- VMEM budgeting ---------------------------------
def _vmem_budget():
    """(vmem_limit_bytes, per_input_buffer_budget), gated on chip VMEM size."""
    cap = None
    try:
        cap = getattr(pltpu.get_tpu_info(), "vmem_capacity_bytes", None)
    except Exception:
        cap = None
    if cap is not None and cap >= 128 * 1024 * 1024:   # v5e / v6e (128 MiB)
        return 48 * 1024 * 1024, 12 * 1024 * 1024
    # v7x-class (64 MiB physical) or unknown: stay conservative.
    return 32 * 1024 * 1024, 8 * 1024 * 1024


# ----------------------------- helpers --------------------------------------
def _l2_normalize(v, eps=1e-12):
    # normalize along the last axis, keepdims — matches the module's l2_normalize.
    ss = jnp.sum(v * v, axis=1, keepdims=True)
    return v * jax.lax.rsqrt(jnp.maximum(ss, eps))


def _argmax_onehot(s):
    """Row-wise top-1 one-hot (f32), first-index tie-break (matches argmax/topk)."""
    mx = jnp.max(s, axis=1, keepdims=True)
    col = jax.lax.broadcasted_iota(jnp.int32, s.shape, 1)
    masked = jnp.where(s == mx, col, jnp.int32(s.shape[1]))
    idx = jnp.min(masked, axis=1, keepdims=True)
    return (col == idx).astype(jnp.float32)


def _divisors(n):
    return [d for d in range(1, n + 1) if n % d == 0]


def _pick_tiles(b, n, c, *, itemsize, per_buffer_budget, seq_tile):
    """Pick (bt, nt) obeying TPU layout rules within the VMEM budget.

    nt is the sublane dim of the (nt, C) input tile: multiple of 8/16/32 for
    4/2/1-byte dtypes (or the full N).  bt is the sublane dim of the (bt, C)
    rowsum block: multiple of 8 or the full B.
    """
    sub = {4: 8, 2: 16, 1: 32}.get(itemsize, 8)
    nt_mult = sorted([d for d in _divisors(n) if d % sub == 0], reverse=True)
    nt_cands = [d for d in nt_mult if d <= max(seq_tile, sub)]
    if not nt_cands:
        nt_cands = [n]                       # full token axis is always legal

    bt_all = sorted({d for d in _divisors(b) if d % 8 == 0} | {b}, reverse=True)
    # Prefer >=2 tiles along the parallel (batch) grid axis so both v7x
    # TensorCores stream x_embed; on 1-TC chips this adds one cheap grid step.
    bt_pref = [d for d in bt_all if d <= b // 2] or bt_all
    bt_order = bt_pref + [d for d in bt_all if d not in bt_pref]

    for nt in nt_cands:                      # taller token tiles first (v5e)
        for bt in bt_order:
            if bt * nt * c * itemsize <= per_buffer_budget:
                return bt, nt
    # Nothing fits the budget (huge C / awkward N): smallest legal tile; the
    # caller raises the scoped VMEM limit to cover it (still correct).
    # TODO(synk): tile the C axis too for very large embed dims.
    return min(bt_all), min(nt_cands)


# -------- stage 1: fused rowsum reduction + x passthrough writeback ----------
def _rowsum_copy_kernel(x_ref, rs_ref, out_ref, copy_sem, *, prompt_rows):
    i = pl.program_id(0)
    j = pl.program_id(1)
    bt, nt, _ = x_ref.shape

    # Kick off the passthrough write first so it overlaps the reduction and the
    # pipeline's prefetch of the next block (read j+1 || write j).
    cp = pltpu.make_async_copy(
        x_ref,
        out_ref.at[pl.ds(i * bt, bt), pl.ds(prompt_rows + j * nt, nt), :],
        copy_sem,
    )
    cp.start()

    @pl.when(j == 0)
    def _():
        rs_ref[...] = jnp.zeros_like(rs_ref)

    rs_ref[...] += jnp.sum(x_ref[...].astype(jnp.float32), axis=1)

    cp.wait()


def _rowsum_and_passthrough(x, prompt_rows, *, bt, nt, vmem_limit):
    B, N, C = x.shape
    itemsize = x.dtype.itemsize
    kernel = functools.partial(_rowsum_copy_kernel, prompt_rows=prompt_rows)
    return pl.pallas_call(
        kernel,
        out_shape=(
            jax.ShapeDtypeStruct((B, C), jnp.float32),                 # row sums
            jax.ShapeDtypeStruct((B, prompt_rows + N, C), x.dtype),    # final buf
        ),
        grid_spec=pltpu.PrefetchScalarGridSpec(
            num_scalar_prefetch=0,
            grid=(B // bt, N // nt),
            in_specs=[pl.BlockSpec((bt, nt, C), lambda i, j: (i, j, 0))],
            out_specs=(
                pl.BlockSpec((bt, C), lambda i, j: (i, 0)),
                pl.BlockSpec(memory_space=pl.ANY),
            ),
            scratch_shapes=[pltpu.SemaphoreType.DMA],
        ),
        compiler_params=pltpu.CompilerParams(
            dimension_semantics=("parallel", "arbitrary"),
            vmem_limit_bytes=vmem_limit,
        ),
        cost_estimate=pl.CostEstimate(
            flops=B * N * C,
            transcendentals=0,
            bytes_accessed=2 * B * N * C * itemsize + B * C * 4,
        ),
    )(x)


# ------ stage 2: selection / gather / reduce_sim, fills rows [0, 2L) ---------
def _selection_kernel(rowsum_ref, pkey_ref, rkey_ref, pflat_ref, rflat_ref,
                      buf_ref, out_ref, sim_ref, pslab_ref, copy_sem,
                      *, n_tokens, length):
    del buf_ref   # aliased with out_ref; the x passthrough rows are already there
    B, C = rowsum_ref.shape
    L = length
    inv_b = 1.0 / B
    out_dt = pslab_ref.dtype

    rowsum = rowsum_ref[...]                                  # (B, C) f32
    x_mean = rowsum * (1.0 / n_tokens)                        # mean over tokens

    pkey = pkey_ref[...].astype(jnp.float32)                  # (P, C)
    prompt_norm = _l2_normalize(pkey)                         # (P, C)
    x_norm = _l2_normalize(x_mean)                            # (B, C)

    sim = jax.lax.dot_general(x_norm, prompt_norm, (((1,), (1,)), ((), ())),
                              preferred_element_type=jnp.float32)     # (B, P)
    oh1 = _argmax_onehot(sim)                                          # (B, P)

    # reduce_sim (main pool): torch (B,1,C)*(B,1,N,C)->(B,B,N,C) sum / B
    # factorizes into (sum_b prompt_norm[idx_b]) . (sum_{b,n} x[b,n]) / B.
    sel_key_norm = jnp.dot(oh1, prompt_norm, preferred_element_type=jnp.float32)
    key_sum = jnp.sum(sel_key_norm, axis=0, keepdims=True)             # (1, C)
    x_sum = jnp.sum(rowsum, axis=0, keepdims=True)                     # (1, C)
    reduce_sim1 = jnp.sum(key_sum * x_sum) * inv_b

    # residual branch (uses the raw, un-normalized prompt keys).
    residual_norm = _l2_normalize(rkey_ref[...].astype(jnp.float32))   # (P, C)
    sel_key_raw = jnp.dot(oh1, pkey, preferred_element_type=jnp.float32)
    residual = sel_key_raw - x_norm                                    # (B, C)

    rsim = jax.lax.dot_general(residual, residual_norm, (((1,), (1,)), ((), ())),
                               preferred_element_type=jnp.float32)     # (B, P)
    oh2 = _argmax_onehot(rsim)

    sel_rkey_norm = jnp.dot(oh2, residual_norm, preferred_element_type=jnp.float32)
    reduce_sim2 = jnp.sum(sel_rkey_norm * residual) * inv_b

    # Top-1 prompt gather: one lane-dense (B,P)x(P,L*C) matmul per pool (pools
    # are passed flattened to (P, L*C) by the wrapper), MXU-native pool dtype,
    # f32 accumulation.  Exact because oh1/oh2 are one-hot.
    pool_dt = pflat_ref.dtype
    res_slab = jnp.dot(oh2.astype(pool_dt), rflat_ref[...],
                       preferred_element_type=jnp.float32)             # (B, L*C)
    main_slab = jnp.dot(oh1.astype(pool_dt), pflat_ref[...],
                        preferred_element_type=jnp.float32)            # (B, L*C)

    # Stage the (B, 2L, C) prompt slab in VMEM (residual rows first, then main),
    # using cheap 128-aligned lane slices of the slabs (no lane-split reshape).
    for l in range(L):
        r_row = res_slab[:, l * C:(l + 1) * C].astype(out_dt)
        m_row = main_slab[:, l * C:(l + 1) * C].astype(out_dt)
        pslab_ref[:, l:l + 1, :] = r_row[:, None, :]
        pslab_ref[:, L + l:L + l + 1, :] = m_row[:, None, :]

    # One dense DMA writes rows [0, 2L) of the (aliased) final buffer; rows
    # [2L, 2L+N) were already written by the rowsum/passthrough kernel.
    cp = pltpu.make_async_copy(pslab_ref, out_ref.at[:, 0:2 * L, :], copy_sem)
    cp.start()

    sim_ref[0, 0] = reduce_sim1 + reduce_sim2

    cp.wait()


def _select_and_fill(row_sums, prompt, prompt_key, residual_prompt,
                     residual_prompt_key, big_buf, *, n_tokens, vmem_limit):
    B, C = row_sums.shape
    P, L, _ = prompt.shape
    prompt_flat = prompt.reshape(P, L * C)            # contiguous reshape: free
    rprompt_flat = residual_prompt.reshape(P, L * C)

    kernel = functools.partial(_selection_kernel, n_tokens=n_tokens, length=L)
    out, rs = pl.pallas_call(
        kernel,
        out_shape=(
            jax.ShapeDtypeStruct(big_buf.shape, big_buf.dtype),
            jax.ShapeDtypeStruct((1, 1), jnp.float32),
        ),
        in_specs=[
            pl.BlockSpec(memory_space=pltpu.MemorySpace.VMEM),   # row_sums
            pl.BlockSpec(memory_space=pltpu.MemorySpace.VMEM),   # prompt_key
            pl.BlockSpec(memory_space=pltpu.MemorySpace.VMEM),   # residual key
            pl.BlockSpec(memory_space=pltpu.MemorySpace.VMEM),   # prompt (P,L*C)
            pl.BlockSpec(memory_space=pltpu.MemorySpace.VMEM),   # res.   (P,L*C)
            pl.BlockSpec(memory_space=pl.ANY),                   # big buffer
        ],
        out_specs=(
            pl.BlockSpec(memory_space=pl.ANY),                   # aliased output
            pl.BlockSpec(memory_space=pltpu.MemorySpace.SMEM),   # reduce_sim
        ),
        scratch_shapes=[
            pltpu.VMEM((B, 2 * L, C), big_buf.dtype),
            pltpu.SemaphoreType.DMA,
        ],
        input_output_aliases={5: 0},
        compiler_params=pltpu.CompilerParams(vmem_limit_bytes=vmem_limit),
    )(row_sums, prompt_key, residual_prompt_key, prompt_flat, rprompt_flat,
      big_buf)
    return out, rs


# ------------------------------- wrapper -------------------------------------
def rq_prompt_forward(x_embed, prompt, prompt_key, residual_prompt,
                      residual_prompt_key, *, seq_tile=512):
    """Forward of RQ_Prompt (top_k == 1).

    Returns (prompted_embedding (B, 2L+N, C), reduce_sim scalar).
    """
    B, N, C = x_embed.shape
    P, L, _ = prompt.shape
    two_l = 2 * L

    vmem_limit, per_buffer = _vmem_budget()
    bt, nt = _pick_tiles(B, N, C, itemsize=x_embed.dtype.itemsize,
                         per_buffer_budget=per_buffer, seq_tile=seq_tile)
    # Guard: if an awkward shape forced an oversized tile, raise the scoped
    # VMEM limit so the double-buffered input still compiles.
    tile_bytes = bt * nt * C * x_embed.dtype.itemsize
    vmem_limit = max(vmem_limit, 2 * tile_bytes + 2 * bt * C * 4 + (1 << 20))

    # Stage 1: read x once; produce per-batch row sums AND write the x
    # passthrough rows [2L, 2L+N) of the final buffer.
    row_sums, big_buf = _rowsum_and_passthrough(
        x_embed, two_l, bt=bt, nt=nt, vmem_limit=vmem_limit)

    # Stage 2: selection / gather / reduce_sim; fills rows [0, 2L) in place.
    # TODO(synk): for very large pools (P*L*C in the tens of MiB) replace the
    # one-hot matmul gather with an index-driven DMA gather.
    out, rs = _select_and_fill(row_sums, prompt, prompt_key, residual_prompt,
                               residual_prompt_key, big_buf,
                               n_tokens=N, vmem_limit=vmem_limit)
    return out, rs[0, 0]


# ---------------- pure-JAX reference (mirrors the PyTorch forward) -----------
def rq_prompt_reference(x_embed, prompt, prompt_key, residual_prompt,
                        residual_prompt_key):
    B, N, C = x_embed.shape

    def l2n(v):
        ss = jnp.sum(v ** 2, axis=1, keepdims=True)
        return v * jax.lax.rsqrt(jnp.maximum(ss, 1e-12))

    x_mean = jnp.mean(x_embed, axis=1)
    prompt_norm = l2n(prompt_key)
    x_norm = l2n(x_mean)
    sim = x_norm @ prompt_norm.T
    idx = jnp.argmax(sim, axis=1)[:, None]                      # top_k = 1

    batched_prompt = prompt[idx[:, 0]].reshape(B, -1, C)
    bkn = prompt_norm[idx]                                      # (B,1,C)
    reduce_sim = jnp.sum(bkn * x_embed[:, None]) / B            # (B,B,N,C)

    rnorm = l2n(residual_prompt_key)
    residual = prompt_key[idx][:, 0] - x_norm                   # (B,C)
    rsim = residual @ rnorm.T
    ridx = jnp.argmax(rsim, axis=1)[:, None]
    r_batched_prompt = residual_prompt[ridx[:, 0]].reshape(B, -1, C)

    out = jnp.concatenate([r_batched_prompt, batched_prompt, x_embed], axis=1)
    r_reduce_sim = jnp.sum(rnorm[ridx] * residual[:, None]) / B
    return out, reduce_sim + r_reduce_sim


if __name__ == "__main__":
    # Small shapes consistent with the module.  2L = 10 (not 8-aligned) and
    # B = 16 with bt = 8 exercise the arbitrary-offset passthrough DMA and the
    # 2-tile parallel batch axis; seq_tile=8 exercises the pipelined N grid.
    B, N, C = 16, 32, 128
    P, L = 10, 5
    # top_k = 1 (fixed; the module's squeeze/broadcast logic implies top_k == 1)

    key = jax.random.PRNGKey(0)
    k0, k1, k2, k3, k4 = jax.random.split(key, 5)
    x_embed = jax.random.normal(k0, (B, N, C), dtype=jnp.float32)
    # deterministic uniform(-1, 1) init, matching nn.init.uniform_(-1, 1)
    prompt = jax.random.uniform(k1, (P, L, C), jnp.float32, -1.0, 1.0)
    prompt_key = jax.random.uniform(k2, (P, C), jnp.float32, -1.0, 1.0)
    residual_prompt = jax.random.uniform(k3, (P, L, C), jnp.float32, -1.0, 1.0)
    residual_prompt_key = jax.random.uniform(k4, (P, C), jnp.float32, -1.0, 1.0)

    fwd = jax.jit(functools.partial(rq_prompt_forward, seq_tile=8))
    out, reduce_sim = fwd(x_embed, prompt, prompt_key,
                          residual_prompt, residual_prompt_key)
    jax.block_until_ready((out, reduce_sim))

    ref_out, ref_sim = rq_prompt_reference(x_embed, prompt, prompt_key,
                                           residual_prompt, residual_prompt_key)
    assert out.shape == (B, 2 * L + N, C)
    assert jnp.allclose(out, ref_out, atol=1e-4, rtol=1e-5), \
        float(jnp.max(jnp.abs(out - ref_out)))
    assert jnp.allclose(reduce_sim, ref_sim, atol=1e-2, rtol=2e-3), \
        (float(reduce_sim), float(ref_sim))

    print("KERNEL_OK")
</pallas_src>

<mosaic_0001>
module attributes {stable_mosaic.version = 11 : i64} {
  func.func @_rowsum_copy_kernel(%arg0: i32, %arg1: i32, %arg2: memref<8x8x128xf32, #tpu.memory_space<vmem>>, %arg3: memref<8x128xf32, #tpu.memory_space<vmem>>, %arg4: memref<16x42x128xf32, #tpu.memory_space<any>>, %arg5: memref<!tpu.dma_semaphore, #tpu.memory_space<semaphore_mem>>) attributes {dimension_semantics = [#tpu.dimension_semantics<parallel>, #tpu.dimension_semantics<arbitrary>], iteration_bounds = array<i64: 2, 4>, scalar_prefetch = 0 : i64, scratch_operands = 1 : i64, tpu.core_type = #tpu.core_type<tc>, window_params = [{transform_indices = @transform_0, window_bounds = array<i64: 8, 8, 128>}, {transform_indices = @transform_1, window_bounds = array<i64: 8, 128>}, {}]} {
    %c8_i32 = arith.constant 8 : i32
    %0 = arith.muli %arg0, %c8_i32 : i32
    %c8_i32_0 = arith.constant 8 : i32
    %1 = arith.muli %arg1, %c8_i32_0 : i32
    %c10_i32 = arith.constant 10 : i32
    %2 = arith.addi %c10_i32, %1 : i32
    %c0_i32 = arith.constant 0 : i32
    %3 = tpu.memref_slice %arg4[%0, %2, %c0_i32] : memref<16x42x128xf32, #tpu.memory_space<any>> -> memref<8x8x128xf32, #tpu.memory_space<any>>
    tpu.enqueue_dma source(%arg2 : memref<8x8x128xf32, #tpu.memory_space<vmem>>) target(%3 : memref<8x8x128xf32, #tpu.memory_space<any>>) target_semaphore(%arg5 : memref<!tpu.dma_semaphore, #tpu.memory_space<semaphore_mem>>)
    %c0_i32_1 = arith.constant 0 : i32
    %4 = arith.cmpi eq, %arg1, %c0_i32_1 : i32
    %5 = arith.extui %4 : i1 to i32
    %c0_i32_2 = arith.constant 0 : i32
    %6 = arith.cmpi ne, %5, %c0_i32_2 : i32
    scf.if %6 {
      %cst_10 = arith.constant 0.000000e+00 : f32
      %13 = vector.broadcast %cst_10 : f32 to vector<8x128xf32>
      %c0_11 = arith.constant 0 : index
      %c0_12 = arith.constant 0 : index
      %14 = vector.load %arg3[%c0_11, %c0_12] : memref<8x128xf32, #tpu.memory_space<vmem>>, vector<8x128xf32>
      tpu.vector_store %arg3[%c0_11, %c0_12], %13 {strides = array<i32>} : memref<8x128xf32, #tpu.memory_space<vmem>>, vector<8x128xf32>,
    } else {
    }
    %c0 = arith.constant 0 : index
    %c0_3 = arith.constant 0 : index
    %7 = vector.load %arg3[%c0, %c0_3] : memref<8x128xf32, #tpu.memory_space<vmem>>, vector<8x128xf32>
    %c0_4 = arith.constant 0 : index
    %c0_5 = arith.constant 0 : index
    %c0_6 = arith.constant 0 : index
    %8 = vector.load %arg2[%c0_4, %c0_5, %c0_6] : memref<8x8x128xf32, #tpu.memory_space<vmem>>, vector<8x8x128xf32>
    %cst = arith.constant dense<0.000000e+00> : vector<8x128xf32>
    %9 = vector.multi_reduction <add>, %8, %cst [1] : vector<8x8x128xf32> to vector<8x128xf32>
    %10 = arith.addf %7, %9 : vector<8x128xf32>
    %c0_7 = arith.constant 0 : index
    %c0_8 = arith.constant 0 : index
    %11 = vector.load %arg3[%c0_7, %c0_8] : memref<8x128xf32, #tpu.memory_space<vmem>>, vector<8x128xf32>
    tpu.vector_store %arg3[%c0_7, %c0_8], %10 {strides = array<i32>} : memref<8x128xf32, #tpu.memory_space<vmem>>, vector<8x128xf32>,
    %c0_i32_9 = arith.constant 0 : i32
    %12 = tpu.memref_slice %arg4[%0, %2, %c0_i32_9] : memref<16x42x128xf32, #tpu.memory_space<any>> -> memref<8x8x128xf32, #tpu.memory_space<any>>
    tpu.wait_dma2 semaphore(%arg5 : memref<!tpu.dma_semaphore, #tpu.memory_space<semaphore_mem>>) src(%arg2 : memref<8x8x128xf32, #tpu.memory_space<vmem>>) dst(%12 : memref<8x8x128xf32, #tpu.memory_space<any>>)
    return
  }
  func.func @transform_0(%arg0: i32, %arg1: i32) -> (i32, i32, i32) {
    %c0_i32 = arith.constant 0 : i32
    %c0_i32_0 = arith.constant 0 : i32
    return %arg0, %arg1, %c0_i32 : i32, i32, i32
  }
  func.func @transform_1(%arg0: i32, %arg1: i32) -> (i32, i32) {
    %c0_i32 = arith.constant 0 : i32
    %c0_i32_0 = arith.constant 0 : i32
    return %arg0, %c0_i32 : i32, i32
  }
}

module attributes {stable_mosaic.version = 11 : i64} {
  func.func @_selection_kernel(%arg0: memref<16x128xf32, #tpu.memory_space<vmem>>, %arg1: memref<10x128xf32, #tpu.memory_space<vmem>>, %arg2: memref<10x128xf32, #tpu.memory_space<vmem>>, %arg3: memref<10x640xf32, #tpu.memory_space<vmem>>, %arg4: memref<10x640xf32, #tpu.memory_space<vmem>>, %arg5: memref<16x42x128xf32, #tpu.memory_space<any>>, %arg6: memref<16x42x128xf32, #tpu.memory_space<any>>, %arg7: memref<1x1xf32, #tpu.memory_space<smem>>, %arg8: memref<16x10x128xf32, #tpu.memory_space<vmem>>, %arg9: memref<!tpu.dma_semaphore, #tpu.memory_space<semaphore_mem>>) attributes {dimension_semantics = [], scalar_prefetch = 0 : i64, scratch_operands = 2 : i64, tpu.core_type = #tpu.core_type<tc>} {
    %c0 = arith.constant 0 : index
    %c0_0 = arith.constant 0 : index
    %0 = vector.load %arg0[%c0, %c0_0] : memref<16x128xf32, #tpu.memory_space<vmem>>, vector<16x128xf32>
    %cst = arith.constant 3.125000e-02 : f32
    %1 = vector.broadcast %cst : f32 to vector<16x128xf32>
    %2 = arith.mulf %0, %1 : vector<16x128xf32>
    %c0_1 = arith.constant 0 : index
    %c0_2 = arith.constant 0 : index
    %3 = vector.load %arg1[%c0_1, %c0_2] : memref<10x128xf32, #tpu.memory_space<vmem>>, vector<10x128xf32>
    %4 = arith.mulf %3, %3 : vector<10x128xf32>
    %cst_3 = arith.constant dense<0.000000e+00> : vector<10xf32>
    %5 = vector.multi_reduction <add>, %4, %cst_3 [1] : vector<10x128xf32> to vector<10xf32>
    %6 = vector.shape_cast %5 : vector<10xf32> to vector<10x1xf32>
    %cst_4 = arith.constant 9.99999996E-13 : f32
    %7 = vector.broadcast %cst_4 : f32 to vector<10x1xf32>
    %8 = arith.maximumf %6, %7 : vector<10x1xf32>
    %9 = math.rsqrt %8 : vector<10x1xf32>
    %10 = vector.broadcast %9 : vector<10x1xf32> to vector<10x128xf32>
    %11 = arith.mulf %3, %10 : vector<10x128xf32>
    %12 = arith.mulf %2, %2 : vector<16x128xf32>
    %cst_5 = arith.constant dense<0.000000e+00> : vector<16xf32>
    %13 = vector.multi_reduction <add>, %12, %cst_5 [1] : vector<16x128xf32> to vector<16xf32>
    %14 = vector.shape_cast %13 : vector<16xf32> to vector<16x1xf32>
    %cst_6 = arith.constant 9.99999996E-13 : f32
    %15 = vector.broadcast %cst_6 : f32 to vector<16x1xf32>
    %16 = arith.maximumf %14, %15 : vector<16x1xf32>
    %17 = math.rsqrt %16 : vector<16x1xf32>
    %18 = vector.broadcast %17 : vector<16x1xf32> to vector<16x128xf32>
    %19 = arith.mulf %2, %18 : vector<16x128xf32>
    %cst_7 = arith.constant dense<0.000000e+00> : vector<16x10xf32>
    %20 = tpu.matmul %19, %11, %cst_7 {dimension_numbers = #tpu.dot_dimension_numbers<[1], [1], [0], [0], [0, 0, 1, 0], [], []>} : vector<16x128xf32>, vector<10x128xf32>, vector<16x10xf32> -> vector<16x10xf32>
    %cst_8 = arith.constant dense<0xFF800000> : vector<16xf32>
    %21 = vector.multi_reduction <maximumf>, %20, %cst_8 [1] : vector<16x10xf32> to vector<16xf32>
    %22 = vector.shape_cast %21 : vector<16xf32> to vector<16x1xf32>
    %23 = tpu.iota {dimensions = array<i32: 1>} : vector<16x10xi32>
    %24 = vector.broadcast %22 : vector<16x1xf32> to vector<16x10xf32>
    %25 = arith.cmpf oeq, %20, %24 : vector<16x10xf32>
    %c10_i32 = arith.constant 10 : i32
    %26 = vector.broadcast %c10_i32 : i32 to vector<16x10xi32>
    %27 = arith.select %25, %23, %26 : vector<16x10xi1>, vector<16x10xi32>
    %cst_9 = arith.constant dense<2147483647> : vector<16xi32>
    %28 = vector.multi_reduction <minsi>, %27, %cst_9 [1] : vector<16x10xi32> to vector<16xi32>
    %29 = vector.shape_cast %28 : vector<16xi32> to vector<16x1xi32>
    %30 = vector.broadcast %29 : vector<16x1xi32> to vector<16x10xi32>
    %31 = arith.cmpi eq, %23, %30 : vector<16x10xi32>
    %32 = arith.extui %31 : vector<16x10xi1> to vector<16x10xi32>
    %33 = arith.sitofp %32 : vector<16x10xi32> to vector<16x10xf32>
    %cst_10 = arith.constant dense<0.000000e+00> : vector<16x128xf32>
    %34 = tpu.matmul %33, %11, %cst_10 {dimension_numbers = #tpu.dot_dimension_numbers<[1], [0], [0], [1], [0, 0, 1, 1], [], []>} : vector<16x10xf32>, vector<10x128xf32>, vector<16x128xf32> -> vector<16x128xf32>
    %cst_11 = arith.constant dense<0.000000e+00> : vector<128xf32>
    %35 = vector.multi_reduction <add>, %34, %cst_11 [0] : vector<16x128xf32> to vector<128xf32>
    %36 = vector.shape_cast %35 : vector<128xf32> to vector<1x128xf32>
    %cst_12 = arith.constant dense<0.000000e+00> : vector<128xf32>
    %37 = vector.multi_reduction <add>, %0, %cst_12 [0] : vector<16x128xf32> to vector<128xf32>
    %38 = vector.shape_cast %37 : vector<128xf32> to vector<1x128xf32>
    %39 = arith.mulf %36, %38 : vector<1x128xf32>
    %40 = vector.shape_cast %39 : vector<1x128xf32> to vector<1x1x128xf32>
    %cst_13 = arith.constant dense<0.000000e+00> : vector<1xf32>
    %41 = vector.multi_reduction <add>, %40, %cst_13 [1, 2] : vector<1x1x128xf32> to vector<1xf32>
    %42 = vector.shape_cast %41 : vector<1xf32> to vector<1x1x1xf32>
    %43 = vector.extract %42[0, 0, 0] : f32 from vector<1x1x1xf32>
    %cst_14 = arith.constant 6.250000e-02 : f32
    %44 = arith.mulf %43, %cst_14 : f32
    %c0_15 = arith.constant 0 : index
    %c0_16 = arith.constant 0 : index
    %45 = vector.load %arg2[%c0_15, %c0_16] : memref<10x128xf32, #tpu.memory_space<vmem>>, vector<10x128xf32>
    %46 = arith.mulf %45, %45 : vector<10x128xf32>
    %cst_17 = arith.constant dense<0.000000e+00> : vector<10xf32>
    %47 = vector.multi_reduction <add>, %46, %cst_17 [1] : vector<10x128xf32> to vector<10xf32>
    %48 = vector.shape_cast %47 : vector<10xf32> to vector<10x1xf32>
    %cst_18 = arith.constant 9.99999996E-13 : f32
    %49 = vector.broadcast %cst_18 : f32 to vector<10x1xf32>
    %50 = arith.maximumf %48, %49 : vector<10x1xf32>
    %51 = math.rsqrt %50 : vector<10x1xf32>
    %52 = vector.broadcast %51 : vector<10x1xf32> to vector<10x128xf32>
    %53 = arith.mulf %45, %52 : vector<10x128xf32>
    %cst_19 = arith.constant dense<0.000000e+00> : vector<16x128xf32>
    %54 = tpu.matmul %33, %3, %cst_19 {dimension_numbers = #tpu.dot_dimension_numbers<[1], [0], [0], [1], [0, 0, 1, 1], [], []>} : vector<16x10xf32>, vector<10x128xf32>, vector<16x128xf32> -> vector<16x128xf32>
    %55 = arith.subf %54, %19 : vector<16x128xf32>
    %cst_20 = arith.constant dense<0.000000e+00> : vector<16x10xf32>
    %56 = tpu.matmul %55, %53, %cst_20 {dimension_numbers = #tpu.dot_dimension_numbers<[1], [1], [0], [0], [0, 0, 1, 0], [], []>} : vector<16x128xf32>, vector<10x128xf32>, vector<16x10xf32> -> vector<16x10xf32>
    %cst_21 = arith.constant dense<0xFF800000> : vector<16xf32>
    %57 = vector.multi_reduction <maximumf>, %56, %cst_21 [1] : vector<16x10xf32> to vector<16xf32>
    %58 = vector.shape_cast %57 : vector<16xf32> to vector<16x1xf32>
    %59 = tpu.iota {dimensions = array<i32: 1>} : vector<16x10xi32>
    %60 = vector.broadcast %58 : vector<16x1xf32> to vector<16x10xf32>
    %61 = arith.cmpf oeq, %56, %60 : vector<16x10xf32>
    %c10_i32_22 = arith.constant 10 : i32
    %62 = vector.broadcast %c10_i32_22 : i32 to vector<16x10xi32>
    %63 = arith.select %61, %59, %62 : vector<16x10xi1>, vector<16x10xi32>
    %cst_23 = arith.constant dense<2147483647> : vector<16xi32>
    %64 = vector.multi_reduction <minsi>, %63, %cst_23 [1] : vector<16x10xi32> to vector<16xi32>
    %65 = vector.shape_cast %64 : vector<16xi32> to vector<16x1xi32>
    %66 = vector.broadcast %65 : vector<16x1xi32> to vector<16x10xi32>
    %67 = arith.cmpi eq, %59, %66 : vector<16x10xi32>
    %68 = arith.extui %67 : vector<16x10xi1> to vector<16x10xi32>
    %69 = arith.sitofp %68 : vector<16x10xi32> to vector<16x10xf32>
    %cst_24 = arith.constant dense<0.000000e+00> : vector<16x128xf32>
    %70 = tpu.matmul %69, %53, %cst_24 {dimension_numbers = #tpu.dot_dimension_numbers<[1], [0], [0], [1], [0, 0, 1, 1], [], []>} : vector<16x10xf32>, vector<10x128xf32>, vector<16x128xf32> -> vector<16x128xf32>
    %71 = arith.mulf %70, %55 : vector<16x128xf32>
    %72 = vector.shape_cast %71 : vector<16x128xf32> to vector<1x16x128xf32>
    %cst_25 = arith.constant dense<0.000000e+00> : vector<1xf32>
    %73 = vector.multi_reduction <add>, %72, %cst_25 [1, 2] : vector<1x16x128xf32> to vector<1xf32>
    %74 = vector.shape_cast %73 : vector<1xf32> to vector<1x1x1xf32>
    %75 = vector.extract %74[0, 0, 0] : f32 from vector<1x1x1xf32>
    %cst_26 = arith.constant 6.250000e-02 : f32
    %76 = arith.mulf %75, %cst_26 : f32
    %c0_27 = arith.constant 0 : index
    %c0_28 = arith.constant 0 : index
    %77 = vector.load %arg4[%c0_27, %c0_28] : memref<10x640xf32, #tpu.memory_space<vmem>>, vector<10x640xf32>
    %cst_29 = arith.constant dense<0.000000e+00> : vector<16x640xf32>
    %78 = tpu.matmul %69, %77, %cst_29 {dimension_numbers = #tpu.dot_dimension_numbers<[1], [0], [0], [1], [0, 0, 1, 1], [], []>} : vector<16x10xf32>, vector<10x640xf32>, vector<16x640xf32> -> vector<16x640xf32>
    %c0_30 = arith.constant 0 : index
    %c0_31 = arith.constant 0 : index
    %79 = vector.load %arg3[%c0_30, %c0_31] : memref<10x640xf32, #tpu.memory_space<vmem>>, vector<10x640xf32>
    %cst_32 = arith.constant dense<0.000000e+00> : vector<16x640xf32>
    %80 = tpu.matmul %33, %79, %cst_32 {dimension_numbers = #tpu.dot_dimension_numbers<[1], [0], [0], [1], [0, 0, 1, 1], [], []>} : vector<16x10xf32>, vector<10x640xf32>, vector<16x640xf32> -> vector<16x640xf32>
    %81 = vector.extract_strided_slice %78 {offsets = [0, 0], sizes = [16, 128], strides = [1, 1]} : vector<16x640xf32> to vector<16x128xf32>
    %82 = vector.extract_strided_slice %80 {offsets = [0, 0], sizes = [16, 128], strides = [1, 1]} : vector<16x640xf32> to vector<16x128xf32>
    %83 = vector.shape_cast %81 : vector<16x128xf32> to vector<16x1x128xf32>
    %c0_33 = arith.constant 0 : index
    %c0_34 = arith.constant 0 : index
    %c0_35 = arith.constant 0 : index
    %84 = vector.load %arg8[%c0_33, %c0_34, %c0_35] : memref<16x10x128xf32, #tpu.memory_space<vmem>>, vector<16x1x128xf32>
    tpu.vector_store %arg8[%c0_33, %c0_34, %c0_35], %83 {strides = array<i32>} : memref<16x10x128xf32, #tpu.memory_space<vmem>>, vector<16x1x128xf32>,
    %85 = vector.shape_cast %82 : vector<16x128xf32> to vector<16x1x128xf32>
    %c0_36 = arith.constant 0 : index
    %c5 = arith.constant 5 : index
    %c0_37 = arith.constant 0 : index
    %86 = vector.load %arg8[%c0_36, %c5, %c0_37] : memref<16x10x128xf32, #tpu.memory_space<vmem>>, vector<16x1x128xf32>
    tpu.vector_store %arg8[%c0_36, %c5, %c0_37], %85 {strides = array<i32>} : memref<16x10x128xf32, #tpu.memory_space<vmem>>, vector<16x1x128xf32>,
    %87 = vector.extract_strided_slice %78 {offsets = [0, 128], sizes = [16, 128], strides = [1, 1]} : vector<16x640xf32> to vector<16x128xf32>
    %88 = vector.extract_strided_slice %80 {offsets = [0, 128], sizes = [16, 128], strides = [1, 1]} : vector<16x640xf32> to vector<16x128xf32>
    %89 = vector.shape_cast %87 : vector<16x128xf32> to vector<16x1x128xf32>
    %c0_38 = arith.constant 0 : index
    %c1 = arith.constant 1 : index
    %c0_39 = arith.constant 0 : index
    %90 = vector.load %arg8[%c0_38, %c1, %c0_39] : memref<16x10x128xf32, #tpu.memory_space<vmem>>, vector<16x1x128xf32>
    tpu.vector_store %arg8[%c0_38, %c1, %c0_39], %89 {strides = array<i32>} : memref<16x10x128xf32, #tpu.memory_space<vmem>>, vector<16x1x128xf32>,
    %91 = vector.shape_cast %88 : vector<16x128xf32> to vector<16x1x128xf32>
    %c0_40 = arith.constant 0 : index
    %c6 = arith.constant 6 : index
    %c0_41 = arith.constant 0 : index
    %92 = vector.load %arg8[%c0_40, %c6, %c0_41] : memref<16x10x128xf32, #tpu.memory_space<vmem>>, vector<16x1x128xf32>
    tpu.vector_store %arg8[%c0_40, %c6, %c0_41], %91 {strides = array<i32>} : memref<16x10x128xf32, #tpu.memory_space<vmem>>, vector<16x1x128xf32>,
    %93 = vector.extract_strided_slice %78 {offsets = [0, 256], sizes = [16, 128], strides = [1, 1]} : vector<16x640xf32> to vector<16x128xf32>
    %94 = vector.extract_strided_slice %80 {offsets = [0, 256], sizes = [16, 128], strides = [1, 1]} : vector<16x640xf32> to vector<16x128xf32>
    %95 = vector.shape_cast %93 : vector<16x128xf32> to vector<16x1x128xf32>
    %c0_42 = arith.constant 0 : index
    %c2 = arith.constant 2 : index
    %c0_43 = arith.constant 0 : index
    %96 = vector.load %arg8[%c0_42, %c2, %c0_43] : memref<16x10x128xf32, #tpu.memory_space<vmem>>, vector<16x1x128xf32>
    tpu.vector_store %arg8[%c0_42, %c2, %c0_43], %95 {strides = array<i32>} : memref<16x10x128xf32, #tpu.memory_space<vmem>>, vector<16x1x128xf32>,
    %97 = vector.shape_cast %94 : vector<16x128xf32> to vector<16x1x128xf32>
    %c0_44 = arith.constant 0 : index
    %c7 = arith.constant 7 : index
    %c0_45 = arith.constant 0 : index
    %98 = vector.load %arg8[%c0_44, %c7, %c0_45] : memref<16x10x128xf32, #tpu.memory_space<vmem>>, vector<16x1x128xf32>
    tpu.vector_store %arg8[%c0_44, %c7, %c0_45], %97 {strides = array<i32>} : memref<16x10x128xf32, #tpu.memory_space<vmem>>, vector<16x1x128xf32>,
    %99 = vector.extract_strided_slice %78 {offsets = [0, 384], sizes = [16, 128], strides = [1, 1]} : vector<16x640xf32> to vector<16x128xf32>
    %100 = vector.extract_strided_slice %80 {offsets = [0, 384], sizes = [16, 128], strides = [1, 1]} : vector<16x640xf32> to vector<16x128xf32>
    %101 = vector.shape_cast %99 : vector<16x128xf32> to vector<16x1x128xf32>
    %c0_46 = arith.constant 0 : index
    %c3 = arith.constant 3 : index
    %c0_47 = arith.constant 0 : index
    %102 = vector.load %arg8[%c0_46, %c3, %c0_47] : memref<16x10x128xf32, #tpu.memory_space<vmem>>, vector<16x1x128xf32>
    tpu.vector_store %arg8[%c0_46, %c3, %c0_47], %101 {strides = array<i32>} : memref<16x10x128xf32, #tpu.memory_space<vmem>>, vector<16x1x128xf32>,
    %103 = vector.shape_cast %100 : vector<16x128xf32> to vector<16x1x128xf32>
    %c0_48 = arith.constant 0 : index
    %c8 = arith.constant 8 : index
    %c0_49 = arith.constant 0 : index
    %104 = vector.load %arg8[%c0_48, %c8, %c0_49] : memref<16x10x128xf32, #tpu.memory_space<vmem>>, vector<16x1x128xf32>
    tpu.vector_store %arg8[%c0_48, %c8, %c0_49], %103 {strides = array<i32>} : memref<16x10x128xf32, #tpu.memory_space<vmem>>, vector<16x1x128xf32>,
    %105 = vector.extract_strided_slice %78 {offsets = [0, 512], sizes = [16, 128], strides = [1, 1]} : vector<16x640xf32> to vector<16x128xf32>
    %106 = vector.extract_strided_slice %80 {offsets = [0, 512], sizes = [16, 128], strides = [1, 1]} : vector<16x640xf32> to vector<16x128xf32>
    %107 = vector.shape_cast %105 : vector<16x128xf32> to vector<16x1x128xf32>
    %c0_50 = arith.constant 0 : index
    %c4 = arith.constant 4 : index
    %c0_51 = arith.constant 0 : index
    %108 = vector.load %arg8[%c0_50, %c4, %c0_51] : memref<16x10x128xf32, #tpu.memory_space<vmem>>, vector<16x1x128xf32>
    tpu.vector_store %arg8[%c0_50, %c4, %c0_51], %107 {strides = array<i32>} : memref<16x10x128xf32, #tpu.memory_space<vmem>>, vector<16x1x128xf32>,
    %109 = vector.shape_cast %106 : vector<16x128xf32> to vector<16x1x128xf32>
    %c0_52 = arith.constant 0 : index
    %c9 = arith.constant 9 : index
    %c0_53 = arith.constant 0 : index
    %110 = vector.load %arg8[%c0_52, %c9, %c0_53] : memref<16x10x128xf32, #tpu.memory_space<vmem>>, vector<16x1x128xf32>
    tpu.vector_store %arg8[%c0_52, %c9, %c0_53], %109 {strides = array<i32>} : memref<16x10x128xf32, #tpu.memory_space<vmem>>, vector<16x1x128xf32>,
    %c0_i32 = arith.constant 0 : i32
    %c0_i32_54 = arith.constant 0 : i32
    %c0_i32_55 = arith.constant 0 : i32
    %111 = tpu.memref_slice %arg6[%c0_i32, %c0_i32_54, %c0_i32_55] : memref<16x42x128xf32, #tpu.memory_space<any>> -> memref<16x10x128xf32, #tpu.memory_space<any>>
    tpu.enqueue_dma source(%arg8 : memref<16x10x128xf32, #tpu.memory_space<vmem>>) target(%111 : memref<16x10x128xf32, #tpu.memory_space<any>>) target_semaphore(%arg9 : memref<!tpu.dma_semaphore, #tpu.memory_space<semaphore_mem>>)
    %112 = arith.addf %44, %76 : f32
    %c0_56 = arith.constant 0 : index
    %c0_57 = arith.constant 0 : index
    %113 = memref.load %arg7[%c0_56, %c0_57] : memref<1x1xf32, #tpu.memory_space<smem>>
    memref.store %112, %arg7[%c0_56, %c0_57] : memref<1x1xf32, #tpu.memory_space<smem>>
    %c0_i32_58 = arith.constant 0 : i32
    %c0_i32_59 = arith.constant 0 : i32
    %c0_i32_60 = arith.constant 0 : i32
    %114 = tpu.memref_slice %arg6[%c0_i32_58, %c0_i32_59, %c0_i32_60] : memref<16x42x128xf32, #tpu.memory_space<any>> -> memref<16x10x128xf32, #tpu.memory_space<any>>
    tpu.wait_dma2 semaphore(%arg9 : memref<!tpu.dma_semaphore, #tpu.memory_space<semaphore_mem>>) src(%arg8 : memref<16x10x128xf32, #tpu.memory_space<vmem>>) dst(%114 : memref<16x10x128xf32, #tpu.memory_space<any>>)
    return
  }
}

</mosaic_0001>

<llo_original>
// kernel: rq_prompt_forward.2
$region0: #{rq_prompt_forward.2}
  #allocation0 [shape = 'u32[]', space=smem, size = 0x4, offset = 0x4, fixed_abs, tag = 'smem constant byte address 0x4 - core index']
  #allocation1 [shape = 'u32[144,128]{1,0:T(1,128)}', space=vmem, size = 0x12000, scoped, tag = 'internal scratch']
  #allocation2 [shape = 's32[1]{0}', space=sflag, size = 0x4, scoped, tag = 'scratch operand']
  #allocation4 [shape = 's32[]', space=sflag, size = 0x4, offset = 0, fixed_abs, tag = 'sflag constant byte address 0x0 - dummy sync flag']
  %s0 = inlined_call_operand.vmem [shape: f32[16,32,128], index: 0, kind: input, shape index: {}]
  %s1 = inlined_call_operand.vmem [shape: f32[16,128], index: 1, kind: output, shape index: {0}]
  %s2 = inlined_call_operand.vmem [shape: f32[16,42,128], index: 2, kind: output, shape index: {1}]
  %3 = xla_tuple %s1, %s2
  %s4 = sld [smem:[#allocation0]]
  $region113: #{rq_prompt_forward.2} parent=0
    _
  %s6 = ssub.s32 1, %s4
  %s7 = scalar_select 0, %s6, %s4
  $region1: #{rq_prompt_forward.2} parent=0
    #allocation3 [shape = 'u8[65536]{0}', space=vmem, size = 0x10000, scoped, tag = 'input window, operand 0']
    loop: start=0, step=1, limit=10
    $region2: #{rq_prompt_forward.2} parent=1 // loop_pre_header
      _
    $region3: #{rq_prompt_forward.2} parent=1 // loop_header
      %s9 = sphi 0, %s13
      %p10 = scmp.ge.s32.totalorder %s9, 10
      %s16 = sphi 0, %s28
      %s17 = sphi 0, %s24
      %s18 = sphi 0, %s16
      %s19 = sphi 0, %s17
      %s20 = sphi 0, %s18
      %s21 = sphi 0, %s19
      %s33 = sphi 0, %s35
      %s36 = sphi 0, %s33
      %s37 = sphi 0, %s36
      %s53 = sphi 0, %s37
      %s59 = sphi 0, %s61
      %s62 = sphi 0, %s59
      %s63 = sphi 0, %s62
      %s79 = sphi 0, %s63
    $region4: #{rq_prompt_forward.2} parent=1 // loop_header_branch
      %12 = sbr.rel (%p10) target = $region8
    $region5: #{rq_prompt_forward.2} parent=1 // loop_body
      %s14 = ssub.s32 %s9, 1
      %s15 = ssub.s32 %s9, 2
      %s22 = sadd.s32 1, %s17
      %p23 = scmp.ge.s32.totalorder %s22, 4
      %s24 = scalar_select %p23, 0, %s22
      %s25 = sadd.s32 1, %s16
      %s26 = scalar_select %p23, %s25, %s16
      %p27 = scmp.ge.s32.totalorder %s26, 2
      %s28 = scalar_select %p27, 0, %s26
      %s29 = ssub.s32 %s16, %s28
      %s30 = ssub.s32 %s17, %s24
      %s31 = sor.u32 %s29, %s30
      %p32 = scmp.eq.s32.totalorder %s31, 0
      %s34 = sadd.s32 %s33, 1
      %s35 = scalar_select %p32, %s33, %s34
      %p38 = pneg %p32
      %p39 = scmp.eq.s32.totalorder %s9, 7
      %p40 = por %p38, %p39
      %p41 = scmp.ne.s32.totalorder %s33, %s36
      %p42 = scmp.eq.s32.totalorder %s9, 0
      %p43 = por %p41, %p42
      %p44 = scmp.ne.s32.totalorder %s33, %s36
      %p45 = scmp.eq.s32.totalorder %s14, 7
      %p46 = por %p44, %p45
      %p47 = scmp.ne.s32.totalorder %s36, %s37
      %p48 = scmp.eq.s32.totalorder %s14, 0
      %p49 = por %p47, %p48
      %p50 = scmp.ne.s32.totalorder %s36, %s37
      %p51 = scmp.eq.s32.totalorder %s15, 7
      %p52 = por %p50, %p51
      %p54 = scmp.ne.s32.totalorder %s37, %s53
      %p55 = scmp.eq.s32.totalorder %s15, 0
      %p56 = por %p54, %p55
      %s57 = ssub.s32 %s16, %s28
      %p58 = scmp.eq.s32.totalorder %s57, 0
      %s60 = sadd.s32 %s59, 1
      %s61 = scalar_select %p58, %s59, %s60
      %p64 = pneg %p58
      %p65 = scmp.eq.s32.totalorder %s9, 7
      %p66 = por %p64, %p65
      %p67 = scmp.ne.s32.totalorder %s59, %s62
      %p68 = scmp.eq.s32.totalorder %s9, 0
      %p69 = por %p67, %p68
      %p70 = scmp.ne.s32.totalorder %s59, %s62
      %p71 = scmp.eq.s32.totalorder %s14, 7
      %p72 = por %p70, %p71
      %p73 = scmp.ne.s32.totalorder %s62, %s63
      %p74 = scmp.eq.s32.totalorder %s14, 0
      %p75 = por %p73, %p74
      %p76 = scmp.ne.s32.totalorder %s62, %s63
      %p77 = scmp.eq.s32.totalorder %s15, 7
      %p78 = por %p76, %p77
      %p80 = scmp.ne.s32.totalorder %s63, %s79
      %p81 = scmp.eq.s32.totalorder %s15, 0
      %p82 = por %p80, %p81
      %p83 = scmp.le.s32.totalorder 1, %s9
      %p84 = scmp.lt.s32.totalorder %s9, 9
      %p85 = pnand %p83, %p84
      %p86 = pneg %p85
      // Predicated region
      $region9: #{rq_prompt_forward.2} parent=5 // pred_check
        _
      $region10: #{rq_prompt_forward.2} parent=5 // pred_check_branch
        %88 = sbr.rel (%p85) target = $region12
      $region11: #{rq_prompt_forward.2} parent=5 // pred_region
        %s89 = ssub.s32 %s9, 1
      $region12: #{rq_prompt_forward.2} parent=5 // pred_fallthru
        _
      %p90 = scmp.lt.s32.totalorder %s9, 8
      // Predicated region
      $region13: #{rq_prompt_forward.2} parent=5 // pred_check
        %p91 = pneg %p90
      $region14: #{rq_prompt_forward.2} parent=5 // pred_check_branch
        %93 = sbr.rel (%p91) target = $region16
      $region15: #{rq_prompt_forward.2} parent=5 // pred_region
        // Predicated region
        $region17: #{rq_prompt_forward.2} parent=15 // pred_check
          %p94 = pneg %p43
        $region18: #{rq_prompt_forward.2} parent=15 // pred_check_branch
          %96 = sbr.rel (%p94) target = $region20
        $region19: #{rq_prompt_forward.2} parent=15 // pred_region
          %s97 = sand.u32 %s33, 1
          %s98 = sand.u32 %s33, 1
          %s99 = smul.addr %s98, 64
          %s100 = scalar_lea.vmem [#allocation3], %s99
          %s101 = smul.u32 8, %s16
          %s102 = smul.addr %s101, 4
          %s103 = sadd.s32 %s17, %s102
          %s104 = smul.addr %s103, 8
          %s105 = scalar_lea.vmem %s0, %s104
          // Predicated region
          $region21: #{rq_prompt_forward.2} parent=19 // pred_check
            _
          $region22: #{rq_prompt_forward.2} parent=19 // pred_check_branch
            %107 = sbr.rel (0) target = $region24
          $region23: #{rq_prompt_forward.2} parent=19 // pred_region
            // Predicated region
            $region25: #{rq_prompt_forward.2} parent=23 // pred_check
              _
            $region26: #{rq_prompt_forward.2} parent=23 // pred_check_branch
              %109 = sbr.rel (0) target = $region28
            $region27: #{rq_prompt_forward.2} parent=23 // pred_region
              // Predicated region
              $region40: #{rq_prompt_forward.2} parent=27 // pred_check
                _
              $region41: #{rq_prompt_forward.2} parent=27 // pred_check_branch
                %139 = sbr.rel (0) target = $region43
              $region42: #{rq_prompt_forward.2} parent=27 // pred_region
                loop: start=0, step=1, limit=1
                $region44: #{rq_prompt_forward.2} parent=42 // loop_pre_header
                  _
                $region45: #{rq_prompt_forward.2} parent=42 // loop_header
                  %s141 = sphi 0, %s145
                  %p142 = scmp.ge.s32.totalorder %s141, 1
                  %s146 = sphi %s105, %s105
                  %s147 = sphi %s100, %s100
                $region46: #{rq_prompt_forward.2} parent=42 // loop_header_branch
                  %144 = sbr.rel (%p142) target = $region50
                $region47: #{rq_prompt_forward.2} parent=42 // loop_body
                  %v148 = vld [vmem:[%s146] sm:$0xff]
                  %149 = vst [vmem:[%s147] sm:$0xff] %v148
                  %v150 = vld [vmem:[%s146 + $0x20] sm:$0xff]
                  %151 = vst [vmem:[%s147 + $0x8] sm:$0xff] %v150
                  %v152 = vld [vmem:[%s146 + $0x40] sm:$0xff]
                  %153 = vst [vmem:[%s147 + $0x10] sm:$0xff] %v152
                  %v154 = vld [vmem:[%s146 + $0x60] sm:$0xff]
                  %155 = vst [vmem:[%s147 + $0x18] sm:$0xff] %v154
                  %v156 = vld [vmem:[%s146 + $0x80] sm:$0xff]
                  %157 = vst [vmem:[%s147 + $0x20] sm:$0xff] %v156
                  %v158 = vld [vmem:[%s146 + $0xa0] sm:$0xff]
                  %159 = vst [vmem:[%s147 + $0x28] sm:$0xff] %v158
                  %v160 = vld [vmem:[%s146 + $0xc0] sm:$0xff]
                  %161 = vst [vmem:[%s147 + $0x30] sm:$0xff] %v160
                  %v162 = vld [vmem:[%s146 + $0xe0] sm:$0xff]
                  %163 = vst [vmem:[%s147 + $0x38] sm:$0xff] %v162
                $region48: #{rq_prompt_forward.2} parent=42 // loop_footer
                  %s145 = sadd.s32 1, %s141
                $region49: #{rq_prompt_forward.2} parent=42 // loop_footer_branch
                  %140 = sbr.rel target = $region45
                $region50: #{rq_prompt_forward.2} parent=42 // loop_exit
                  _
              $region43: #{rq_prompt_forward.2} parent=27 // pred_fallthru
                _
              // Predicated region
              $region51: #{rq_prompt_forward.2} parent=27 // pred_check
                _
              $region52: #{rq_prompt_forward.2} parent=27 // pred_check_branch
                %165 = sbr.rel target = $region54
              $region53: #{rq_prompt_forward.2} parent=27 // pred_region
                _
              $region54: #{rq_prompt_forward.2} parent=27 // pred_fallthru
                _
            $region28: #{rq_prompt_forward.2} parent=23 // pred_fallthru
              _
            // Predicated region
            $region29: #{rq_prompt_forward.2} parent=23 // pred_check
              _
            $region30: #{rq_prompt_forward.2} parent=23 // pred_check_branch
              %111 = sbr.rel target = $region32
            $region31: #{rq_prompt_forward.2} parent=23 // pred_region
              %s113 = ssub.s32 256, 1
              loop: start=0, step=1, limit=1
              $region33: #{rq_prompt_forward.2} parent=31 // loop_pre_header
                _
              $region34: #{rq_prompt_forward.2} parent=31 // loop_header
                %s115 = sphi 0, %s119
                %p116 = scmp.ge.s32.totalorder %s115, 1
                %s120 = sphi %s105, %s105
                %s121 = sphi %s100, %s100
              $region35: #{rq_prompt_forward.2} parent=31 // loop_header_branch
                %118 = sbr.rel (%p116) target = $region39
              $region36: #{rq_prompt_forward.2} parent=31 // loop_body
                %v122 = vld [vmem:[%s120] sm:%s113]
                %123 = vst [vmem:[%s121] sm:%s113] %v122
                %v124 = vld [vmem:[%s120 + $0x20] sm:%s113]
                %125 = vst [vmem:[%s121 + $0x8] sm:%s113] %v124
                %v126 = vld [vmem:[%s120 + $0x40] sm:%s113]
                %127 = vst [vmem:[%s121 + $0x10] sm:%s113] %v126
                %v128 = vld [vmem:[%s120 + $0x60] sm:%s113]
                %129 = vst [vmem:[%s121 + $0x18] sm:%s113] %v128
                %v130 = vld [vmem:[%s120 + $0x80] sm:%s113]
                %131 = vst [vmem:[%s121 + $0x20] sm:%s113] %v130
                %v132 = vld [vmem:[%s120 + $0xa0] sm:%s113]
                %133 = vst [vmem:[%s121 + $0x28] sm:%s113] %v132
                %v134 = vld [vmem:[%s120 + $0xc0] sm:%s113]
                %135 = vst [vmem:[%s121 + $0x30] sm:%s113] %v134
                %v136 = vld [vmem:[%s120 + $0xe0] sm:%s113]
                %137 = vst [vmem:[%s121 + $0x38] sm:%s113] %v136
              $region37: #{rq_prompt_forward.2} parent=31 // loop_footer
                %s119 = sadd.s32 1, %s115
              $region38: #{rq_prompt_forward.2} parent=31 // loop_footer_branch
                %114 = sbr.rel target = $region34
              $region39: #{rq_prompt_forward.2} parent=31 // loop_exit
                _
            $region32: #{rq_prompt_forward.2} parent=23 // pred_fallthru
              _
          $region24: #{rq_prompt_forward.2} parent=19 // pred_fallthru
            _
          %166 = vnop
        $region20: #{rq_prompt_forward.2} parent=15 // pred_fallthru
          _
      $region16: #{rq_prompt_forward.2} parent=5 // pred_fallthru
        _
      %p167 = scmp.le.s32.totalorder 1, %s9
      %p168 = scmp.lt.s32.totalorder %s9, 9
      %p169 = pnand %p167, %p168
      %p170 = pneg %p169
      // Predicated region
      $region55: #{rq_prompt_forward.2} parent=5 // pred_check
        _
      $region56: #{rq_prompt_forward.2} parent=5 // pred_check_branch
        %172 = sbr.rel (%p169) target = $region58
      $region57: #{rq_prompt_forward.2} parent=5 // pred_region
        %s173 = ssub.s32 %s9, 1
        %s174 = sand.u32 %s36, 1
        %s175 = sand.u32 %s36, 1
        %s176 = smul.addr %s175, 64
        %s177 = scalar_lea.vmem [#allocation3], %s176
        // Predicated region
        $region59: #{rq_prompt_forward.2} parent=57 // pred_check
          %p178 = pneg %p49
        $region60: #{rq_prompt_forward.2} parent=57 // pred_check_branch
          %180 = sbr.rel (%p178) target = $region62
        $region61: #{rq_prompt_forward.2} parent=57 // pred_region
          _
        $region62: #{rq_prompt_forward.2} parent=57 // pred_fallthru
          _
        %s181 = sand.u32 %s36, 1
        %s182 = sand.u32 %s36, 1
        %s183 = smul.addr %s182, 64
        %s184 = scalar_lea.vmem [#allocation3], %s183
        %p185 = pneg %p49
        %p186 = pneg %p46
        %p187 = pneg %p75
        %p188 = pneg %p72
        %p189 = scmp.lt.s32.totalorder %s18, 1
        %s190 = scalar_select %p189, %s18, 1
        %s191 = smul.addr %s190, 8
        %s192 = scalar_lea.vmem %s1, %s191
        %s193 = smul.u32 8, %s18
        %p194 = scmp.lt.s32.totalorder %s18, 1
        %s195 = scalar_select %p194, %s18, 1
        %s196 = smul.addr %s195, 8
        %s197 = scalar_lea.vmem %s1, %s196
        %s198 = smul.u32 %s18, 8
        %s199 = smul.u32 %s19, 8
        %s200 = sadd.s32 %s199, 10
        %s201 = smul.u32 %s198, 48
        %s202 = sadd.s32 %s200, %s201
        %s203 = scalar_lea.vmem %s2, %s202
        %p205 = scmp.lt.u32.totalorder 8, 8
        %p206 = pneg %p205
        // Predicated region
        $region63: #{rq_prompt_forward.2} parent=57 // pred_check
          _
        $region64: #{rq_prompt_forward.2} parent=57 // pred_check_branch
          %208 = sbr.rel (%p205) target = $region66
        $region65: #{rq_prompt_forward.2} parent=57 // pred_region
          %s238 = sand.u32 8, 7
          %p239 = scmp.eq.s32.totalorder %s238, 0
          // Predicated region
          $region78: #{rq_prompt_forward.2} parent=65 // pred_check
            %p240 = pneg %p239
          $region79: #{rq_prompt_forward.2} parent=65 // pred_check_branch
            %242 = sbr.rel (%p240) target = $region81
          $region80: #{rq_prompt_forward.2} parent=65 // pred_region
            loop: start=0, step=1, limit=1
            $region82: #{rq_prompt_forward.2} parent=80 // loop_pre_header
              _
            $region83: #{rq_prompt_forward.2} parent=80 // loop_header
              %s244 = sphi 0, %s248
              %p245 = scmp.ge.s32.totalorder %s244, 1
              %s249 = sphi %s177, %s177
              %s250 = sphi %s203, %s203
            $region84: #{rq_prompt_forward.2} parent=80 // loop_header_branch
              %247 = sbr.rel (%p245) target = $region88
            $region85: #{rq_prompt_forward.2} parent=80 // loop_body
              %v251 = vld [vmem:[%s249] sm:$0xff]
              %252 = vst [vmem:[%s250] sm:$0xff] %v251
              %v253 = vld [vmem:[%s249 + $0x8] sm:$0xff]
              %254 = vst [vmem:[%s250 + $0x30] sm:$0xff] %v253
              %v255 = vld [vmem:[%s249 + $0x10] sm:$0xff]
              %256 = vst [vmem:[%s250 + $0x60] sm:$0xff] %v255
              %v257 = vld [vmem:[%s249 + $0x18] sm:$0xff]
              %258 = vst [vmem:[%s250 + $0x90] sm:$0xff] %v257
              %v259 = vld [vmem:[%s249 + $0x20] sm:$0xff]
              %260 = vst [vmem:[%s250 + $0xc0] sm:$0xff] %v259
              %v261 = vld [vmem:[%s249 + $0x28] sm:$0xff]
              %262 = vst [vmem:[%s250 + $0xf0] sm:$0xff] %v261
              %v263 = vld [vmem:[%s249 + $0x30] sm:$0xff]
              %264 = vst [vmem:[%s250 + $0x120] sm:$0xff] %v263
              %v265 = vld [vmem:[%s249 + $0x38] sm:$0xff]
              %266 = vst [vmem:[%s250 + $0x150] sm:$0xff] %v265
            $region86: #{rq_prompt_forward.2} parent=80 // loop_footer
              %s248 = sadd.s32 1, %s244
            $region87: #{rq_prompt_forward.2} parent=80 // loop_footer_branch
              %243 = sbr.rel target = $region83
            $region88: #{rq_prompt_forward.2} parent=80 // loop_exit
              _
          $region81: #{rq_prompt_forward.2} parent=65 // pred_fallthru
            _
          %p267 = pneg %p239
          // Predicated region
          $region89: #{rq_prompt_forward.2} parent=65 // pred_check
            _
          $region90: #{rq_prompt_forward.2} parent=65 // pred_check_branch
            %269 = sbr.rel (%p239) target = $region92
          $region91: #{rq_prompt_forward.2} parent=65 // pred_region
            %s270 = sand.u32 8, 7
          $region92: #{rq_prompt_forward.2} parent=65 // pred_fallthru
            _
        $region66: #{rq_prompt_forward.2} parent=57 // pred_fallthru
          _
        // Predicated region
        $region67: #{rq_prompt_forward.2} parent=57 // pred_check
          %p209 = pneg %p205
        $region68: #{rq_prompt_forward.2} parent=57 // pred_check_branch
          %211 = sbr.rel (%p209) target = $region70
        $region69: #{rq_prompt_forward.2} parent=57 // pred_region
          %s212 = sshll.u32 1, 8
          %s213 = ssub.s32 %s212, 1
          loop: start=0, step=1, limit=1
          $region71: #{rq_prompt_forward.2} parent=69 // loop_pre_header
            _
          $region72: #{rq_prompt_forward.2} parent=69 // loop_header
            %s215 = sphi 0, %s219
            %p216 = scmp.ge.s32.totalorder %s215, 1
            %s220 = sphi %s177, %s177
            %s221 = sphi %s203, %s203
          $region73: #{rq_prompt_forward.2} parent=69 // loop_header_branch
            %218 = sbr.rel (%p216) target = $region77
          $region74: #{rq_prompt_forward.2} parent=69 // loop_body
            %v222 = vld [vmem:[%s220] sm:%s213]
            %223 = vst [vmem:[%s221] sm:%s213] %v222
            %v224 = vld [vmem:[%s220 + $0x8] sm:%s213]
            %225 = vst [vmem:[%s221 + $0x30] sm:%s213] %v224
            %v226 = vld [vmem:[%s220 + $0x10] sm:%s213]
            %227 = vst [vmem:[%s221 + $0x60] sm:%s213] %v226
            %v228 = vld [vmem:[%s220 + $0x18] sm:%s213]
            %229 = vst [vmem:[%s221 + $0x90] sm:%s213] %v228
            %v230 = vld [vmem:[%s220 + $0x20] sm:%s213]
            %231 = vst [vmem:[%s221 + $0xc0] sm:%s213] %v230
            %v232 = vld [vmem:[%s220 + $0x28] sm:%s213]
            %233 = vst [vmem:[%s221 + $0xf0] sm:%s213] %v232
            %v234 = vld [vmem:[%s220 + $0x30] sm:%s213]
            %235 = vst [vmem:[%s221 + $0x120] sm:%s213] %v234
            %v236 = vld [vmem:[%s220 + $0x38] sm:%s213]
            %237 = vst [vmem:[%s221 + $0x150] sm:%s213] %v236
          $region75: #{rq_prompt_forward.2} parent=69 // loop_footer
            %s219 = sadd.s32 1, %s215
          $region76: #{rq_prompt_forward.2} parent=69 // loop_footer_branch
            %214 = sbr.rel target = $region72
          $region77: #{rq_prompt_forward.2} parent=69 // loop_exit
            _
        $region70: #{rq_prompt_forward.2} parent=57 // pred_fallthru
          _
        // Predicated region
        $region93: #{rq_prompt_forward.2} parent=57 // pred_check
          _
        $region94: #{rq_prompt_forward.2} parent=57 // pred_check_branch
          %273 = sbr.rel (0) target = $region96
        $region95: #{rq_prompt_forward.2} parent=57 // pred_region
          %274 = vsyncadd [#allocation2], 1024
        $region96: #{rq_prompt_forward.2} parent=57 // pred_fallthru
          _
        %p275 = scmp.eq.s32.totalorder %s19, 0
        // Predicated region
        $region97: #{rq_prompt_forward.2} parent=57 // pred_check
          %p276 = pneg %p275
        $region98: #{rq_prompt_forward.2} parent=57 // pred_check_branch
          %278 = sbr.rel (%p276) target = $region100
        $region99: #{rq_prompt_forward.2} parent=57 // pred_region
          %279 = vst [vmem:[%s197] sm:$0xff] 0.0
        $region100: #{rq_prompt_forward.2} parent=57 // pred_fallthru
          _
        %v280 = vld [vmem:[%s197] sm:$0xff]
        %v281 = vld [vmem:[%s177] sm:$0xff]
        %v282 = vld [vmem:[%s177 + $0x8] sm:$0xff]
        %v283 = vld [vmem:[%s177 + $0x10] sm:$0xff]
        %v284 = vld [vmem:[%s177 + $0x18] sm:$0xff]
        %v285 = vld [vmem:[%s177 + $0x20] sm:$0xff]
        %v286 = vld [vmem:[%s177 + $0x28] sm:$0xff]
        %v287 = vld [vmem:[%s177 + $0x30] sm:$0xff]
        %v288 = vld [vmem:[%s177 + $0x38] sm:$0xff]
        %v289 = vrot.slane %v281, 4
        %v290 = vadd.f32 %v281, %v289
        %v291 = vrot.slane %v290, 2
        %v292 = vadd.f32 %v290, %v291
        %v293 = vrot.slane %v292, 1
        %v294 = vadd.f32 %v292, %v293
        %v295 = vrot.slane %v282, 4
        %v296 = vadd.f32 %v282, %v295
        %v297 = vrot.slane %v296, 2
        %v298 = vadd.f32 %v296, %v297
        %v299 = vrot.slane %v298, 1
        %v300 = vadd.f32 %v298, %v299
        %v301 = vrot.slane %v283, 4
        %v302 = vadd.f32 %v283, %v301
        %v303 = vrot.slane %v302, 2
        %v304 = vadd.f32 %v302, %v303
        %v305 = vrot.slane %v304, 1
        %v306 = vadd.f32 %v304, %v305
        %v307 = vrot.slane %v284, 4
        %v308 = vadd.f32 %v284, %v307
        %v309 = vrot.slane %v308, 2
        %v310 = vadd.f32 %v308, %v309
        %v311 = vrot.slane %v310, 1
        %v312 = vadd.f32 %v310, %v311
        %v313 = vrot.slane %v285, 4
        %v314 = vadd.f32 %v285, %v313
        %v315 = vrot.slane %v314, 2
        %v316 = vadd.f32 %v314, %v315
        %v317 = vrot.slane %v316, 1
        %v318 = vadd.f32 %v316, %v317
        %v319 = vrot.slane %v286, 4
        %v320 = vadd.f32 %v286, %v319
        %v321 = vrot.slane %v320, 2
        %v322 = vadd.f32 %v320, %v321
        %v323 = vrot.slane %v322, 1
        %v324 = vadd.f32 %v322, %v323
        %v325 = vrot.slane %v287, 4
        %v326 = vadd.f32 %v287, %v325
        %v327 = vrot.slane %v326, 2
        %v328 = vadd.f32 %v326, %v327
        %v329 = vrot.slane %v328, 1
        %v330 = vadd.f32 %v328, %v329
        %v331 = vrot.slane %v288, 4
        %v332 = vadd.f32 %v288, %v331
        %v333 = vrot.slane %v332, 2
        %v334 = vadd.f32 %v332, %v333
        %v335 = vrot.slane %v334, 1
        %v336 = vadd.f32 %v334, %v335
        %vm345 = vcmask 1041409
        %v346 = vsel %vm345, %v300, %v294
        %vm347 = vcmask 1042434
        %v348 = vsel %vm347, %v306, %v346
        %vm349 = vcmask 1043459
        %v350 = vsel %vm349, %v312, %v348
        %vm351 = vcmask 1044484
        %v352 = vsel %vm351, %v318, %v350
        %vm353 = vcmask 1045509
        %v354 = vsel %vm353, %v324, %v352
        %vm355 = vcmask 1046534
        %v356 = vsel %vm355, %v330, %v354
        %vm357 = vcmask 1047559
        %v358 = vsel %vm357, %v336, %v356
        %v360 = vadd.f32 %v280, %v358
        %361 = vst [vmem:[%s197] sm:$0xff] %v360
        %s362 = smul.u32 8, 8
        %s363 = smul.u32 %s362, 1
        %s364 = sshll.u32 %s363, 4
        %365 = dma.done [#allocation2], %s364
        %p366 = scmp.lt.s32.totalorder %s18, 1
        %s367 = scalar_select %p366, %s18, 1
        %s368 = smul.addr %s367, 8
        %s369 = scalar_lea.vmem %s1, %s368
        // Predicated region
        $region101: #{rq_prompt_forward.2} parent=57 // pred_check
          %p370 = pneg %p72
        $region102: #{rq_prompt_forward.2} parent=57 // pred_check_branch
          %372 = sbr.rel (%p370) target = $region104
        $region103: #{rq_prompt_forward.2} parent=57 // pred_region
          _
        $region104: #{rq_prompt_forward.2} parent=57 // pred_fallthru
          _
      $region58: #{rq_prompt_forward.2} parent=5 // pred_fallthru
        _
      %p373 = scmp.le.s32.totalorder 2, %s9
      // Predicated region
      $region105: #{rq_prompt_forward.2} parent=5 // pred_check
        %p374 = pneg %p373
      $region106: #{rq_prompt_forward.2} parent=5 // pred_check_branch
        %376 = sbr.rel (%p374) target = $region108
      $region107: #{rq_prompt_forward.2} parent=5 // pred_region
        %s377 = ssub.s32 %s9, 2
        // Predicated region
        $region109: #{rq_prompt_forward.2} parent=107 // pred_check
          %p378 = pneg %p78
        $region110: #{rq_prompt_forward.2} parent=107 // pred_check_branch
          %380 = sbr.rel (%p378) target = $region112
        $region111: #{rq_prompt_forward.2} parent=107 // pred_region
          %p381 = scmp.lt.s32.totalorder %s20, 1
          %s382 = scalar_select %p381, %s20, 1
          %s383 = smul.addr %s382, 8
          %s384 = scalar_lea.vmem %s1, %s383
        $region112: #{rq_prompt_forward.2} parent=107 // pred_fallthru
          _
      $region108: #{rq_prompt_forward.2} parent=5 // pred_fallthru
        _
    $region6: #{rq_prompt_forward.2} parent=1 // loop_footer
      %s13 = sadd.s32 1, %s9
    $region7: #{rq_prompt_forward.2} parent=1 // loop_footer_branch
      %8 = sbr.rel target = $region3
    $region8: #{rq_prompt_forward.2} parent=1 // loop_exit
      _
  %385 = vsyncmov [#allocation2]
  %s386 = vpop.sfrf %385
  %p387 = scmp.eq.s32.totalorder %s386, 0
  %p388 = pneg %p387
  %390 = shalt.err (%p388)

// kernel: rq_prompt_forward.3
$region0: #{rq_prompt_forward.3}
  #allocation0 [shape = 'u32[]', space=smem, size = 0x4, offset = 0x4, fixed_abs, tag = 'smem constant byte address 0x4 - core index']
  #allocation1 [shape = 'u32[144,128]{1,0:T(1,128)}', space=vmem, size = 0x12000, scoped, tag = 'internal scratch']
  #allocation2 [shape = 'f32[16,10,128]{2,1,0:T(8,128)}', space=vmem, size = 0x20000, scoped, tag = 'scratch operand']
  #allocation3 [shape = 's32[1]{0}', space=sflag, size = 0x4, scoped, tag = 'scratch operand']
  #allocation6 [shape = 's32[]', space=sflag, size = 0x4, offset = 0, fixed_abs, tag = 'sflag constant byte address 0x0 - dummy sync flag']
  %s0 = inlined_call_operand.vmem [shape: f32[16,128], index: 0, kind: input, shape index: {}]
  %s1 = inlined_call_operand.vmem [shape: f32[10,128], index: 1, kind: input, shape index: {}]
  %s2 = inlined_call_operand.vmem [shape: f32[10,128], index: 2, kind: input, shape index: {}]
  %s3 = inlined_call_operand.vmem [shape: f32[10,640], index: 3, kind: input, shape index: {}]
  %s4 = inlined_call_operand.vmem [shape: f32[10,640], index: 4, kind: input, shape index: {}]
  %s5 = inlined_call_operand.vmem [shape: f32[16,42,128], index: 5, kind: input, shape index: {}, may-alias: {5,6}]
  %s6 = inlined_call_operand.vmem [shape: f32[16,42,128], index: 6, kind: output, shape index: {0}, may-alias: {5,6}]
  %s7 = inlined_call_operand.hbm [shape: f32[1,1], index: 7, kind: output, shape index: {1}]
  %8 = xla_tuple %s6, %s7
  %s9 = sld [smem:[#allocation0]]
  $region67: #{rq_prompt_forward.3} parent=0
    _
  %s11 = ssub.s32 1, %s9
  %s12 = scalar_select 0, %s11, %s9
  $region1: #{rq_prompt_forward.3} parent=0
    #allocation4 [shape = 'u8[512]{0}', space=smem, size = 0x200, scoped, tag = 'output window, operand 1, single buffered']
    #allocation5 [shape = 's32[1]{0}', space=sflag, size = 0x4, scoped, tag = 'scoped memory for rq_prompt_forward.3']
    %13 = vsyncpa [#allocation5], 0
    // Predicated region
    $region2: #{rq_prompt_forward.3} parent=1 // pred_check
      _
    $region3: #{rq_prompt_forward.3} parent=1 // pred_check_branch
      %15 = sbr.rel (0) target = $region5
    $region4: #{rq_prompt_forward.3} parent=1 // pred_region
      _
    $region5: #{rq_prompt_forward.3} parent=1 // pred_fallthru
      _
    // Predicated region
    $region6: #{rq_prompt_forward.3} parent=1 // pred_check
      _
    $region7: #{rq_prompt_forward.3} parent=1 // pred_check_branch
      %17 = sbr.rel (0) target = $region9
    $region8: #{rq_prompt_forward.3} parent=1 // pred_region
      _
    $region9: #{rq_prompt_forward.3} parent=1 // pred_fallthru
      _
    // Predicated region
    $region10: #{rq_prompt_forward.3} parent=1 // pred_check
      _
    $region11: #{rq_prompt_forward.3} parent=1 // pred_check_branch
      %19 = sbr.rel (0) target = $region13
    $region12: #{rq_prompt_forward.3} parent=1 // pred_region
      _
    $region13: #{rq_prompt_forward.3} parent=1 // pred_fallthru
      _
    // Predicated region
    $region14: #{rq_prompt_forward.3} parent=1 // pred_check
      _
    $region15: #{rq_prompt_forward.3} parent=1 // pred_check_branch
      %21 = sbr.rel (0) target = $region17
    $region16: #{rq_prompt_forward.3} parent=1 // pred_region
      _
    $region17: #{rq_prompt_forward.3} parent=1 // pred_fallthru
      _
    // Predicated region
    $region18: #{rq_prompt_forward.3} parent=1 // pred_check
      _
    $region19: #{rq_prompt_forward.3} parent=1 // pred_check_branch
      %23 = sbr.rel (0) target = $region21
    $region20: #{rq_prompt_forward.3} parent=1 // pred_region
      _
    $region21: #{rq_prompt_forward.3} parent=1 // pred_fallthru
      _
    %v24 = vld [vmem:[%s0] sm:$0xff]
    %v25 = vld [vmem:[%s0 + $0x8] sm:$0xff]
    %v26 = vmul.f32 %v24, 0.03125
    %v27 = vmul.f32 %v25, 0.03125
    %v28 = vld [vmem:[%s1] sm:$0xff]
    %v29 = vld [vmem:[%s1 + $0x8] sm:$0x3]
    %v30 = vmul.f32 %v28, %v28
    %v31 = vmul.f32 %v29, %v29
    %32 = vadd.xlane.f32.xlu0 %v30
    %v33 = vpop.xlane.xlu0 %32
    %vm34 = vcmask 1041408
    %v35 = vsel %vm34, %v31, 0.0
    %36 = vadd.xlane.f32.xlu0 %v35
    %v37 = vpop.xlane.xlu0 %36
    %v38 = vmax.f32 %v33, 1e-12
    %v39 = vmax.f32 %v37, 1e-12
    %v40 = vrsqrt.pop %v38
    %v41 = vrsqrt.pop %v39
    %v42 = vmul.f32 %v28, %v40
    %v43 = vmul.f32 %v29, %v41
    %v44 = vmul.f32 %v26, %v26
    %v45 = vmul.f32 %v27, %v27
    %46 = vadd.xlane.f32.xlu0 %v44
    %v47 = vpop.xlane.xlu0 %46
    %48 = vadd.xlane.f32.xlu0 %v45
    %v49 = vpop.xlane.xlu0 %48
    %v50 = vmax.f32 %v47, 1e-12
    %v51 = vmax.f32 %v49, 1e-12
    %v52 = vrsqrt.pop %v50
    %v53 = vrsqrt.pop %v51
    %v54 = vmul.f32 %v26, %v52
    %v55 = vmul.f32 %v27, %v53
    %56 = vmatprep.subr.mxu0 0.0
    %57 = vmatpush1.xpose.msra.mxu0 0.0
    %58 = vmatprep.subr.mxu0 0.0
    %59 = vmatpush1.xpose.msra.mxu0 0.0
    %60 = vmatprep.subr.mxu0 0.0
    %61 = vmatpush1.xpose.msra.mxu0 0.0
    %62 = vmatprep.subr.mxu0 0.0
    %63 = vmatpush1.xpose.msra.mxu0 0.0
    %64 = vmatprep.subr.mxu0 0.0
    %65 = vmatpush1.xpose.msra.mxu0 0.0
    %66 = vmatprep.subr.mxu0 0.0
    %67 = vmatpush1.xpose.msra.mxu0 0.0
    %68 = vmatprep.subr.mxu0 0.0
    %69 = vmatpush1.xpose.msra.mxu0 0.0
    %70 = vmatprep.subr.mxu0 0.0
    %71 = vmatpush1.xpose.msra.mxu0 0.0
    %72 = vmatprep.subr.mxu0 0.0
    %73 = vmatpush1.xpose.msra.mxu0 0.0
    %74 = vmatprep.subr.mxu0 0.0
    %75 = vmatpush1.xpose.msra.mxu0 0.0
    %76 = vmatprep.subr.mxu0 0.0
    %77 = vmatpush1.xpose.msra.mxu0 0.0
    %78 = vmatprep.subr.mxu0 0.0
    %79 = vmatpush1.xpose.msra.mxu0 0.0
    %80 = vmatprep.subr.mxu0 0.0
    %81 = vmatpush1.xpose.msra.mxu0 0.0
    %82 = vmatprep.subr.mxu0 0.0
    %83 = vmatpush1.xpose.msra.mxu0 0.0
    %84 = vmatprep.subr.mxu0 0.0
    %85 = vmatpush1.xpose.msra.mxu0 %v43
    %86 = vmatprep.subr.mxu0 0.0
    %87 = vmatpush1.xpose.msra.mxu0 %v42
    %88 = vmatprep.subr.mxu0 0.0
    %89 = vmatpush2.xpose.msra.mxu0 0.0
    %90 = vmatprep.subr.mxu0 0.0
    %91 = vmatpush2.xpose.msra.mxu0 0.0
    %92 = vmatprep.subr.mxu0 0.0
    %93 = vmatpush2.xpose.msra.mxu0 0.0
    %94 = vmatprep.subr.mxu0 0.0
    %95 = vmatpush2.xpose.msra.mxu0 0.0
    %96 = vmatprep.subr.mxu0 0.0
    %97 = vmatpush2.xpose.msra.mxu0 0.0
    %98 = vmatprep.subr.mxu0 0.0
    %99 = vmatpush2.xpose.msra.mxu0 0.0
    %100 = vmatprep.subr.mxu0 0.0
    %101 = vmatpush2.xpose.msra.mxu0 0.0
    %102 = vmatprep.subr.mxu0 0.0
    %103 = vmatpush2.xpose.msra.mxu0 0.0
    %104 = vmatprep.subr.mxu0 0.0
    %105 = vmatpush2.xpose.msra.mxu0 0.0
    %106 = vmatprep.subr.mxu0 0.0
    %107 = vmatpush2.xpose.msra.mxu0 0.0
    %108 = vmatprep.subr.mxu0 0.0
    %109 = vmatpush2.xpose.msra.mxu0 0.0
    %110 = vmatprep.subr.mxu0 0.0
    %111 = vmatpush2.xpose.msra.mxu0 0.0
    %112 = vmatprep.subr.mxu0 0.0
    %113 = vmatpush2.xpose.msra.mxu0 0.0
    %114 = vmatprep.subr.mxu0 0.0
    %115 = vmatpush2.xpose.msra.mxu0 0.0
    %116 = vmatprep.subr.mxu0 0.0
    %117 = vmatpush2.xpose.msra.mxu0 0.0
    %118 = vmatprep.subr.mxu0 0.0
    %119 = vmatpush2.xpose.msra.mxu0 0.0
    %120 = vmatprep.mubr.f32.mxu0 0.0
    %121 = vmatmul.mubr.f32.gmra.mxu0 %v54
    %v122 = vpop.f32.mrf.mxu0
    %v123 = vadd.f32 0.0, %v122
    %v124 = vpop.f32.mrf.mxu0
    %125 = vmatprep.mubr.f32.mxu0 0.0
    %126 = vmatmul.mubr.f32.gmra.mxu0 %v55
    %v127 = vpop.f32.mrf.mxu0
    %v128 = vadd.f32 0.0, %v127
    %v129 = vpop.f32.mrf.mxu0
    %130 = vdwg.mxu0
    %vm131 = vcmask 80896
    %v132 = vsel %vm131, %v123, -inf
    %133 = vmax.xlane.f32.xlu0 %v132
    %v134 = vpop.xlane.xlu0 %133
    %v135 = vsel %vm131, %v128, -inf
    %136 = vmax.xlane.f32.xlu0 %v135
    %v137 = vpop.xlane.xlu0 %136
    %v138 = vlaneseq
    %v139 = vand.u32 %v138, 127
    %vm140 = vcmp.eq.f32.partialorder %v123, %v134
    %vm141 = vcmp.eq.f32.partialorder %v128, %v137
    %v142 = vsel %vm140, %v139, 10
    %v143 = vsel %vm141, %v139, 10
    %v144 = vsel %vm131, %v142, 2147483647
    %v145 = vand.u32 %v144, 65535
    %v146 = vshra.s32 %v144, 16
    %v147 = vcvt.s32.f32 %v145
    %v148 = vcvt.s32.f32 %v146
    %149 = vmin.xlane.f32.xlu0 %v148
    %v150 = vpop.xlane.xlu0 %149
    %vm151 = vcmp.eq.f32.partialorder %v148, %v150
    %v152 = vsel %vm151, %v147, inf
    %153 = vmin.xlane.f32.xlu0 %v152
    %v154 = vpop.xlane.xlu0 %153
    %v155 = vcvt.f32.s32 %v154
    %v156 = vcvt.f32.s32 %v150
    %v157 = vshll.u32 %v156, 16
    %v158 = vadd.s32 %v157, %v155
    %v159 = vsel %vm131, %v143, 2147483647
    %v160 = vand.u32 %v159, 65535
    %v161 = vshra.s32 %v159, 16
    %v162 = vcvt.s32.f32 %v160
    %v163 = vcvt.s32.f32 %v161
    %164 = vmin.xlane.f32.xlu0 %v163
    %v165 = vpop.xlane.xlu0 %164
    %vm166 = vcmp.eq.f32.partialorder %v163, %v165
    %v167 = vsel %vm166, %v162, inf
    %168 = vmin.xlane.f32.xlu0 %v167
    %v169 = vpop.xlane.xlu0 %168
    %v170 = vcvt.f32.s32 %v169
    %v171 = vcvt.f32.s32 %v165
    %v172 = vshll.u32 %v171, 16
    %v173 = vadd.s32 %v172, %v170
    %vm174 = vcmp.eq.s32.totalorder %v139, %v158
    %vm175 = vcmp.eq.s32.totalorder %v139, %v173
    %v176 = vsel %vm174, 1, 0
    %v177 = vsel %vm175, 1, 0
    %v178 = vcvt.s32.f32 %v176
    %v179 = vcvt.s32.f32 %v177
    %v181 = vsel %vm131, %v178, 0
    %v184 = vsel %vm131, %v179, 0
    %v187 = vsel %vm34, %v43, 0
    %189 = vmatprep.subr.mxu0 0.0
    %190 = vmatpush1.msra.mxu0 0.0
    %191 = vmatprep.subr.mxu0 0.0
    %192 = vmatpush1.msra.mxu0 0.0
    %193 = vmatprep.subr.mxu0 0.0
    %194 = vmatpush1.msra.mxu0 0.0
    %195 = vmatprep.subr.mxu0 0.0
    %196 = vmatpush1.msra.mxu0 0.0
    %197 = vmatprep.subr.mxu0 0.0
    %198 = vmatpush1.msra.mxu0 0.0
    %199 = vmatprep.subr.mxu0 0.0
    %200 = vmatpush1.msra.mxu0 0.0
    %201 = vmatprep.subr.mxu0 0.0
    %202 = vmatpush1.msra.mxu0 0.0
    %203 = vmatprep.subr.mxu0 0.0
    %204 = vmatpush1.msra.mxu0 0.0
    %205 = vmatprep.subr.mxu0 0.0
    %206 = vmatpush1.msra.mxu0 0.0
    %207 = vmatprep.subr.mxu0 0.0
    %208 = vmatpush1.msra.mxu0 0.0
    %209 = vmatprep.subr.mxu0 0.0
    %210 = vmatpush1.msra.mxu0 0.0
    %211 = vmatprep.subr.mxu0 0.0
    %212 = vmatpush1.msra.mxu0 0.0
    %213 = vmatprep.subr.mxu0 0.0
    %214 = vmatpush1.msra.mxu0 0.0
    %215 = vmatprep.subr.mxu0 0.0
    %216 = vmatpush1.msra.mxu0 0.0
    %217 = vmatprep.subr.mxu0 0.0
    %218 = vmatpush1.msra.mxu0 %v187
    %219 = vmatprep.subr.mxu0 0.0
    %220 = vmatpush1.msra.mxu0 %v42
    %221 = vmatprep.subr.mxu0 0.0
    %222 = vmatpush2.msra.mxu0 0.0
    %223 = vmatprep.subr.mxu0 0.0
    %224 = vmatpush2.msra.mxu0 0.0
    %225 = vmatprep.subr.mxu0 0.0
    %226 = vmatpush2.msra.mxu0 0.0
    %227 = vmatprep.subr.mxu0 0.0
    %228 = vmatpush2.msra.mxu0 0.0
    %229 = vmatprep.subr.mxu0 0.0
    %230 = vmatpush2.msra.mxu0 0.0
    %231 = vmatprep.subr.mxu0 0.0
    %232 = vmatpush2.msra.mxu0 0.0
    %233 = vmatprep.subr.mxu0 0.0
    %234 = vmatpush2.msra.mxu0 0.0
    %235 = vmatprep.subr.mxu0 0.0
    %236 = vmatpush2.msra.mxu0 0.0
    %237 = vmatprep.subr.mxu0 0.0
    %238 = vmatpush2.msra.mxu0 0.0
    %239 = vmatprep.subr.mxu0 0.0
    %240 = vmatpush2.msra.mxu0 0.0
    %241 = vmatprep.subr.mxu0 0.0
    %242 = vmatpush2.msra.mxu0 0.0
    %243 = vmatprep.subr.mxu0 0.0
    %244 = vmatpush2.msra.mxu0 0.0
    %245 = vmatprep.subr.mxu0 0.0
    %246 = vmatpush2.msra.mxu0 0.0
    %247 = vmatprep.subr.mxu0 0.0
    %248 = vmatpush2.msra.mxu0 0.0
    %249 = vmatprep.subr.mxu0 0.0
    %250 = vmatpush2.msra.mxu0 0.0
    %251 = vmatprep.subr.mxu0 0.0
    %252 = vmatpush2.msra.mxu0 0.0
    %253 = vmatprep.mubr.f32.mxu0 0.0
    %254 = vmatmul.mubr.f32.gmra.mxu0 %v181
    %v255 = vpop.f32.mrf.mxu0
    %v256 = vadd.f32 0.0, %v255
    %v257 = vpop.f32.mrf.mxu0
    %258 = vmatprep.mubr.f32.mxu0 0.0
    %259 = vmatmul.mubr.f32.gmra.mxu0 %v184
    %v260 = vpop.f32.mrf.mxu0
    %v261 = vadd.f32 0.0, %v260
    %v262 = vpop.f32.mrf.mxu0
    %263 = vdwg.mxu0
    %v264 = vadd.f32 %v256, %v261
    %v265 = vrot.slane %v264, 4
    %v266 = vadd.f32 %v264, %v265
    %v267 = vrot.slane %v266, 2
    %v268 = vadd.f32 %v266, %v267
    %v269 = vrot.slane %v268, 1
    %v270 = vadd.f32 %v268, %v269
    %v271 = vadd.f32 %v24, %v25
    %v272 = vrot.slane %v271, 4
    %v273 = vadd.f32 %v271, %v272
    %v274 = vrot.slane %v273, 2
    %v275 = vadd.f32 %v273, %v274
    %v276 = vrot.slane %v275, 1
    %v277 = vadd.f32 %v275, %v276
    %v278 = vmul.f32 %v270, %v277
    %vm279 = vcmask 1040384
    %v280 = vsel %vm279, %v278, 0.0
    %281 = vadd.xlane.f32.xlu0 %v280
    %v282 = vpop.xlane.xlu0 %281
    %v283 = vrot.slane %v282, 4
    %v284 = vadd.f32 %v282, %v283
    %v285 = vrot.slane %v284, 2
    %v286 = vadd.f32 %v284, %v285
    %v287 = vrot.slane %v286, 1
    %v288 = vadd.f32 %v286, %v287
    %s289 = vtos %v288
    %s290 = smul.f32 %s289, 0.0625
    %v291 = vld [vmem:[%s2] sm:$0xff]
    %v292 = vld [vmem:[%s2 + $0x8] sm:$0x3]
    %v293 = vmul.f32 %v291, %v291
    %v294 = vmul.f32 %v292, %v292
    %295 = vadd.xlane.f32.xlu0 %v293
    %v296 = vpop.xlane.xlu0 %295
    %v297 = vsel %vm34, %v294, 0.0
    %298 = vadd.xlane.f32.xlu0 %v297
    %v299 = vpop.xlane.xlu0 %298
    %v300 = vmax.f32 %v296, 1e-12
    %v301 = vmax.f32 %v299, 1e-12
    %v302 = vrsqrt.pop %v300
    %v303 = vrsqrt.pop %v301
    %v304 = vmul.f32 %v291, %v302
    %v305 = vmul.f32 %v292, %v303
    %v307 = vsel %vm34, %v29, 0
    %309 = vmatprep.subr.mxu0 0.0
    %310 = vmatpush1.msra.mxu0 0.0
    %311 = vmatprep.subr.mxu0 0.0
    %312 = vmatpush1.msra.mxu0 0.0
    %313 = vmatprep.subr.mxu0 0.0
    %314 = vmatpush1.msra.mxu0 0.0
    %315 = vmatprep.subr.mxu0 0.0
    %316 = vmatpush1.msra.mxu0 0.0
    %317 = vmatprep.subr.mxu0 0.0
    %318 = vmatpush1.msra.mxu0 0.0
    %319 = vmatprep.subr.mxu0 0.0
    %320 = vmatpush1.msra.mxu0 0.0
    %321 = vmatprep.subr.mxu0 0.0
    %322 = vmatpush1.msra.mxu0 0.0
    %323 = vmatprep.subr.mxu0 0.0
    %324 = vmatpush1.msra.mxu0 0.0
    %325 = vmatprep.subr.mxu0 0.0
    %326 = vmatpush1.msra.mxu0 0.0
    %327 = vmatprep.subr.mxu0 0.0
    %328 = vmatpush1.msra.mxu0 0.0
    %329 = vmatprep.subr.mxu0 0.0
    %330 = vmatpush1.msra.mxu0 0.0
    %331 = vmatprep.subr.mxu0 0.0
    %332 = vmatpush1.msra.mxu0 0.0
    %333 = vmatprep.subr.mxu0 0.0
    %334 = vmatpush1.msra.mxu0 0.0
    %335 = vmatprep.subr.mxu0 0.0
    %336 = vmatpush1.msra.mxu0 0.0
    %337 = vmatprep.subr.mxu0 0.0
    %338 = vmatpush1.msra.mxu0 %v307
    %339 = vmatprep.subr.mxu0 0.0
    %340 = vmatpush1.msra.mxu0 %v28
    %341 = vmatprep.subr.mxu0 0.0
    %342 = vmatpush2.msra.mxu0 0.0
    %343 = vmatprep.subr.mxu0 0.0
    %344 = vmatpush2.msra.mxu0 0.0
    %345 = vmatprep.subr.mxu0 0.0
    %346 = vmatpush2.msra.mxu0 0.0
    %347 = vmatprep.subr.mxu0 0.0
    %348 = vmatpush2.msra.mxu0 0.0
    %349 = vmatprep.subr.mxu0 0.0
    %350 = vmatpush2.msra.mxu0 0.0
    %351 = vmatprep.subr.mxu0 0.0
    %352 = vmatpush2.msra.mxu0 0.0
    %353 = vmatprep.subr.mxu0 0.0
    %354 = vmatpush2.msra.mxu0 0.0
    %355 = vmatprep.subr.mxu0 0.0
    %356 = vmatpush2.msra.mxu0 0.0
    %357 = vmatprep.subr.mxu0 0.0
    %358 = vmatpush2.msra.mxu0 0.0
    %359 = vmatprep.subr.mxu0 0.0
    %360 = vmatpush2.msra.mxu0 0.0
    %361 = vmatprep.subr.mxu0 0.0
    %362 = vmatpush2.msra.mxu0 0.0
    %363 = vmatprep.subr.mxu0 0.0
    %364 = vmatpush2.msra.mxu0 0.0
    %365 = vmatprep.subr.mxu0 0.0
    %366 = vmatpush2.msra.mxu0 0.0
    %367 = vmatprep.subr.mxu0 0.0
    %368 = vmatpush2.msra.mxu0 0.0
    %369 = vmatprep.subr.mxu0 0.0
    %370 = vmatpush2.msra.mxu0 0.0
    %371 = vmatprep.subr.mxu0 0.0
    %372 = vmatpush2.msra.mxu0 0.0
    %373 = vmatprep.mubr.f32.mxu0 0.0
    %374 = vmatmul.mubr.f32.gmra.mxu0 %v181
    %v375 = vpop.f32.mrf.mxu0
    %v376 = vadd.f32 0.0, %v375
    %v377 = vpop.f32.mrf.mxu0
    %378 = vmatprep.mubr.f32.mxu0 0.0
    %379 = vmatmul.mubr.f32.gmra.mxu0 %v184
    %v380 = vpop.f32.mrf.mxu0
    %v381 = vadd.f32 0.0, %v380
    %v382 = vpop.f32.mrf.mxu0
    %383 = vdwg.mxu0
    %v384 = vsub.f32 %v376, %v54
    %v385 = vsub.f32 %v381, %v55
    %386 = vmatprep.subr.mxu0 0.0
    %387 = vmatpush1.xpose.msra.mxu0 0.0
    %388 = vmatprep.subr.mxu0 0.0
    %389 = vmatpush1.xpose.msra.mxu0 0.0
    %390 = vmatprep.subr.mxu0 0.0
    %391 = vmatpush1.xpose.msra.mxu0 0.0
    %392 = vmatprep.subr.mxu0 0.0
    %393 = vmatpush1.xpose.msra.mxu0 0.0
    %394 = vmatprep.subr.mxu0 0.0
    %395 = vmatpush1.xpose.msra.mxu0 0.0
    %396 = vmatprep.subr.mxu0 0.0
    %397 = vmatpush1.xpose.msra.mxu0 0.0
    %398 = vmatprep.subr.mxu0 0.0
    %399 = vmatpush1.xpose.msra.mxu0 0.0
    %400 = vmatprep.subr.mxu0 0.0
    %401 = vmatpush1.xpose.msra.mxu0 0.0
    %402 = vmatprep.subr.mxu0 0.0
    %403 = vmatpush1.xpose.msra.mxu0 0.0
    %404 = vmatprep.subr.mxu0 0.0
    %405 = vmatpush1.xpose.msra.mxu0 0.0
    %406 = vmatprep.subr.mxu0 0.0
    %407 = vmatpush1.xpose.msra.mxu0 0.0
    %408 = vmatprep.subr.mxu0 0.0
    %409 = vmatpush1.xpose.msra.mxu0 0.0
    %410 = vmatprep.subr.mxu0 0.0
    %411 = vmatpush1.xpose.msra.mxu0 0.0
    %412 = vmatprep.subr.mxu0 0.0
    %413 = vmatpush1.xpose.msra.mxu0 0.0
    %414 = vmatprep.subr.mxu0 0.0
    %415 = vmatpush1.xpose.msra.mxu0 %v305
    %416 = vmatprep.subr.mxu0 0.0
    %417 = vmatpush1.xpose.msra.mxu0 %v304
    %418 = vmatprep.subr.mxu0 0.0
    %419 = vmatpush2.xpose.msra.mxu0 0.0
    %420 = vmatprep.subr.mxu0 0.0
    %421 = vmatpush2.xpose.msra.mxu0 0.0
    %422 = vmatprep.subr.mxu0 0.0
    %423 = vmatpush2.xpose.msra.mxu0 0.0
    %424 = vmatprep.subr.mxu0 0.0
    %425 = vmatpush2.xpose.msra.mxu0 0.0
    %426 = vmatprep.subr.mxu0 0.0
    %427 = vmatpush2.xpose.msra.mxu0 0.0
    %428 = vmatprep.subr.mxu0 0.0
    %429 = vmatpush2.xpose.msra.mxu0 0.0
    %430 = vmatprep.subr.mxu0 0.0
    %431 = vmatpush2.xpose.msra.mxu0 0.0
    %432 = vmatprep.subr.mxu0 0.0
    %433 = vmatpush2.xpose.msra.mxu0 0.0
    %434 = vmatprep.subr.mxu0 0.0
    %435 = vmatpush2.xpose.msra.mxu0 0.0
    %436 = vmatprep.subr.mxu0 0.0
    %437 = vmatpush2.xpose.msra.mxu0 0.0
    %438 = vmatprep.subr.mxu0 0.0
    %439 = vmatpush2.xpose.msra.mxu0 0.0
    %440 = vmatprep.subr.mxu0 0.0
    %441 = vmatpush2.xpose.msra.mxu0 0.0
    %442 = vmatprep.subr.mxu0 0.0
    %443 = vmatpush2.xpose.msra.mxu0 0.0
    %444 = vmatprep.subr.mxu0 0.0
    %445 = vmatpush2.xpose.msra.mxu0 0.0
    %446 = vmatprep.subr.mxu0 0.0
    %447 = vmatpush2.xpose.msra.mxu0 0.0
    %448 = vmatprep.subr.mxu0 0.0
    %449 = vmatpush2.xpose.msra.mxu0 0.0
    %450 = vmatprep.mubr.f32.mxu0 0.0
    %451 = vmatmul.mubr.f32.gmra.mxu0 %v384
    %v452 = vpop.f32.mrf.mxu0
    %v453 = vadd.f32 0.0, %v452
    %v454 = vpop.f32.mrf.mxu0
    %455 = vmatprep.mubr.f32.mxu0 0.0
    %456 = vmatmul.mubr.f32.gmra.mxu0 %v385
    %v457 = vpop.f32.mrf.mxu0
    %v458 = vadd.f32 0.0, %v457
    %v459 = vpop.f32.mrf.mxu0
    %460 = vdwg.mxu0
    %v461 = vsel %vm131, %v453, -inf
    %462 = vmax.xlane.f32.xlu0 %v461
    %v463 = vpop.xlane.xlu0 %462
    %v464 = vsel %vm131, %v458, -inf
    %465 = vmax.xlane.f32.xlu0 %v464
    %v466 = vpop.xlane.xlu0 %465
    %vm467 = vcmp.eq.f32.partialorder %v453, %v463
    %vm468 = vcmp.eq.f32.partialorder %v458, %v466
    %v469 = vsel %vm467, %v139, 10
    %v470 = vsel %vm468, %v139, 10
    %v471 = vsel %vm131, %v469, 2147483647
    %v472 = vand.u32 %v471, 65535
    %v473 = vshra.s32 %v471, 16
    %v474 = vcvt.s32.f32 %v472
    %v475 = vcvt.s32.f32 %v473
    %476 = vmin.xlane.f32.xlu0 %v475
    %v477 = vpop.xlane.xlu0 %476
    %vm478 = vcmp.eq.f32.partialorder %v475, %v477
    %v479 = vsel %vm478, %v474, inf
    %480 = vmin.xlane.f32.xlu0 %v479
    %v481 = vpop.xlane.xlu0 %480
    %v482 = vcvt.f32.s32 %v481
    %v483 = vcvt.f32.s32 %v477
    %v484 = vshll.u32 %v483, 16
    %v485 = vadd.s32 %v484, %v482
    %v486 = vsel %vm131, %v470, 2147483647
    %v487 = vand.u32 %v486, 65535
    %v488 = vshra.s32 %v486, 16
    %v489 = vcvt.s32.f32 %v487
    %v490 = vcvt.s32.f32 %v488
    %491 = vmin.xlane.f32.xlu0 %v490
    %v492 = vpop.xlane.xlu0 %491
    %vm493 = vcmp.eq.f32.partialorder %v490, %v492
    %v494 = vsel %vm493, %v489, inf
    %495 = vmin.xlane.f32.xlu0 %v494
    %v496 = vpop.xlane.xlu0 %495
    %v497 = vcvt.f32.s32 %v496
    %v498 = vcvt.f32.s32 %v492
    %v499 = vshll.u32 %v498, 16
    %v500 = vadd.s32 %v499, %v497
    %vm501 = vcmp.eq.s32.totalorder %v139, %v485
    %vm502 = vcmp.eq.s32.totalorder %v139, %v500
    %v503 = vsel %vm501, 1, 0
    %v504 = vsel %vm502, 1, 0
    %v505 = vcvt.s32.f32 %v503
    %v506 = vcvt.s32.f32 %v504
    %v508 = vsel %vm131, %v505, 0
    %v511 = vsel %vm131, %v506, 0
    %v514 = vsel %vm34, %v305, 0
    %516 = vmatprep.subr.mxu0 0.0
    %517 = vmatpush1.msra.mxu0 0.0
    %518 = vmatprep.subr.mxu0 0.0
    %519 = vmatpush1.msra.mxu0 0.0
    %520 = vmatprep.subr.mxu0 0.0
    %521 = vmatpush1.msra.mxu0 0.0
    %522 = vmatprep.subr.mxu0 0.0
    %523 = vmatpush1.msra.mxu0 0.0
    %524 = vmatprep.subr.mxu0 0.0
    %525 = vmatpush1.msra.mxu0 0.0
    %526 = vmatprep.subr.mxu0 0.0
    %527 = vmatpush1.msra.mxu0 0.0
    %528 = vmatprep.subr.mxu0 0.0
    %529 = vmatpush1.msra.mxu0 0.0
    %530 = vmatprep.subr.mxu0 0.0
    %531 = vmatpush1.msra.mxu0 0.0
    %532 = vmatprep.subr.mxu0 0.0
    %533 = vmatpush1.msra.mxu0 0.0
    %534 = vmatprep.subr.mxu0 0.0
    %535 = vmatpush1.msra.mxu0 0.0
    %536 = vmatprep.subr.mxu0 0.0
    %537 = vmatpush1.msra.mxu0 0.0
    %538 = vmatprep.subr.mxu0 0.0
    %539 = vmatpush1.msra.mxu0 0.0
    %540 = vmatprep.subr.mxu0 0.0
    %541 = vmatpush1.msra.mxu0 0.0
    %542 = vmatprep.subr.mxu0 0.0
    %543 = vmatpush1.msra.mxu0 0.0
    %544 = vmatprep.subr.mxu0 0.0
    %545 = vmatpush1.msra.mxu0 %v514
    %546 = vmatprep.subr.mxu0 0.0
    %547 = vmatpush1.msra.mxu0 %v304
    %548 = vmatprep.subr.mxu0 0.0
    %549 = vmatpush2.msra.mxu0 0.0
    %550 = vmatprep.subr.mxu0 0.0
    %551 = vmatpush2.msra.mxu0 0.0
    %552 = vmatprep.subr.mxu0 0.0
    %553 = vmatpush2.msra.mxu0 0.0
    %554 = vmatprep.subr.mxu0 0.0
    %555 = vmatpush2.msra.mxu0 0.0
    %556 = vmatprep.subr.mxu0 0.0
    %557 = vmatpush2.msra.mxu0 0.0
    %558 = vmatprep.subr.mxu0 0.0
    %559 = vmatpush2.msra.mxu0 0.0
    %560 = vmatprep.subr.mxu0 0.0
    %561 = vmatpush2.msra.mxu0 0.0
    %562 = vmatprep.subr.mxu0 0.0
    %563 = vmatpush2.msra.mxu0 0.0
    %564 = vmatprep.subr.mxu0 0.0
    %565 = vmatpush2.msra.mxu0 0.0
    %566 = vmatprep.subr.mxu0 0.0
    %567 = vmatpush2.msra.mxu0 0.0
    %568 = vmatprep.subr.mxu0 0.0
    %569 = vmatpush2.msra.mxu0 0.0
    %570 = vmatprep.subr.mxu0 0.0
    %571 = vmatpush2.msra.mxu0 0.0
    %572 = vmatprep.subr.mxu0 0.0
    %573 = vmatpush2.msra.mxu0 0.0
    %574 = vmatprep.subr.mxu0 0.0
    %575 = vmatpush2.msra.mxu0 0.0
    %576 = vmatprep.subr.mxu0 0.0
    %577 = vmatpush2.msra.mxu0 0.0
    %578 = vmatprep.subr.mxu0 0.0
    %579 = vmatpush2.msra.mxu0 0.0
    %580 = vmatprep.mubr.f32.mxu0 0.0
    %581 = vmatmul.mubr.f32.gmra.mxu0 %v508
    %v582 = vpop.f32.mrf.mxu0
    %v583 = vadd.f32 0.0, %v582
    %v584 = vpop.f32.mrf.mxu0
    %585 = vmatprep.mubr.f32.mxu0 0.0
    %586 = vmatmul.mubr.f32.gmra.mxu0 %v511
    %v587 = vpop.f32.mrf.mxu0
    %v588 = vadd.f32 0.0, %v587
    %v589 = vpop.f32.mrf.mxu0
    %590 = vdwg.mxu0
    %v591 = vmul.f32 %v583, %v384
    %v592 = vmul.f32 %v588, %v385
    %v593 = vadd.f32 %v591, %v592
    %594 = vadd.xlane.f32.xlu0 %v593
    %v595 = vpop.xlane.xlu0 %594
    %v596 = vrot.slane %v595, 4
    %v597 = vadd.f32 %v595, %v596
    %v598 = vrot.slane %v597, 2
    %v599 = vadd.f32 %v597, %v598
    %v600 = vrot.slane %v599, 1
    %v601 = vadd.f32 %v599, %v600
    %s602 = vtos %v601
    %s603 = smul.f32 %s602, 0.0625
    %v604 = vld [vmem:[%s4] sm:$0xff]
    %v605 = vld [vmem:[%s4 + $0x8] sm:$0xff]
    %v606 = vld [vmem:[%s4 + $0x10] sm:$0xff]
    %v607 = vld [vmem:[%s4 + $0x18] sm:$0xff]
    %v608 = vld [vmem:[%s4 + $0x20] sm:$0xff]
    %v609 = vld [vmem:[%s4 + $0x28] sm:$0x3]
    %v610 = vld [vmem:[%s4 + $0x30] sm:$0x3]
    %v611 = vld [vmem:[%s4 + $0x38] sm:$0x3]
    %v612 = vld [vmem:[%s4 + $0x40] sm:$0x3]
    %v613 = vld [vmem:[%s4 + $0x48] sm:$0x3]
    %v615 = vsel %vm34, %v609, 0
    %v618 = vsel %vm34, %v610, 0
    %v621 = vsel %vm34, %v611, 0
    %v624 = vsel %vm34, %v612, 0
    %v627 = vsel %vm34, %v613, 0
    %629 = vmatprep.subr.mxu0 0.0
    %630 = vmatpush1.msra.mxu0 0.0
    %631 = vmatprep.subr.mxu0 0.0
    %632 = vmatpush1.msra.mxu0 0.0
    %633 = vmatprep.subr.mxu0 0.0
    %634 = vmatpush1.msra.mxu0 0.0
    %635 = vmatprep.subr.mxu0 0.0
    %636 = vmatpush1.msra.mxu0 0.0
    %637 = vmatprep.subr.mxu0 0.0
    %638 = vmatpush1.msra.mxu0 0.0
    %639 = vmatprep.subr.mxu0 0.0
    %640 = vmatpush1.msra.mxu0 0.0
    %641 = vmatprep.subr.mxu0 0.0
    %642 = vmatpush1.msra.mxu0 0.0
    %643 = vmatprep.subr.mxu0 0.0
    %644 = vmatpush1.msra.mxu0 0.0
    %645 = vmatprep.subr.mxu0 0.0
    %646 = vmatpush1.msra.mxu0 0.0
    %647 = vmatprep.subr.mxu0 0.0
    %648 = vmatpush1.msra.mxu0 0.0
    %649 = vmatprep.subr.mxu0 0.0
    %650 = vmatpush1.msra.mxu0 0.0
    %651 = vmatprep.subr.mxu0 0.0
    %652 = vmatpush1.msra.mxu0 0.0
    %653 = vmatprep.subr.mxu0 0.0
    %654 = vmatpush1.msra.mxu0 0.0
    %655 = vmatprep.subr.mxu0 0.0
    %656 = vmatpush1.msra.mxu0 0.0
    %657 = vmatprep.subr.mxu0 %v618
    %658 = vmatpush1.msra.mxu0 %v615
    %659 = vmatprep.subr.mxu0 %v605
    %660 = vmatpush1.msra.mxu0 %v604
    %661 = vmatprep.subr.mxu0 0.0
    %662 = vmatpush2.msra.mxu0 0.0
    %663 = vmatprep.subr.mxu0 0.0
    %664 = vmatpush2.msra.mxu0 0.0
    %665 = vmatprep.subr.mxu0 0.0
    %666 = vmatpush2.msra.mxu0 0.0
    %667 = vmatprep.subr.mxu0 0.0
    %668 = vmatpush2.msra.mxu0 0.0
    %669 = vmatprep.subr.mxu0 0.0
    %670 = vmatpush2.msra.mxu0 0.0
    %671 = vmatprep.subr.mxu0 0.0
    %672 = vmatpush2.msra.mxu0 0.0
    %673 = vmatprep.subr.mxu0 0.0
    %674 = vmatpush2.msra.mxu0 0.0
    %675 = vmatprep.subr.mxu0 0.0
    %676 = vmatpush2.msra.mxu0 0.0
    %677 = vmatprep.subr.mxu0 0.0
    %678 = vmatpush2.msra.mxu0 0.0
    %679 = vmatprep.subr.mxu0 0.0
    %680 = vmatpush2.msra.mxu0 0.0
    %681 = vmatprep.subr.mxu0 0.0
    %682 = vmatpush2.msra.mxu0 0.0
    %683 = vmatprep.subr.mxu0 0.0
    %684 = vmatpush2.msra.mxu0 0.0
    %685 = vmatprep.subr.mxu0 0.0
    %686 = vmatpush2.msra.mxu0 0.0
    %687 = vmatprep.subr.mxu0 0.0
    %688 = vmatpush2.msra.mxu0 0.0
    %689 = vmatprep.subr.mxu0 0.0
    %690 = vmatpush2.msra.mxu0 0.0
    %691 = vmatprep.subr.mxu0 0.0
    %692 = vmatpush2.msra.mxu0 0.0
    %693 = vmatprep.mubr.f32.mxu0 0.0
    %694 = vmatmul.mubr.f32.gmra.mxu0 %v508
    %v695 = vpop.f32.mrf.mxu0
    %v696 = vadd.f32 0.0, %v695
    %v697 = vpop.f32.mrf.mxu0
    %v698 = vadd.f32 0.0, %v697
    %699 = vmatprep.mubr.f32.mxu0 0.0
    %700 = vmatmul.mubr.f32.gmra.mxu0 %v511
    %v701 = vpop.f32.mrf.mxu0
    %v702 = vadd.f32 0.0, %v701
    %v703 = vpop.f32.mrf.mxu0
    %v704 = vadd.f32 0.0, %v703
    %705 = vdwg.mxu0
    %706 = vmatprep.subr.mxu0 0.0
    %707 = vmatpush1.msra.mxu0 0.0
    %708 = vmatprep.subr.mxu0 0.0
    %709 = vmatpush1.msra.mxu0 0.0
    %710 = vmatprep.subr.mxu0 0.0
    %711 = vmatpush1.msra.mxu0 0.0
    %712 = vmatprep.subr.mxu0 0.0
    %713 = vmatpush1.msra.mxu0 0.0
    %714 = vmatprep.subr.mxu0 0.0
    %715 = vmatpush1.msra.mxu0 0.0
    %716 = vmatprep.subr.mxu0 0.0
    %717 = vmatpush1.msra.mxu0 0.0
    %718 = vmatprep.subr.mxu0 0.0
    %719 = vmatpush1.msra.mxu0 0.0
    %720 = vmatprep.subr.mxu0 0.0
    %721 = vmatpush1.msra.mxu0 0.0
    %722 = vmatprep.subr.mxu0 0.0
    %723 = vmatpush1.msra.mxu0 0.0
    %724 = vmatprep.subr.mxu0 0.0
    %725 = vmatpush1.msra.mxu0 0.0
    %726 = vmatprep.subr.mxu0 0.0
    %727 = vmatpush1.msra.mxu0 0.0
    %728 = vmatprep.subr.mxu0 0.0
    %729 = vmatpush1.msra.mxu0 0.0
    %730 = vmatprep.subr.mxu0 0.0
    %731 = vmatpush1.msra.mxu0 0.0
    %732 = vmatprep.subr.mxu0 0.0
    %733 = vmatpush1.msra.mxu0 0.0
    %734 = vmatprep.subr.mxu0 %v624
    %735 = vmatpush1.msra.mxu0 %v621
    %736 = vmatprep.subr.mxu0 %v607
    %737 = vmatpush1.msra.mxu0 %v606
    %738 = vmatprep.subr.mxu0 0.0
    %739 = vmatpush2.msra.mxu0 0.0
    %740 = vmatprep.subr.mxu0 0.0
    %741 = vmatpush2.msra.mxu0 0.0
    %742 = vmatprep.subr.mxu0 0.0
    %743 = vmatpush2.msra.mxu0 0.0
    %744 = vmatprep.subr.mxu0 0.0
    %745 = vmatpush2.msra.mxu0 0.0
    %746 = vmatprep.subr.mxu0 0.0
    %747 = vmatpush2.msra.mxu0 0.0
    %748 = vmatprep.subr.mxu0 0.0
    %749 = vmatpush2.msra.mxu0 0.0
    %750 = vmatprep.subr.mxu0 0.0
    %751 = vmatpush2.msra.mxu0 0.0
    %752 = vmatprep.subr.mxu0 0.0
    %753 = vmatpush2.msra.mxu0 0.0
    %754 = vmatprep.subr.mxu0 0.0
    %755 = vmatpush2.msra.mxu0 0.0
    %756 = vmatprep.subr.mxu0 0.0
    %757 = vmatpush2.msra.mxu0 0.0
    %758 = vmatprep.subr.mxu0 0.0
    %759 = vmatpush2.msra.mxu0 0.0
    %760 = vmatprep.subr.mxu0 0.0
    %761 = vmatpush2.msra.mxu0 0.0
    %762 = vmatprep.subr.mxu0 0.0
    %763 = vmatpush2.msra.mxu0 0.0
    %764 = vmatprep.subr.mxu0 0.0
    %765 = vmatpush2.msra.mxu0 0.0
    %766 = vmatprep.subr.mxu0 0.0
    %767 = vmatpush2.msra.mxu0 0.0
    %768 = vmatprep.subr.mxu0 0.0
    %769 = vmatpush2.msra.mxu0 0.0
    %770 = vmatprep.mubr.f32.mxu0 0.0
    %771 = vmatmul.mubr.f32.gmra.mxu0 %v508
    %v772 = vpop.f32.mrf.mxu0
    %v773 = vadd.f32 0.0, %v772
    %v774 = vpop.f32.mrf.mxu0
    %v775 = vadd.f32 0.0, %v774
    %776 = vmatprep.mubr.f32.mxu0 0.0
    %777 = vmatmul.mubr.f32.gmra.mxu0 %v511
    %v778 = vpop.f32.mrf.mxu0
    %v779 = vadd.f32 0.0, %v778
    %v780 = vpop.f32.mrf.mxu0
    %v781 = vadd.f32 0.0, %v780
    %782 = vdwg.mxu0
    %783 = vmatprep.subr.mxu0 0.0
    %784 = vmatpush1.msra.mxu0 0.0
    %785 = vmatprep.subr.mxu0 0.0
    %786 = vmatpush1.msra.mxu0 0.0
    %787 = vmatprep.subr.mxu0 0.0
    %788 = vmatpush1.msra.mxu0 0.0
    %789 = vmatprep.subr.mxu0 0.0
    %790 = vmatpush1.msra.mxu0 0.0
    %791 = vmatprep.subr.mxu0 0.0
    %792 = vmatpush1.msra.mxu0 0.0
    %793 = vmatprep.subr.mxu0 0.0
    %794 = vmatpush1.msra.mxu0 0.0
    %795 = vmatprep.subr.mxu0 0.0
    %796 = vmatpush1.msra.mxu0 0.0
    %797 = vmatprep.subr.mxu0 0.0
    %798 = vmatpush1.msra.mxu0 0.0
    %799 = vmatprep.subr.mxu0 0.0
    %800 = vmatpush1.msra.mxu0 0.0
    %801 = vmatprep.subr.mxu0 0.0
    %802 = vmatpush1.msra.mxu0 0.0
    %803 = vmatprep.subr.mxu0 0.0
    %804 = vmatpush1.msra.mxu0 0.0
    %805 = vmatprep.subr.mxu0 0.0
    %806 = vmatpush1.msra.mxu0 0.0
    %807 = vmatprep.subr.mxu0 0.0
    %808 = vmatpush1.msra.mxu0 0.0
    %809 = vmatprep.subr.mxu0 0.0
    %810 = vmatpush1.msra.mxu0 0.0
    %811 = vmatprep.subr.mxu0 0.0
    %812 = vmatpush1.msra.mxu0 %v627
    %813 = vmatprep.subr.mxu0 0.0
    %814 = vmatpush1.msra.mxu0 %v608
    %815 = vmatprep.subr.mxu0 0.0
    %816 = vmatpush2.msra.mxu0 0.0
    %817 = vmatprep.subr.mxu0 0.0
    %818 = vmatpush2.msra.mxu0 0.0
    %819 = vmatprep.subr.mxu0 0.0
    %820 = vmatpush2.msra.mxu0 0.0
    %821 = vmatprep.subr.mxu0 0.0
    %822 = vmatpush2.msra.mxu0 0.0
    %823 = vmatprep.subr.mxu0 0.0
    %824 = vmatpush2.msra.mxu0 0.0
    %825 = vmatprep.subr.mxu0 0.0
    %826 = vmatpush2.msra.mxu0 0.0
    %827 = vmatprep.subr.mxu0 0.0
    %828 = vmatpush2.msra.mxu0 0.0
    %829 = vmatprep.subr.mxu0 0.0
    %830 = vmatpush2.msra.mxu0 0.0
    %831 = vmatprep.subr.mxu0 0.0
    %832 = vmatpush2.msra.mxu0 0.0
    %833 = vmatprep.subr.mxu0 0.0
    %834 = vmatpush2.msra.mxu0 0.0
    %835 = vmatprep.subr.mxu0 0.0
    %836 = vmatpush2.msra.mxu0 0.0
    %837 = vmatprep.subr.mxu0 0.0
    %838 = vmatpush2.msra.mxu0 0.0
    %839 = vmatprep.subr.mxu0 0.0
    %840 = vmatpush2.msra.mxu0 0.0
    %841 = vmatprep.subr.mxu0 0.0
    %842 = vmatpush2.msra.mxu0 0.0
    %843 = vmatprep.subr.mxu0 0.0
    %844 = vmatpush2.msra.mxu0 0.0
    %845 = vmatprep.subr.mxu0 0.0
    %846 = vmatpush2.msra.mxu0 0.0
    %847 = vmatprep.mubr.f32.mxu0 0.0
    %848 = vmatmul.mubr.f32.gmra.mxu0 %v508
    %v849 = vpop.f32.mrf.mxu0
    %v850 = vadd.f32 0.0, %v849
    %v851 = vpop.f32.mrf.mxu0
    %852 = vmatprep.mubr.f32.mxu0 0.0
    %853 = vmatmul.mubr.f32.gmra.mxu0 %v511
    %v854 = vpop.f32.mrf.mxu0
    %v855 = vadd.f32 0.0, %v854
    %v856 = vpop.f32.mrf.mxu0
    %857 = vdwg.mxu0
    %v858 = vld [vmem:[%s3] sm:$0xff]
    %v859 = vld [vmem:[%s3 + $0x8] sm:$0xff]
    %v860 = vld [vmem:[%s3 + $0x10] sm:$0xff]
    %v861 = vld [vmem:[%s3 + $0x18] sm:$0xff]
    %v862 = vld [vmem:[%s3 + $0x20] sm:$0xff]
    %v863 = vld [vmem:[%s3 + $0x28] sm:$0x3]
    %v864 = vld [vmem:[%s3 + $0x30] sm:$0x3]
    %v865 = vld [vmem:[%s3 + $0x38] sm:$0x3]
    %v866 = vld [vmem:[%s3 + $0x40] sm:$0x3]
    %v867 = vld [vmem:[%s3 + $0x48] sm:$0x3]
    %v869 = vsel %vm34, %v863, 0
    %v872 = vsel %vm34, %v864, 0
    %v875 = vsel %vm34, %v865, 0
    %v878 = vsel %vm34, %v866, 0
    %v881 = vsel %vm34, %v867, 0
    %883 = vmatprep.subr.mxu0 0.0
    %884 = vmatpush1.msra.mxu0 0.0
    %885 = vmatprep.subr.mxu0 0.0
    %886 = vmatpush1.msra.mxu0 0.0
    %887 = vmatprep.subr.mxu0 0.0
    %888 = vmatpush1.msra.mxu0 0.0
    %889 = vmatprep.subr.mxu0 0.0
    %890 = vmatpush1.msra.mxu0 0.0
    %891 = vmatprep.subr.mxu0 0.0
    %892 = vmatpush1.msra.mxu0 0.0
    %893 = vmatprep.subr.mxu0 0.0
    %894 = vmatpush1.msra.mxu0 0.0
    %895 = vmatprep.subr.mxu0 0.0
    %896 = vmatpush1.msra.mxu0 0.0
    %897 = vmatprep.subr.mxu0 0.0
    %898 = vmatpush1.msra.mxu0 0.0
    %899 = vmatprep.subr.mxu0 0.0
    %900 = vmatpush1.msra.mxu0 0.0
    %901 = vmatprep.subr.mxu0 0.0
    %902 = vmatpush1.msra.mxu0 0.0
    %903 = vmatprep.subr.mxu0 0.0
    %904 = vmatpush1.msra.mxu0 0.0
    %905 = vmatprep.subr.mxu0 0.0
    %906 = vmatpush1.msra.mxu0 0.0
    %907 = vmatprep.subr.mxu0 0.0
    %908 = vmatpush1.msra.mxu0 0.0
    %909 = vmatprep.subr.mxu0 0.0
    %910 = vmatpush1.msra.mxu0 0.0
    %911 = vmatprep.subr.mxu0 %v872
    %912 = vmatpush1.msra.mxu0 %v869
    %913 = vmatprep.subr.mxu0 %v859
    %914 = vmatpush1.msra.mxu0 %v858
    %915 = vmatprep.subr.mxu0 0.0
    %916 = vmatpush2.msra.mxu0 0.0
    %917 = vmatprep.subr.mxu0 0.0
    %918 = vmatpush2.msra.mxu0 0.0
    %919 = vmatprep.subr.mxu0 0.0
    %920 = vmatpush2.msra.mxu0 0.0
    %921 = vmatprep.subr.mxu0 0.0
    %922 = vmatpush2.msra.mxu0 0.0
    %923 = vmatprep.subr.mxu0 0.0
    %924 = vmatpush2.msra.mxu0 0.0
    %925 = vmatprep.subr.mxu0 0.0
    %926 = vmatpush2.msra.mxu0 0.0
    %927 = vmatprep.subr.mxu0 0.0
    %928 = vmatpush2.msra.mxu0 0.0
    %929 = vmatprep.subr.mxu0 0.0
    %930 = vmatpush2.msra.mxu0 0.0
    %931 = vmatprep.subr.mxu0 0.0
    %932 = vmatpush2.msra.mxu0 0.0
    %933 = vmatprep.subr.mxu0 0.0
    %934 = vmatpush2.msra.mxu0 0.0
    %935 = vmatprep.subr.mxu0 0.0
    %936 = vmatpush2.msra.mxu0 0.0
    %937 = vmatprep.subr.mxu0 0.0
    %938 = vmatpush2.msra.mxu0 0.0
    %939 = vmatprep.subr.mxu0 0.0
    %940 = vmatpush2.msra.mxu0 0.0
    %941 = vmatprep.subr.mxu0 0.0
    %942 = vmatpush2.msra.mxu0 0.0
    %943 = vmatprep.subr.mxu0 0.0
    %944 = vmatpush2.msra.mxu0 0.0
    %945 = vmatprep.subr.mxu0 0.0
    %946 = vmatpush2.msra.mxu0 0.0
    %947 = vmatprep.mubr.f32.mxu0 0.0
    %948 = vmatmul.mubr.f32.gmra.mxu0 %v181
    %v949 = vpop.f32.mrf.mxu0
    %v950 = vadd.f32 0.0, %v949
    %v951 = vpop.f32.mrf.mxu0
    %v952 = vadd.f32 0.0, %v951
    %953 = vmatprep.mubr.f32.mxu0 0.0
    %954 = vmatmul.mubr.f32.gmra.mxu0 %v184
    %v955 = vpop.f32.mrf.mxu0
    %v956 = vadd.f32 0.0, %v955
    %v957 = vpop.f32.mrf.mxu0
    %v958 = vadd.f32 0.0, %v957
    %959 = vdwg.mxu0
    %960 = vmatprep.subr.mxu0 0.0
    %961 = vmatpush1.msra.mxu0 0.0
    %962 = vmatprep.subr.mxu0 0.0
    %963 = vmatpush1.msra.mxu0 0.0
    %964 = vmatprep.subr.mxu0 0.0
    %965 = vmatpush1.msra.mxu0 0.0
    %966 = vmatprep.subr.mxu0 0.0
    %967 = vmatpush1.msra.mxu0 0.0
    %968 = vmatprep.subr.mxu0 0.0
    %969 = vmatpush1.msra.mxu0 0.0
    %970 = vmatprep.subr.mxu0 0.0
    %971 = vmatpush1.msra.mxu0 0.0
    %972 = vmatprep.subr.mxu0 0.0
    %973 = vmatpush1.msra.mxu0 0.0
    %974 = vmatprep.subr.mxu0 0.0
    %975 = vmatpush1.msra.mxu0 0.0
    %976 = vmatprep.subr.mxu0 0.0
    %977 = vmatpush1.msra.mxu0 0.0
    %978 = vmatprep.subr.mxu0 0.0
    %979 = vmatpush1.msra.mxu0 0.0
    %980 = vmatprep.subr.mxu0 0.0
    %981 = vmatpush1.msra.mxu0 0.0
    %982 = vmatprep.subr.mxu0 0.0
    %983 = vmatpush1.msra.mxu0 0.0
    %984 = vmatprep.subr.mxu0 0.0
    %985 = vmatpush1.msra.mxu0 0.0
    %986 = vmatprep.subr.mxu0 0.0
    %987 = vmatpush1.msra.mxu0 0.0
    %988 = vmatprep.subr.mxu0 %v878
    %989 = vmatpush1.msra.mxu0 %v875
    %990 = vmatprep.subr.mxu0 %v861
    %991 = vmatpush1.msra.mxu0 %v860
    %992 = vmatprep.subr.mxu0 0.0
    %993 = vmatpush2.msra.mxu0 0.0
    %994 = vmatprep.subr.mxu0 0.0
    %995 = vmatpush2.msra.mxu0 0.0
    %996 = vmatprep.subr.mxu0 0.0
    %997 = vmatpush2.msra.mxu0 0.0
    %998 = vmatprep.subr.mxu0 0.0
    %999 = vmatpush2.msra.mxu0 0.0
    %1000 = vmatprep.subr.mxu0 0.0
    %1001 = vmatpush2.msra.mxu0 0.0
    %1002 = vmatprep.subr.mxu0 0.0
    %1003 = vmatpush2.msra.mxu0 0.0
    %1004 = vmatprep.subr.mxu0 0.0
    %1005 = vmatpush2.msra.mxu0 0.0
    %1006 = vmatprep.subr.mxu0 0.0
    %1007 = vmatpush2.msra.mxu0 0.0
    %1008 = vmatprep.subr.mxu0 0.0
    %1009 = vmatpush2.msra.mxu0 0.0
    %1010 = vmatprep.subr.mxu0 0.0
    %1011 = vmatpush2.msra.mxu0 0.0
    %1012 = vmatprep.subr.mxu0 0.0
    %1013 = vmatpush2.msra.mxu0 0.0
    %1014 = vmatprep.subr.mxu0 0.0
    %1015 = vmatpush2.msra.mxu0 0.0
    %1016 = vmatprep.subr.mxu0 0.0
    %1017 = vmatpush2.msra.mxu0 0.0
    %1018 = vmatprep.subr.mxu0 0.0
    %1019 = vmatpush2.msra.mxu0 0.0
    %1020 = vmatprep.subr.mxu0 0.0
    %1021 = vmatpush2.msra.mxu0 0.0
    %1022 = vmatprep.subr.mxu0 0.0
    %1023 = vmatpush2.msra.mxu0 0.0
    %1024 = vmatprep.mubr.f32.mxu0 0.0
    %1025 = vmatmul.mubr.f32.gmra.mxu0 %v181
    %v1026 = vpop.f32.mrf.mxu0
    %v1027 = vadd.f32 0.0, %v1026
    %v1028 = vpop.f32.mrf.mxu0
    %v1029 = vadd.f32 0.0, %v1028
    %1030 = vmatprep.mubr.f32.mxu0 0.0
    %1031 = vmatmul.mubr.f32.gmra.mxu0 %v184
    %v1032 = vpop.f32.mrf.mxu0
    %v1033 = vadd.f32 0.0, %v1032
    %v1034 = vpop.f32.mrf.mxu0
    %v1035 = vadd.f32 0.0, %v1034
    %1036 = vdwg.mxu0
    %1037 = vmatprep.subr.mxu0 0.0
    %1038 = vmatpush1.msra.mxu0 0.0
    %1039 = vmatprep.subr.mxu0 0.0
    %1040 = vmatpush1.msra.mxu0 0.0
    %1041 = vmatprep.subr.mxu0 0.0
    %1042 = vmatpush1.msra.mxu0 0.0
    %1043 = vmatprep.subr.mxu0 0.0
    %1044 = vmatpush1.msra.mxu0 0.0
    %1045 = vmatprep.subr.mxu0 0.0
    %1046 = vmatpush1.msra.mxu0 0.0
    %1047 = vmatprep.subr.mxu0 0.0
    %1048 = vmatpush1.msra.mxu0 0.0
    %1049 = vmatprep.subr.mxu0 0.0
    %1050 = vmatpush1.msra.mxu0 0.0
    %1051 = vmatprep.subr.mxu0 0.0
    %1052 = vmatpush1.msra.mxu0 0.0
    %1053 = vmatprep.subr.mxu0 0.0
    %1054 = vmatpush1.msra.mxu0 0.0
    %1055 = vmatprep.subr.mxu0 0.0
    %1056 = vmatpush1.msra.mxu0 0.0
    %1057 = vmatprep.subr.mxu0 0.0
    %1058 = vmatpush1.msra.mxu0 0.0
    %1059 = vmatprep.subr.mxu0 0.0
    %1060 = vmatpush1.msra.mxu0 0.0
    %1061 = vmatprep.subr.mxu0 0.0
    %1062 = vmatpush1.msra.mxu0 0.0
    %1063 = vmatprep.subr.mxu0 0.0
    %1064 = vmatpush1.msra.mxu0 0.0
    %1065 = vmatprep.subr.mxu0 0.0
    %1066 = vmatpush1.msra.mxu0 %v881
    %1067 = vmatprep.subr.mxu0 0.0
    %1068 = vmatpush1.msra.mxu0 %v862
    %1069 = vmatprep.subr.mxu0 0.0
    %1070 = vmatpush2.msra.mxu0 0.0
    %1071 = vmatprep.subr.mxu0 0.0
    %1072 = vmatpush2.msra.mxu0 0.0
    %1073 = vmatprep.subr.mxu0 0.0
    %1074 = vmatpush2.msra.mxu0 0.0
    %1075 = vmatprep.subr.mxu0 0.0
    %1076 = vmatpush2.msra.mxu0 0.0
    %1077 = vmatprep.subr.mxu0 0.0
    %1078 = vmatpush2.msra.mxu0 0.0
    %1079 = vmatprep.subr.mxu0 0.0
    %1080 = vmatpush2.msra.mxu0 0.0
    %1081 = vmatprep.subr.mxu0 0.0
    %1082 = vmatpush2.msra.mxu0 0.0
    %1083 = vmatprep.subr.mxu0 0.0
    %1084 = vmatpush2.msra.mxu0 0.0
    %1085 = vmatprep.subr.mxu0 0.0
    %1086 = vmatpush2.msra.mxu0 0.0
    %1087 = vmatprep.subr.mxu0 0.0
    %1088 = vmatpush2.msra.mxu0 0.0
    %1089 = vmatprep.subr.mxu0 0.0
    %1090 = vmatpush2.msra.mxu0 0.0
    %1091 = vmatprep.subr.mxu0 0.0
    %1092 = vmatpush2.msra.mxu0 0.0
    %1093 = vmatprep.subr.mxu0 0.0
    %1094 = vmatpush2.msra.mxu0 0.0
    %1095 = vmatprep.subr.mxu0 0.0
    %1096 = vmatpush2.msra.mxu0 0.0
    %1097 = vmatprep.subr.mxu0 0.0
    %1098 = vmatpush2.msra.mxu0 0.0
    %1099 = vmatprep.subr.mxu0 0.0
    %1100 = vmatpush2.msra.mxu0 0.0
    %1101 = vmatprep.mubr.f32.mxu0 0.0
    %1102 = vmatmul.mubr.f32.gmra.mxu0 %v181
    %v1103 = vpop.f32.mrf.mxu0
    %v1104 = vadd.f32 0.0, %v1103
    %v1105 = vpop.f32.mrf.mxu0
    %1106 = vmatprep.mubr.f32.mxu0 0.0
    %1107 = vmatmul.mubr.f32.gmra.mxu0 %v184
    %v1108 = vpop.f32.mrf.mxu0
    %v1109 = vadd.f32 0.0, %v1108
    %v1110 = vpop.f32.mrf.mxu0
    %1111 = vdwg.mxu0
    %v1114 = vcombine.high %v696, %v696
    %v1116 = vunpack.c.l.s4 1966171168
    %v1117 = vunpack.c.0.s8 %v1116
    %v1118 = vlaneseq
    %v1119 = vshrl.u32 %v1118, 7
    %v1120 = vsub.s32 %v1117, %v1119
    %v1121 = vrot.slane %v696, %v1120
    %v1123 = vunpack.c.l.s4 1966171168
    %v1124 = vunpack.c.0.s8 %v1123
    %v1125 = vlaneseq
    %v1126 = vshrl.u32 %v1125, 7
    %v1127 = vsub.s32 %v1124, %v1126
    %v1128 = vrot.slane %v1114, %v1127
    %v1129 = vcombine.high %v1121, %v1121
    %v1130 = vcombine.high %v1128, %v1128
    %v1132 = vunpack.c.l.s4 1966171168
    %v1133 = vunpack.c.0.s8 %v1132
    %v1134 = vlaneseq
    %v1135 = vshrl.u32 %v1134, 7
    %v1136 = vsub.s32 %v1133, %v1135
    %v1137 = vrot.slane %v1121, %v1136
    %v1139 = vunpack.c.l.s4 1966171168
    %v1140 = vunpack.c.0.s8 %v1139
    %v1141 = vlaneseq
    %v1142 = vshrl.u32 %v1141, 7
    %v1143 = vsub.s32 %v1140, %v1142
    %v1144 = vrot.slane %v1128, %v1143
    %v1146 = vunpack.c.l.s4 1966171168
    %v1147 = vunpack.c.0.s8 %v1146
    %v1148 = vlaneseq
    %v1149 = vshrl.u32 %v1148, 7
    %v1150 = vsub.s32 %v1147, %v1149
    %v1151 = vrot.slane %v1129, %v1150
    %v1153 = vunpack.c.l.s4 1966171168
    %v1154 = vunpack.c.0.s8 %v1153
    %v1155 = vlaneseq
    %v1156 = vshrl.u32 %v1155, 7
    %v1157 = vsub.s32 %v1154, %v1156
    %v1158 = vrot.slane %v1130, %v1157
    %v1159 = vcombine.high %v1137, %v1137
    %v1160 = vcombine.high %v1144, %v1144
    %v1161 = vcombine.high %v1151, %v1151
    %v1162 = vcombine.high %v1158, %v1158
    %v1163 = vcombine.high %v702, %v702
    %v1165 = vunpack.c.l.s4 1966171168
    %v1166 = vunpack.c.0.s8 %v1165
    %v1167 = vlaneseq
    %v1168 = vshrl.u32 %v1167, 7
    %v1169 = vsub.s32 %v1166, %v1168
    %v1170 = vrot.slane %v702, %v1169
    %v1172 = vunpack.c.l.s4 1966171168
    %v1173 = vunpack.c.0.s8 %v1172
    %v1174 = vlaneseq
    %v1175 = vshrl.u32 %v1174, 7
    %v1176 = vsub.s32 %v1173, %v1175
    %v1177 = vrot.slane %v1163, %v1176
    %v1178 = vcombine.high %v1170, %v1170
    %v1179 = vcombine.high %v1177, %v1177
    %v1181 = vunpack.c.l.s4 1966171168
    %v1182 = vunpack.c.0.s8 %v1181
    %v1183 = vlaneseq
    %v1184 = vshrl.u32 %v1183, 7
    %v1185 = vsub.s32 %v1182, %v1184
    %v1186 = vrot.slane %v1170, %v1185
    %v1188 = vunpack.c.l.s4 1966171168
    %v1189 = vunpack.c.0.s8 %v1188
    %v1190 = vlaneseq
    %v1191 = vshrl.u32 %v1190, 7
    %v1192 = vsub.s32 %v1189, %v1191
    %v1193 = vrot.slane %v1177, %v1192
    %v1195 = vunpack.c.l.s4 1966171168
    %v1196 = vunpack.c.0.s8 %v1195
    %v1197 = vlaneseq
    %v1198 = vshrl.u32 %v1197, 7
    %v1199 = vsub.s32 %v1196, %v1198
    %v1200 = vrot.slane %v1178, %v1199
    %v1202 = vunpack.c.l.s4 1966171168
    %v1203 = vunpack.c.0.s8 %v1202
    %v1204 = vlaneseq
    %v1205 = vshrl.u32 %v1204, 7
    %v1206 = vsub.s32 %v1203, %v1205
    %v1207 = vrot.slane %v1179, %v1206
    %v1208 = vcombine.high %v1186, %v1186
    %v1209 = vcombine.high %v1193, %v1193
    %v1210 = vcombine.high %v1200, %v1200
    %v1211 = vcombine.high %v1207, %v1207
    %1228 = vst [vmem:[#allocation2] sm:$0x1] %v1137
    %1229 = vst [vmem:[#allocation2 + $0x10] sm:$0x1] %v1151
    %1230 = vst [vmem:[#allocation2 + $0x20] sm:$0x1] %v1159
    %1231 = vst [vmem:[#allocation2 + $0x30] sm:$0x1] %v1161
    %1232 = vst [vmem:[#allocation2 + $0x40] sm:$0x1] %v1144
    %1233 = vst [vmem:[#allocation2 + $0x50] sm:$0x1] %v1158
    %1234 = vst [vmem:[#allocation2 + $0x60] sm:$0x1] %v1160
    %1235 = vst [vmem:[#allocation2 + $0x70] sm:$0x1] %v1162
    %1236 = vst [vmem:[#allocation2 + $0x80] sm:$0x1] %v1186
    %1237 = vst [vmem:[#allocation2 + $0x90] sm:$0x1] %v1200
    %1238 = vst [vmem:[#allocation2 + $0xa0] sm:$0x1] %v1208
    %1239 = vst [vmem:[#allocation2 + $0xb0] sm:$0x1] %v1210
    %1240 = vst [vmem:[#allocation2 + $0xc0] sm:$0x1] %v1193
    %1241 = vst [vmem:[#allocation2 + $0xd0] sm:$0x1] %v1207
    %1242 = vst [vmem:[#allocation2 + $0xe0] sm:$0x1] %v1209
    %1243 = vst [vmem:[#allocation2 + $0xf0] sm:$0x1] %v1211
    %v1246 = vcombine.high %v950, %v950
    %v1248 = vunpack.c.l.s4 1966171168
    %v1249 = vunpack.c.0.s8 %v1248
    %v1250 = vlaneseq
    %v1251 = vshrl.u32 %v1250, 7
    %v1252 = vsub.s32 %v1249, %v1251
    %v1253 = vrot.slane %v950, %v1252
    %v1255 = vunpack.c.l.s4 1966171168
    %v1256 = vunpack.c.0.s8 %v1255
    %v1257 = vlaneseq
    %v1258 = vshrl.u32 %v1257, 7
    %v1259 = vsub.s32 %v1256, %v1258
    %v1260 = vrot.slane %v1246, %v1259
    %v1261 = vcombine.high %v1253, %v1253
    %v1262 = vcombine.high %v1260, %v1260
    %v1264 = vunpack.c.l.s4 1966171168
    %v1265 = vunpack.c.0.s8 %v1264
    %v1266 = vlaneseq
    %v1267 = vshrl.u32 %v1266, 7
    %v1268 = vsub.s32 %v1265, %v1267
    %v1269 = vrot.slane %v1253, %v1268
    %v1271 = vunpack.c.l.s4 1966171168
    %v1272 = vunpack.c.0.s8 %v1271
    %v1273 = vlaneseq
    %v1274 = vshrl.u32 %v1273, 7
    %v1275 = vsub.s32 %v1272, %v1274
    %v1276 = vrot.slane %v1260, %v1275
    %v1278 = vunpack.c.l.s4 1966171168
    %v1279 = vunpack.c.0.s8 %v1278
    %v1280 = vlaneseq
    %v1281 = vshrl.u32 %v1280, 7
    %v1282 = vsub.s32 %v1279, %v1281
    %v1283 = vrot.slane %v1261, %v1282
    %v1285 = vunpack.c.l.s4 1966171168
    %v1286 = vunpack.c.0.s8 %v1285
    %v1287 = vlaneseq
    %v1288 = vshrl.u32 %v1287, 7
    %v1289 = vsub.s32 %v1286, %v1288
    %v1290 = vrot.slane %v1262, %v1289
    %v1291 = vcombine.high %v1269, %v1269
    %v1292 = vcombine.high %v1276, %v1276
    %v1293 = vcombine.high %v1283, %v1283
    %v1294 = vcombine.high %v1290, %v1290
    %v1295 = vcombine.high %v956, %v956
    %v1297 = vunpack.c.l.s4 1966171168
    %v1298 = vunpack.c.0.s8 %v1297
    %v1299 = vlaneseq
    %v1300 = vshrl.u32 %v1299, 7
    %v1301 = vsub.s32 %v1298, %v1300
    %v1302 = vrot.slane %v956, %v1301
    %v1304 = vunpack.c.l.s4 1966171168
    %v1305 = vunpack.c.0.s8 %v1304
    %v1306 = vlaneseq
    %v1307 = vshrl.u32 %v1306, 7
    %v1308 = vsub.s32 %v1305, %v1307
    %v1309 = vrot.slane %v1295, %v1308
    %v1310 = vcombine.high %v1302, %v1302
    %v1311 = vcombine.high %v1309, %v1309
    %v1313 = vunpack.c.l.s4 1966171168
    %v1314 = vunpack.c.0.s8 %v1313
    %v1315 = vlaneseq
    %v1316 = vshrl.u32 %v1315, 7
    %v1317 = vsub.s32 %v1314, %v1316
    %v1318 = vrot.slane %v1302, %v1317
    %v1320 = vunpack.c.l.s4 1966171168
    %v1321 = vunpack.c.0.s8 %v1320
    %v1322 = vlaneseq
    %v1323 = vshrl.u32 %v1322, 7
    %v1324 = vsub.s32 %v1321, %v1323
    %v1325 = vrot.slane %v1309, %v1324
    %v1327 = vunpack.c.l.s4 1966171168
    %v1328 = vunpack.c.0.s8 %v1327
    %v1329 = vlaneseq
    %v1330 = vshrl.u32 %v1329, 7
    %v1331 = vsub.s32 %v1328, %v1330
    %v1332 = vrot.slane %v1310, %v1331
    %v1334 = vunpack.c.l.s4 1966171168
    %v1335 = vunpack.c.0.s8 %v1334
    %v1336 = vlaneseq
    %v1337 = vshrl.u32 %v1336, 7
    %v1338 = vsub.s32 %v1335, %v1337
    %v1339 = vrot.slane %v1311, %v1338
    %v1340 = vcombine.high %v1318, %v1318
    %v1341 = vcombine.high %v1325, %v1325
    %v1342 = vcombine.high %v1332, %v1332
    %v1343 = vcombine.high %v1339, %v1339
    %1360 = vst [vmem:[#allocation2 + $0x5] sm:$0x1] %v1269
    %1361 = vst [vmem:[#allocation2 + $0x15] sm:$0x1] %v1283
    %1362 = vst [vmem:[#allocation2 + $0x25] sm:$0x1] %v1291
    %1363 = vst [vmem:[#allocation2 + $0x35] sm:$0x1] %v1293
    %1364 = vst [vmem:[#allocation2 + $0x45] sm:$0x1] %v1276
    %1365 = vst [vmem:[#allocation2 + $0x55] sm:$0x1] %v1290
    %1366 = vst [vmem:[#allocation2 + $0x65] sm:$0x1] %v1292
    %1367 = vst [vmem:[#allocation2 + $0x75] sm:$0x1] %v1294
    %1368 = vst [vmem:[#allocation2 + $0x85] sm:$0x1] %v1318
    %1369 = vst [vmem:[#allocation2 + $0x95] sm:$0x1] %v1332
    %1370 = vst [vmem:[#allocation2 + $0xa5] sm:$0x1] %v1340
    %1371 = vst [vmem:[#allocation2 + $0xb5] sm:$0x1] %v1342
    %1372 = vst [vmem:[#allocation2 + $0xc5] sm:$0x1] %v1325
    %1373 = vst [vmem:[#allocation2 + $0xd5] sm:$0x1] %v1339
    %1374 = vst [vmem:[#allocation2 + $0xe5] sm:$0x1] %v1341
    %1375 = vst [vmem:[#allocation2 + $0xf5] sm:$0x1] %v1343
    %v1378 = vcombine.high %v698, %v698
    %v1380 = vunpack.c.l.s4 1966171168
    %v1381 = vunpack.c.0.s8 %v1380
    %v1382 = vlaneseq
    %v1383 = vshrl.u32 %v1382, 7
    %v1384 = vsub.s32 %v1381, %v1383
    %v1385 = vrot.slane %v698, %v1384
    %v1387 = vunpack.c.l.s4 1966171168
    %v1388 = vunpack.c.0.s8 %v1387
    %v1389 = vlaneseq
    %v1390 = vshrl.u32 %v1389, 7
    %v1391 = vsub.s32 %v1388, %v1390
    %v1392 = vrot.slane %v1378, %v1391
    %v1393 = vcombine.high %v1385, %v1385
    %v1394 = vcombine.high %v1392, %v1392
    %v1396 = vunpack.c.l.s4 1966171168
    %v1397 = vunpack.c.0.s8 %v1396
    %v1398 = vlaneseq
    %v1399 = vshrl.u32 %v1398, 7
    %v1400 = vsub.s32 %v1397, %v1399
    %v1401 = vrot.slane %v1385, %v1400
    %v1403 = vunpack.c.l.s4 1966171168
    %v1404 = vunpack.c.0.s8 %v1403
    %v1405 = vlaneseq
    %v1406 = vshrl.u32 %v1405, 7
    %v1407 = vsub.s32 %v1404, %v1406
    %v1408 = vrot.slane %v1392, %v1407
    %v1410 = vunpack.c.l.s4 1966171168
    %v1411 = vunpack.c.0.s8 %v1410
    %v1412 = vlaneseq
    %v1413 = vshrl.u32 %v1412, 7
    %v1414 = vsub.s32 %v1411, %v1413
    %v1415 = vrot.slane %v1393, %v1414
    %v1417 = vunpack.c.l.s4 1966171168
    %v1418 = vunpack.c.0.s8 %v1417
    %v1419 = vlaneseq
    %v1420 = vshrl.u32 %v1419, 7
    %v1421 = vsub.s32 %v1418, %v1420
    %v1422 = vrot.slane %v1394, %v1421
    %v1423 = vcombine.high %v1401, %v1401
    %v1424 = vcombine.high %v1408, %v1408
    %v1425 = vcombine.high %v1415, %v1415
    %v1426 = vcombine.high %v1422, %v1422
    %v1427 = vcombine.high %v704, %v704
    %v1429 = vunpack.c.l.s4 1966171168
    %v1430 = vunpack.c.0.s8 %v1429
    %v1431 = vlaneseq
    %v1432 = vshrl.u32 %v1431, 7
    %v1433 = vsub.s32 %v1430, %v1432
    %v1434 = vrot.slane %v704, %v1433
    %v1436 = vunpack.c.l.s4 1966171168
    %v1437 = vunpack.c.0.s8 %v1436
    %v1438 = vlaneseq
    %v1439 = vshrl.u32 %v1438, 7
    %v1440 = vsub.s32 %v1437, %v1439
    %v1441 = vrot.slane %v1427, %v1440
    %v1442 = vcombine.high %v1434, %v1434
    %v1443 = vcombine.high %v1441, %v1441
    %v1445 = vunpack.c.l.s4 1966171168
    %v1446 = vunpack.c.0.s8 %v1445
    %v1447 = vlaneseq
    %v1448 = vshrl.u32 %v1447, 7
    %v1449 = vsub.s32 %v1446, %v1448
    %v1450 = vrot.slane %v1434, %v1449
    %v1452 = vunpack.c.l.s4 1966171168
    %v1453 = vunpack.c.0.s8 %v1452
    %v1454 = vlaneseq
    %v1455 = vshrl.u32 %v1454, 7
    %v1456 = vsub.s32 %v1453, %v1455
    %v1457 = vrot.slane %v1441, %v1456
    %v1459 = vunpack.c.l.s4 1966171168
    %v1460 = vunpack.c.0.s8 %v1459
    %v1461 = vlaneseq
    %v1462 = vshrl.u32 %v1461, 7
    %v1463 = vsub.s32 %v1460, %v1462
    %v1464 = vrot.slane %v1442, %v1463
    %v1466 = vunpack.c.l.s4 1966171168
    %v1467 = vunpack.c.0.s8 %v1466
    %v1468 = vlaneseq
    %v1469 = vshrl.u32 %v1468, 7
    %v1470 = vsub.s32 %v1467, %v1469
    %v1471 = vrot.slane %v1443, %v1470
    %v1472 = vcombine.high %v1450, %v1450
    %v1473 = vcombine.high %v1457, %v1457
    %v1474 = vcombine.high %v1464, %v1464
    %v1475 = vcombine.high %v1471, %v1471
    %1492 = vst [vmem:[#allocation2 + $0x1] sm:$0x1] %v1401
    %1493 = vst [vmem:[#allocation2 + $0x11] sm:$0x1] %v1415
    %1494 = vst [vmem:[#allocation2 + $0x21] sm:$0x1] %v1423
    %1495 = vst [vmem:[#allocation2 + $0x31] sm:$0x1] %v1425
    %1496 = vst [vmem:[#allocation2 + $0x41] sm:$0x1] %v1408
    %1497 = vst [vmem:[#allocation2 + $0x51] sm:$0x1] %v1422
    %1498 = vst [vmem:[#allocation2 + $0x61] sm:$0x1] %v1424
    %1499 = vst [vmem:[#allocation2 + $0x71] sm:$0x1] %v1426
    %1500 = vst [vmem:[#allocation2 + $0x81] sm:$0x1] %v1450
    %1501 = vst [vmem:[#allocation2 + $0x91] sm:$0x1] %v1464
    %1502 = vst [vmem:[#allocation2 + $0xa1] sm:$0x1] %v1472
    %1503 = vst [vmem:[#allocation2 + $0xb1] sm:$0x1] %v1474
    %1504 = vst [vmem:[#allocation2 + $0xc1] sm:$0x1] %v1457
    %1505 = vst [vmem:[#allocation2 + $0xd1] sm:$0x1] %v1471
    %1506 = vst [vmem:[#allocation2 + $0xe1] sm:$0x1] %v1473
    %1507 = vst [vmem:[#allocation2 + $0xf1] sm:$0x1] %v1475
    %v1510 = vcombine.high %v952, %v952
    %v1512 = vunpack.c.l.s4 1966171168
    %v1513 = vunpack.c.0.s8 %v1512
    %v1514 = vlaneseq
    %v1515 = vshrl.u32 %v1514, 7
    %v1516 = vsub.s32 %v1513, %v1515
    %v1517 = vrot.slane %v952, %v1516
    %v1519 = vunpack.c.l.s4 1966171168
    %v1520 = vunpack.c.0.s8 %v1519
    %v1521 = vlaneseq
    %v1522 = vshrl.u32 %v1521, 7
    %v1523 = vsub.s32 %v1520, %v1522
    %v1524 = vrot.slane %v1510, %v1523
    %v1525 = vcombine.high %v1517, %v1517
    %v1526 = vcombine.high %v1524, %v1524
    %v1528 = vunpack.c.l.s4 1966171168
    %v1529 = vunpack.c.0.s8 %v1528
    %v1530 = vlaneseq
    %v1531 = vshrl.u32 %v1530, 7
    %v1532 = vsub.s32 %v1529, %v1531
    %v1533 = vrot.slane %v1517, %v1532
    %v1535 = vunpack.c.l.s4 1966171168
    %v1536 = vunpack.c.0.s8 %v1535
    %v1537 = vlaneseq
    %v1538 = vshrl.u32 %v1537, 7
    %v1539 = vsub.s32 %v1536, %v1538
    %v1540 = vrot.slane %v1524, %v1539
    %v1542 = vunpack.c.l.s4 1966171168
    %v1543 = vunpack.c.0.s8 %v1542
    %v1544 = vlaneseq
    %v1545 = vshrl.u32 %v1544, 7
    %v1546 = vsub.s32 %v1543, %v1545
    %v1547 = vrot.slane %v1525, %v1546
    %v1549 = vunpack.c.l.s4 1966171168
    %v1550 = vunpack.c.0.s8 %v1549
    %v1551 = vlaneseq
    %v1552 = vshrl.u32 %v1551, 7
    %v1553 = vsub.s32 %v1550, %v1552
    %v1554 = vrot.slane %v1526, %v1553
    %v1555 = vcombine.high %v1533, %v1533
    %v1556 = vcombine.high %v1540, %v1540
    %v1557 = vcombine.high %v1547, %v1547
    %v1558 = vcombine.high %v1554, %v1554
    %v1559 = vcombine.high %v958, %v958
    %v1561 = vunpack.c.l.s4 1966171168
    %v1562 = vunpack.c.0.s8 %v1561
    %v1563 = vlaneseq
    %v1564 = vshrl.u32 %v1563, 7
    %v1565 = vsub.s32 %v1562, %v1564
    %v1566 = vrot.slane %v958, %v1565
    %v1568 = vunpack.c.l.s4 1966171168
    %v1569 = vunpack.c.0.s8 %v1568
    %v1570 = vlaneseq
    %v1571 = vshrl.u32 %v1570, 7
    %v1572 = vsub.s32 %v1569, %v1571
    %v1573 = vrot.slane %v1559, %v1572
    %v1574 = vcombine.high %v1566, %v1566
    %v1575 = vcombine.high %v1573, %v1573
    %v1577 = vunpack.c.l.s4 1966171168
    %v1578 = vunpack.c.0.s8 %v1577
    %v1579 = vlaneseq
    %v1580 = vshrl.u32 %v1579, 7
    %v1581 = vsub.s32 %v1578, %v1580
    %v1582 = vrot.slane %v1566, %v1581
    %v1584 = vunpack.c.l.s4 1966171168
    %v1585 = vunpack.c.0.s8 %v1584
    %v1586 = vlaneseq
    %v1587 = vshrl.u32 %v1586, 7
    %v1588 = vsub.s32 %v1585, %v1587
    %v1589 = vrot.slane %v1573, %v1588
    %v1591 = vunpack.c.l.s4 1966171168
    %v1592 = vunpack.c.0.s8 %v1591
    %v1593 = vlaneseq
    %v1594 = vshrl.u32 %v1593, 7
    %v1595 = vsub.s32 %v1592, %v1594
    %v1596 = vrot.slane %v1574, %v1595
    %v1598 = vunpack.c.l.s4 1966171168
    %v1599 = vunpack.c.0.s8 %v1598
    %v1600 = vlaneseq
    %v1601 = vshrl.u32 %v1600, 7
    %v1602 = vsub.s32 %v1599, %v1601
    %v1603 = vrot.slane %v1575, %v1602
    %v1604 = vcombine.high %v1582, %v1582
    %v1605 = vcombine.high %v1589, %v1589
    %v1606 = vcombine.high %v1596, %v1596
    %v1607 = vcombine.high %v1603, %v1603
    %1624 = vst [vmem:[#allocation2 + $0x6] sm:$0x1] %v1533
    %1625 = vst [vmem:[#allocation2 + $0x16] sm:$0x1] %v1547
    %1626 = vst [vmem:[#allocation2 + $0x26] sm:$0x1] %v1555
    %1627 = vst [vmem:[#allocation2 + $0x36] sm:$0x1] %v1557
    %1628 = vst [vmem:[#allocation2 + $0x46] sm:$0x1] %v1540
    %1629 = vst [vmem:[#allocation2 + $0x56] sm:$0x1] %v1554
    %1630 = vst [vmem:[#allocation2 + $0x66] sm:$0x1] %v1556
    %1631 = vst [vmem:[#allocation2 + $0x76] sm:$0x1] %v1558
    %1632 = vst [vmem:[#allocation2 + $0x86] sm:$0x1] %v1582
    %1633 = vst [vmem:[#allocation2 + $0x96] sm:$0x1] %v1596
    %1634 = vst [vmem:[#allocation2 + $0xa6] sm:$0x1] %v1604
    %1635 = vst [vmem:[#allocation2 + $0xb6] sm:$0x1] %v1606
    %1636 = vst [vmem:[#allocation2 + $0xc6] sm:$0x1] %v1589
    %1637 = vst [vmem:[#allocation2 + $0xd6] sm:$0x1] %v1603
    %1638 = vst [vmem:[#allocation2 + $0xe6] sm:$0x1] %v1605
    %1639 = vst [vmem:[#allocation2 + $0xf6] sm:$0x1] %v1607
    %v1642 = vcombine.high %v773, %v773
    %v1644 = vunpack.c.l.s4 1966171168
    %v1645 = vunpack.c.0.s8 %v1644
    %v1646 = vlaneseq
    %v1647 = vshrl.u32 %v1646, 7
    %v1648 = vsub.s32 %v1645, %v1647
    %v1649 = vrot.slane %v773, %v1648
    %v1651 = vunpack.c.l.s4 1966171168
    %v1652 = vunpack.c.0.s8 %v1651
    %v1653 = vlaneseq
    %v1654 = vshrl.u32 %v1653, 7
    %v1655 = vsub.s32 %v1652, %v1654
    %v1656 = vrot.slane %v1642, %v1655
    %v1657 = vcombine.high %v1649, %v1649
    %v1658 = vcombine.high %v1656, %v1656
    %v1660 = vunpack.c.l.s4 1966171168
    %v1661 = vunpack.c.0.s8 %v1660
    %v1662 = vlaneseq
    %v1663 = vshrl.u32 %v1662, 7
    %v1664 = vsub.s32 %v1661, %v1663
    %v1665 = vrot.slane %v1649, %v1664
    %v1667 = vunpack.c.l.s4 1966171168
    %v1668 = vunpack.c.0.s8 %v1667
    %v1669 = vlaneseq
    %v1670 = vshrl.u32 %v1669, 7
    %v1671 = vsub.s32 %v1668, %v1670
    %v1672 = vrot.slane %v1656, %v1671
    %v1674 = vunpack.c.l.s4 1966171168
    %v1675 = vunpack.c.0.s8 %v1674
    %v1676 = vlaneseq
    %v1677 = vshrl.u32 %v1676, 7
    %v1678 = vsub.s32 %v1675, %v1677
    %v1679 = vrot.slane %v1657, %v1678
    %v1681 = vunpack.c.l.s4 1966171168
    %v1682 = vunpack.c.0.s8 %v1681
    %v1683 = vlaneseq
    %v1684 = vshrl.u32 %v1683, 7
    %v1685 = vsub.s32 %v1682, %v1684
    %v1686 = vrot.slane %v1658, %v1685
    %v1687 = vcombine.high %v1665, %v1665
    %v1688 = vcombine.high %v1672, %v1672
    %v1689 = vcombine.high %v1679, %v1679
    %v1690 = vcombine.high %v1686, %v1686
    %v1691 = vcombine.high %v779, %v779
    %v1693 = vunpack.c.l.s4 1966171168
    %v1694 = vunpack.c.0.s8 %v1693
    %v1695 = vlaneseq
    %v1696 = vshrl.u32 %v1695, 7
    %v1697 = vsub.s32 %v1694, %v1696
    %v1698 = vrot.slane %v779, %v1697
    %v1700 = vunpack.c.l.s4 1966171168
    %v1701 = vunpack.c.0.s8 %v1700
    %v1702 = vlaneseq
    %v1703 = vshrl.u32 %v1702, 7
    %v1704 = vsub.s32 %v1701, %v1703
    %v1705 = vrot.slane %v1691, %v1704
    %v1706 = vcombine.high %v1698, %v1698
    %v1707 = vcombine.high %v1705, %v1705
    %v1709 = vunpack.c.l.s4 1966171168
    %v1710 = vunpack.c.0.s8 %v1709
    %v1711 = vlaneseq
    %v1712 = vshrl.u32 %v1711, 7
    %v1713 = vsub.s32 %v1710, %v1712
    %v1714 = vrot.slane %v1698, %v1713
    %v1716 = vunpack.c.l.s4 1966171168
    %v1717 = vunpack.c.0.s8 %v1716
    %v1718 = vlaneseq
    %v1719 = vshrl.u32 %v1718, 7
    %v1720 = vsub.s32 %v1717, %v1719
    %v1721 = vrot.slane %v1705, %v1720
    %v1723 = vunpack.c.l.s4 1966171168
    %v1724 = vunpack.c.0.s8 %v1723
    %v1725 = vlaneseq
    %v1726 = vshrl.u32 %v1725, 7
    %v1727 = vsub.s32 %v1724, %v1726
    %v1728 = vrot.slane %v1706, %v1727
    %v1730 = vunpack.c.l.s4 1966171168
    %v1731 = vunpack.c.0.s8 %v1730
    %v1732 = vlaneseq
    %v1733 = vshrl.u32 %v1732, 7
    %v1734 = vsub.s32 %v1731, %v1733
    %v1735 = vrot.slane %v1707, %v1734
    %v1736 = vcombine.high %v1714, %v1714
    %v1737 = vcombine.high %v1721, %v1721
    %v1738 = vcombine.high %v1728, %v1728
    %v1739 = vcombine.high %v1735, %v1735
    %1756 = vst [vmem:[#allocation2 + $0x2] sm:$0x1] %v1665
    %1757 = vst [vmem:[#allocation2 + $0x12] sm:$0x1] %v1679
    %1758 = vst [vmem:[#allocation2 + $0x22] sm:$0x1] %v1687
    %1759 = vst [vmem:[#allocation2 + $0x32] sm:$0x1] %v1689
    %1760 = vst [vmem:[#allocation2 + $0x42] sm:$0x1] %v1672
    %1761 = vst [vmem:[#allocation2 + $0x52] sm:$0x1] %v1686
    %1762 = vst [vmem:[#allocation2 + $0x62] sm:$0x1] %v1688
    %1763 = vst [vmem:[#allocation2 + $0x72] sm:$0x1] %v1690
    %1764 = vst [vmem:[#allocation2 + $0x82] sm:$0x1] %v1714
    %1765 = vst [vmem:[#allocation2 + $0x92] sm:$0x1] %v1728
    %1766 = vst [vmem:[#allocation2 + $0xa2] sm:$0x1] %v1736
    %1767 = vst [vmem:[#allocation2 + $0xb2] sm:$0x1] %v1738
    %1768 = vst [vmem:[#allocation2 + $0xc2] sm:$0x1] %v1721
    %1769 = vst [vmem:[#allocation2 + $0xd2] sm:$0x1] %v1735
    %1770 = vst [vmem:[#allocation2 + $0xe2] sm:$0x1] %v1737
    %1771 = vst [vmem:[#allocation2 + $0xf2] sm:$0x1] %v1739
    %v1774 = vcombine.high %v1027, %v1027
    %v1776 = vunpack.c.l.s4 1966171168
    %v1777 = vunpack.c.0.s8 %v1776
    %v1778 = vlaneseq
    %v1779 = vshrl.u32 %v1778, 7
    %v1780 = vsub.s32 %v1777, %v1779
    %v1781 = vrot.slane %v1027, %v1780
    %v1783 = vunpack.c.l.s4 1966171168
    %v1784 = vunpack.c.0.s8 %v1783
    %v1785 = vlaneseq
    %v1786 = vshrl.u32 %v1785, 7
    %v1787 = vsub.s32 %v1784, %v1786
    %v1788 = vrot.slane %v1774, %v1787
    %v1789 = vcombine.high %v1781, %v1781
    %v1790 = vcombine.high %v1788, %v1788
    %v1792 = vunpack.c.l.s4 1966171168
    %v1793 = vunpack.c.0.s8 %v1792
    %v1794 = vlaneseq
    %v1795 = vshrl.u32 %v1794, 7
    %v1796 = vsub.s32 %v1793, %v1795
    %v1797 = vrot.slane %v1781, %v1796
    %v1799 = vunpack.c.l.s4 1966171168
    %v1800 = vunpack.c.0.s8 %v1799
    %v1801 = vlaneseq
    %v1802 = vshrl.u32 %v1801, 7
    %v1803 = vsub.s32 %v1800, %v1802
    %v1804 = vrot.slane %v1788, %v1803
    %v1806 = vunpack.c.l.s4 1966171168
    %v1807 = vunpack.c.0.s8 %v1806
    %v1808 = vlaneseq
    %v1809 = vshrl.u32 %v1808, 7
    %v1810 = vsub.s32 %v1807, %v1809
    %v1811 = vrot.slane %v1789, %v1810
    %v1813 = vunpack.c.l.s4 1966171168
    %v1814 = vunpack.c.0.s8 %v1813
    %v1815 = vlaneseq
    %v1816 = vshrl.u32 %v1815, 7
    %v1817 = vsub.s32 %v1814, %v1816
    %v1818 = vrot.slane %v1790, %v1817
    %v1819 = vcombine.high %v1797, %v1797
    %v1820 = vcombine.high %v1804, %v1804
    %v1821 = vcombine.high %v1811, %v1811
    %v1822 = vcombine.high %v1818, %v1818
    %v1823 = vcombine.high %v1033, %v1033
    %v1825 = vunpack.c.l.s4 1966171168
    %v1826 = vunpack.c.0.s8 %v1825
    %v1827 = vlaneseq
    %v1828 = vshrl.u32 %v1827, 7
    %v1829 = vsub.s32 %v1826, %v1828
    %v1830 = vrot.slane %v1033, %v1829
    %v1832 = vunpack.c.l.s4 1966171168
    %v1833 = vunpack.c.0.s8 %v1832
    %v1834 = vlaneseq
    %v1835 = vshrl.u32 %v1834, 7
    %v1836 = vsub.s32 %v1833, %v1835
    %v1837 = vrot.slane %v1823, %v1836
    %v1838 = vcombine.high %v1830, %v1830
    %v1839 = vcombine.high %v1837, %v1837
    %v1841 = vunpack.c.l.s4 1966171168
    %v1842 = vunpack.c.0.s8 %v1841
    %v1843 = vlaneseq
    %v1844 = vshrl.u32 %v1843, 7
    %v1845 = vsub.s32 %v1842, %v1844
    %v1846 = vrot.slane %v1830, %v1845
    %v1848 = vunpack.c.l.s4 1966171168
    %v1849 = vunpack.c.0.s8 %v1848
    %v1850 = vlaneseq
    %v1851 = vshrl.u32 %v1850, 7
    %v1852 = vsub.s32 %v1849, %v1851
    %v1853 = vrot.slane %v1837, %v1852
    %v1855 = vunpack.c.l.s4 1966171168
    %v1856 = vunpack.c.0.s8 %v1855
    %v1857 = vlaneseq
    %v1858 = vshrl.u32 %v1857, 7
    %v1859 = vsub.s32 %v1856, %v1858
    %v1860 = vrot.slane %v1838, %v1859
    %v1862 = vunpack.c.l.s4 1966171168
    %v1863 = vunpack.c.0.s8 %v1862
    %v1864 = vlaneseq
    %v1865 = vshrl.u32 %v1864, 7
    %v1866 = vsub.s32 %v1863, %v1865
    %v1867 = vrot.slane %v1839, %v1866
    %v1868 = vcombine.high %v1846, %v1846
    %v1869 = vcombine.high %v1853, %v1853
    %v1870 = vcombine.high %v1860, %v1860
    %v1871 = vcombine.high %v1867, %v1867
    %1888 = vst [vmem:[#allocation2 + $0x7] sm:$0x1] %v1797
    %1889 = vst [vmem:[#allocation2 + $0x17] sm:$0x1] %v1811
    %1890 = vst [vmem:[#allocation2 + $0x27] sm:$0x1] %v1819
    %1891 = vst [vmem:[#allocation2 + $0x37] sm:$0x1] %v1821
    %1892 = vst [vmem:[#allocation2 + $0x47] sm:$0x1] %v1804
    %1893 = vst [vmem:[#allocation2 + $0x57] sm:$0x1] %v1818
    %1894 = vst [vmem:[#allocation2 + $0x67] sm:$0x1] %v1820
    %1895 = vst [vmem:[#allocation2 + $0x77] sm:$0x1] %v1822
    %1896 = vst [vmem:[#allocation2 + $0x87] sm:$0x1] %v1846
    %1897 = vst [vmem:[#allocation2 + $0x97] sm:$0x1] %v1860
    %1898 = vst [vmem:[#allocation2 + $0xa7] sm:$0x1] %v1868
    %1899 = vst [vmem:[#allocation2 + $0xb7] sm:$0x1] %v1870
    %1900 = vst [vmem:[#allocation2 + $0xc7] sm:$0x1] %v1853
    %1901 = vst [vmem:[#allocation2 + $0xd7] sm:$0x1] %v1867
    %1902 = vst [vmem:[#allocation2 + $0xe7] sm:$0x1] %v1869
    %1903 = vst [vmem:[#allocation2 + $0xf7] sm:$0x1] %v1871
    %v1906 = vcombine.high %v775, %v775
    %v1908 = vunpack.c.l.s4 1966171168
    %v1909 = vunpack.c.0.s8 %v1908
    %v1910 = vlaneseq
    %v1911 = vshrl.u32 %v1910, 7
    %v1912 = vsub.s32 %v1909, %v1911
    %v1913 = vrot.slane %v775, %v1912
    %v1915 = vunpack.c.l.s4 1966171168
    %v1916 = vunpack.c.0.s8 %v1915
    %v1917 = vlaneseq
    %v1918 = vshrl.u32 %v1917, 7
    %v1919 = vsub.s32 %v1916, %v1918
    %v1920 = vrot.slane %v1906, %v1919
    %v1921 = vcombine.high %v1913, %v1913
    %v1922 = vcombine.high %v1920, %v1920
    %v1924 = vunpack.c.l.s4 1966171168
    %v1925 = vunpack.c.0.s8 %v1924
    %v1926 = vlaneseq
    %v1927 = vshrl.u32 %v1926, 7
    %v1928 = vsub.s32 %v1925, %v1927
    %v1929 = vrot.slane %v1913, %v1928
    %v1931 = vunpack.c.l.s4 1966171168
    %v1932 = vunpack.c.0.s8 %v1931
    %v1933 = vlaneseq
    %v1934 = vshrl.u32 %v1933, 7
    %v1935 = vsub.s32 %v1932, %v1934
    %v1936 = vrot.slane %v1920, %v1935
    %v1938 = vunpack.c.l.s4 1966171168
    %v1939 = vunpack.c.0.s8 %v1938
    %v1940 = vlaneseq
    %v1941 = vshrl.u32 %v1940, 7
    %v1942 = vsub.s32 %v1939, %v1941
    %v1943 = vrot.slane %v1921, %v1942
    %v1945 = vunpack.c.l.s4 1966171168
    %v1946 = vunpack.c.0.s8 %v1945
    %v1947 = vlaneseq
    %v1948 = vshrl.u32 %v1947, 7
    %v1949 = vsub.s32 %v1946, %v1948
    %v1950 = vrot.slane %v1922, %v1949
    %v1951 = vcombine.high %v1929, %v1929
    %v1952 = vcombine.high %v1936, %v1936
    %v1953 = vcombine.high %v1943, %v1943
    %v1954 = vcombine.high %v1950, %v1950
    %v1955 = vcombine.high %v781, %v781
    %v1957 = vunpack.c.l.s4 1966171168
    %v1958 = vunpack.c.0.s8 %v1957
    %v1959 = vlaneseq
    %v1960 = vshrl.u32 %v1959, 7
    %v1961 = vsub.s32 %v1958, %v1960
    %v1962 = vrot.slane %v781, %v1961
    %v1964 = vunpack.c.l.s4 1966171168
    %v1965 = vunpack.c.0.s8 %v1964
    %v1966 = vlaneseq
    %v1967 = vshrl.u32 %v1966, 7
    %v1968 = vsub.s32 %v1965, %v1967
    %v1969 = vrot.slane %v1955, %v1968
    %v1970 = vcombine.high %v1962, %v1962
    %v1971 = vcombine.high %v1969, %v1969
    %v1973 = vunpack.c.l.s4 1966171168
    %v1974 = vunpack.c.0.s8 %v1973
    %v1975 = vlaneseq
    %v1976 = vshrl.u32 %v1975, 7
    %v1977 = vsub.s32 %v1974, %v1976
    %v1978 = vrot.slane %v1962, %v1977
    %v1980 = vunpack.c.l.s4 1966171168
    %v1981 = vunpack.c.0.s8 %v1980
    %v1982 = vlaneseq
    %v1983 = vshrl.u32 %v1982, 7
    %v1984 = vsub.s32 %v1981, %v1983
    %v1985 = vrot.slane %v1969, %v1984
    %v1987 = vunpack.c.l.s4 1966171168
    %v1988 = vunpack.c.0.s8 %v1987
    %v1989 = vlaneseq
    %v1990 = vshrl.u32 %v1989, 7
    %v1991 = vsub.s32 %v1988, %v1990
    %v1992 = vrot.slane %v1970, %v1991
    %v1994 = vunpack.c.l.s4 1966171168
    %v1995 = vunpack.c.0.s8 %v1994
    %v1996 = vlaneseq
    %v1997 = vshrl.u32 %v1996, 7
    %v1998 = vsub.s32 %v1995, %v1997
    %v1999 = vrot.slane %v1971, %v1998
    %v2000 = vcombine.high %v1978, %v1978
    %v2001 = vcombine.high %v1985, %v1985
    %v2002 = vcombine.high %v1992, %v1992
    %v2003 = vcombine.high %v1999, %v1999
    %2020 = vst [vmem:[#allocation2 + $0x3] sm:$0x1] %v1929
    %2021 = vst [vmem:[#allocation2 + $0x13] sm:$0x1] %v1943
    %2022 = vst [vmem:[#allocation2 + $0x23] sm:$0x1] %v1951
    %2023 = vst [vmem:[#allocation2 + $0x33] sm:$0x1] %v1953
    %2024 = vst [vmem:[#allocation2 + $0x43] sm:$0x1] %v1936
    %2025 = vst [vmem:[#allocation2 + $0x53] sm:$0x1] %v1950
    %2026 = vst [vmem:[#allocation2 + $0x63] sm:$0x1] %v1952
    %2027 = vst [vmem:[#allocation2 + $0x73] sm:$0x1] %v1954
    %2028 = vst [vmem:[#allocation2 + $0x83] sm:$0x1] %v1978
    %2029 = vst [vmem:[#allocation2 + $0x93] sm:$0x1] %v1992
    %2030 = vst [vmem:[#allocation2 + $0xa3] sm:$0x1] %v2000
    %2031 = vst [vmem:[#allocation2 + $0xb3] sm:$0x1] %v2002
    %2032 = vst [vmem:[#allocation2 + $0xc3] sm:$0x1] %v1985
    %2033 = vst [vmem:[#allocation2 + $0xd3] sm:$0x1] %v1999
    %2034 = vst [vmem:[#allocation2 + $0xe3] sm:$0x1] %v2001
    %2035 = vst [vmem:[#allocation2 + $0xf3] sm:$0x1] %v2003
    %v2038 = vcombine.high %v1029, %v1029
    %v2040 = vunpack.c.l.s4 1966171168
    %v2041 = vunpack.c.0.s8 %v2040
    %v2042 = vlaneseq
    %v2043 = vshrl.u32 %v2042, 7
    %v2044 = vsub.s32 %v2041, %v2043
    %v2045 = vrot.slane %v1029, %v2044
    %v2047 = vunpack.c.l.s4 1966171168
    %v2048 = vunpack.c.0.s8 %v2047
    %v2049 = vlaneseq
    %v2050 = vshrl.u32 %v2049, 7
    %v2051 = vsub.s32 %v2048, %v2050
    %v2052 = vrot.slane %v2038, %v2051
    %v2053 = vcombine.high %v2045, %v2045
    %v2054 = vcombine.high %v2052, %v2052
    %v2056 = vunpack.c.l.s4 1966171168
    %v2057 = vunpack.c.0.s8 %v2056
    %v2058 = vlaneseq
    %v2059 = vshrl.u32 %v2058, 7
    %v2060 = vsub.s32 %v2057, %v2059
    %v2061 = vrot.slane %v2045, %v2060
    %v2063 = vunpack.c.l.s4 1966171168
    %v2064 = vunpack.c.0.s8 %v2063
    %v2065 = vlaneseq
    %v2066 = vshrl.u32 %v2065, 7
    %v2067 = vsub.s32 %v2064, %v2066
    %v2068 = vrot.slane %v2052, %v2067
    %v2070 = vunpack.c.l.s4 1966171168
    %v2071 = vunpack.c.0.s8 %v2070
    %v2072 = vlaneseq
    %v2073 = vshrl.u32 %v2072, 7
    %v2074 = vsub.s32 %v2071, %v2073
    %v2075 = vrot.slane %v2053, %v2074
    %v2077 = vunpack.c.l.s4 1966171168
    %v2078 = vunpack.c.0.s8 %v2077
    %v2079 = vlaneseq
    %v2080 = vshrl.u32 %v2079, 7
    %v2081 = vsub.s32 %v2078, %v2080
    %v2082 = vrot.slane %v2054, %v2081
    %v2083 = vcombine.high %v2061, %v2061
    %v2084 = vcombine.high %v2068, %v2068
    %v2085 = vcombine.high %v2075, %v2075
    %v2086 = vcombine.high %v2082, %v2082
    %v2087 = vcombine.high %v1035, %v1035
    %v2089 = vunpack.c.l.s4 1966171168
    %v2090 = vunpack.c.0.s8 %v2089
    %v2091 = vlaneseq
    %v2092 = vshrl.u32 %v2091, 7
    %v2093 = vsub.s32 %v2090, %v2092
    %v2094 = vrot.slane %v1035, %v2093
    %v2096 = vunpack.c.l.s4 1966171168
    %v2097 = vunpack.c.0.s8 %v2096
    %v2098 = vlaneseq
    %v2099 = vshrl.u32 %v2098, 7
    %v2100 = vsub.s32 %v2097, %v2099
    %v2101 = vrot.slane %v2087, %v2100
    %v2102 = vcombine.high %v2094, %v2094
    %v2103 = vcombine.high %v2101, %v2101
    %v2105 = vunpack.c.l.s4 1966171168
    %v2106 = vunpack.c.0.s8 %v2105
    %v2107 = vlaneseq
    %v2108 = vshrl.u32 %v2107, 7
    %v2109 = vsub.s32 %v2106, %v2108
    %v2110 = vrot.slane %v2094, %v2109
    %v2112 = vunpack.c.l.s4 1966171168
    %v2113 = vunpack.c.0.s8 %v2112
    %v2114 = vlaneseq
    %v2115 = vshrl.u32 %v2114, 7
    %v2116 = vsub.s32 %v2113, %v2115
    %v2117 = vrot.slane %v2101, %v2116
    %v2119 = vunpack.c.l.s4 1966171168
    %v2120 = vunpack.c.0.s8 %v2119
    %v2121 = vlaneseq
    %v2122 = vshrl.u32 %v2121, 7
    %v2123 = vsub.s32 %v2120, %v2122
    %v2124 = vrot.slane %v2102, %v2123
    %v2126 = vunpack.c.l.s4 1966171168
    %v2127 = vunpack.c.0.s8 %v2126
    %v2128 = vlaneseq
    %v2129 = vshrl.u32 %v2128, 7
    %v2130 = vsub.s32 %v2127, %v2129
    %v2131 = vrot.slane %v2103, %v2130
    %v2132 = vcombine.high %v2110, %v2110
    %v2133 = vcombine.high %v2117, %v2117
    %v2134 = vcombine.high %v2124, %v2124
    %v2135 = vcombine.high %v2131, %v2131
    %2152 = vst [vmem:[#allocation2 + $0x8] sm:$0x1] %v2061
    %2153 = vst [vmem:[#allocation2 + $0x18] sm:$0x1] %v2075
    %2154 = vst [vmem:[#allocation2 + $0x28] sm:$0x1] %v2083
    %2155 = vst [vmem:[#allocation2 + $0x38] sm:$0x1] %v2085
    %2156 = vst [vmem:[#allocation2 + $0x48] sm:$0x1] %v2068
    %2157 = vst [vmem:[#allocation2 + $0x58] sm:$0x1] %v2082
    %2158 = vst [vmem:[#allocation2 + $0x68] sm:$0x1] %v2084
    %2159 = vst [vmem:[#allocation2 + $0x78] sm:$0x1] %v2086
    %2160 = vst [vmem:[#allocation2 + $0x88] sm:$0x1] %v2110
    %2161 = vst [vmem:[#allocation2 + $0x98] sm:$0x1] %v2124
    %2162 = vst [vmem:[#allocation2 + $0xa8] sm:$0x1] %v2132
    %2163 = vst [vmem:[#allocation2 + $0xb8] sm:$0x1] %v2134
    %2164 = vst [vmem:[#allocation2 + $0xc8] sm:$0x1] %v2117
    %2165 = vst [vmem:[#allocation2 + $0xd8] sm:$0x1] %v2131
    %2166 = vst [vmem:[#allocation2 + $0xe8] sm:$0x1] %v2133
    %2167 = vst [vmem:[#allocation2 + $0xf8] sm:$0x1] %v2135
    %v2170 = vcombine.high %v850, %v850
    %v2172 = vunpack.c.l.s4 1966171168
    %v2173 = vunpack.c.0.s8 %v2172
    %v2174 = vlaneseq
    %v2175 = vshrl.u32 %v2174, 7
    %v2176 = vsub.s32 %v2173, %v2175
    %v2177 = vrot.slane %v850, %v2176
    %v2179 = vunpack.c.l.s4 1966171168
    %v2180 = vunpack.c.0.s8 %v2179
    %v2181 = vlaneseq
    %v2182 = vshrl.u32 %v2181, 7
    %v2183 = vsub.s32 %v2180, %v2182
    %v2184 = vrot.slane %v2170, %v2183
    %v2185 = vcombine.high %v2177, %v2177
    %v2186 = vcombine.high %v2184, %v2184
    %v2188 = vunpack.c.l.s4 1966171168
    %v2189 = vunpack.c.0.s8 %v2188
    %v2190 = vlaneseq
    %v2191 = vshrl.u32 %v2190, 7
    %v2192 = vsub.s32 %v2189, %v2191
    %v2193 = vrot.slane %v2177, %v2192
    %v2195 = vunpack.c.l.s4 1966171168
    %v2196 = vunpack.c.0.s8 %v2195
    %v2197 = vlaneseq
    %v2198 = vshrl.u32 %v2197, 7
    %v2199 = vsub.s32 %v2196, %v2198
    %v2200 = vrot.slane %v2184, %v2199
    %v2202 = vunpack.c.l.s4 1966171168
    %v2203 = vunpack.c.0.s8 %v2202
    %v2204 = vlaneseq
    %v2205 = vshrl.u32 %v2204, 7
    %v2206 = vsub.s32 %v2203, %v2205
    %v2207 = vrot.slane %v2185, %v2206
    %v2209 = vunpack.c.l.s4 1966171168
    %v2210 = vunpack.c.0.s8 %v2209
    %v2211 = vlaneseq
    %v2212 = vshrl.u32 %v2211, 7
    %v2213 = vsub.s32 %v2210, %v2212
    %v2214 = vrot.slane %v2186, %v2213
    %v2215 = vcombine.high %v2193, %v2193
    %v2216 = vcombine.high %v2200, %v2200
    %v2217 = vcombine.high %v2207, %v2207
    %v2218 = vcombine.high %v2214, %v2214
    %v2219 = vcombine.high %v855, %v855
    %v2221 = vunpack.c.l.s4 1966171168
    %v2222 = vunpack.c.0.s8 %v2221
    %v2223 = vlaneseq
    %v2224 = vshrl.u32 %v2223, 7
    %v2225 = vsub.s32 %v2222, %v2224
    %v2226 = vrot.slane %v855, %v2225
    %v2228 = vunpack.c.l.s4 1966171168
    %v2229 = vunpack.c.0.s8 %v2228
    %v2230 = vlaneseq
    %v2231 = vshrl.u32 %v2230, 7
    %v2232 = vsub.s32 %v2229, %v2231
    %v2233 = vrot.slane %v2219, %v2232
    %v2234 = vcombine.high %v2226, %v2226
    %v2235 = vcombine.high %v2233, %v2233
    %v2237 = vunpack.c.l.s4 1966171168
    %v2238 = vunpack.c.0.s8 %v2237
    %v2239 = vlaneseq
    %v2240 = vshrl.u32 %v2239, 7
    %v2241 = vsub.s32 %v2238, %v2240
    %v2242 = vrot.slane %v2226, %v2241
    %v2244 = vunpack.c.l.s4 1966171168
    %v2245 = vunpack.c.0.s8 %v2244
    %v2246 = vlaneseq
    %v2247 = vshrl.u32 %v2246, 7
    %v2248 = vsub.s32 %v2245, %v2247
    %v2249 = vrot.slane %v2233, %v2248
    %v2251 = vunpack.c.l.s4 1966171168
    %v2252 = vunpack.c.0.s8 %v2251
    %v2253 = vlaneseq
    %v2254 = vshrl.u32 %v2253, 7
    %v2255 = vsub.s32 %v2252, %v2254
    %v2256 = vrot.slane %v2234, %v2255
    %v2258 = vunpack.c.l.s4 1966171168
    %v2259 = vunpack.c.0.s8 %v2258
    %v2260 = vlaneseq
    %v2261 = vshrl.u32 %v2260, 7
    %v2262 = vsub.s32 %v2259, %v2261
    %v2263 = vrot.slane %v2235, %v2262
    %v2264 = vcombine.high %v2242, %v2242
    %v2265 = vcombine.high %v2249, %v2249
    %v2266 = vcombine.high %v2256, %v2256
    %v2267 = vcombine.high %v2263, %v2263
    %2284 = vst [vmem:[#allocation2 + $0x4] sm:$0x1] %v2193
    %2285 = vst [vmem:[#allocation2 + $0x14] sm:$0x1] %v2207
    %2286 = vst [vmem:[#allocation2 + $0x24] sm:$0x1] %v2215
    %2287 = vst [vmem:[#allocation2 + $0x34] sm:$0x1] %v2217
    %2288 = vst [vmem:[#allocation2 + $0x44] sm:$0x1] %v2200
    %2289 = vst [vmem:[#allocation2 + $0x54] sm:$0x1] %v2214
    %2290 = vst [vmem:[#allocation2 + $0x64] sm:$0x1] %v2216
    %2291 = vst [vmem:[#allocation2 + $0x74] sm:$0x1] %v2218
    %2292 = vst [vmem:[#allocation2 + $0x84] sm:$0x1] %v2242
    %2293 = vst [vmem:[#allocation2 + $0x94] sm:$0x1] %v2256
    %2294 = vst [vmem:[#allocation2 + $0xa4] sm:$0x1] %v2264
    %2295 = vst [vmem:[#allocation2 + $0xb4] sm:$0x1] %v2266
    %2296 = vst [vmem:[#allocation2 + $0xc4] sm:$0x1] %v2249
    %2297 = vst [vmem:[#allocation2 + $0xd4] sm:$0x1] %v2263
    %2298 = vst [vmem:[#allocation2 + $0xe4] sm:$0x1] %v2265
    %2299 = vst [vmem:[#allocation2 + $0xf4] sm:$0x1] %v2267
    %v2302 = vcombine.high %v1104, %v1104
    %v2304 = vunpack.c.l.s4 1966171168
    %v2305 = vunpack.c.0.s8 %v2304
    %v2306 = vlaneseq
    %v2307 = vshrl.u32 %v2306, 7
    %v2308 = vsub.s32 %v2305, %v2307
    %v2309 = vrot.slane %v1104, %v2308
    %v2311 = vunpack.c.l.s4 1966171168
    %v2312 = vunpack.c.0.s8 %v2311
    %v2313 = vlaneseq
    %v2314 = vshrl.u32 %v2313, 7
    %v2315 = vsub.s32 %v2312, %v2314
    %v2316 = vrot.slane %v2302, %v2315
    %v2317 = vcombine.high %v2309, %v2309
    %v2318 = vcombine.high %v2316, %v2316
    %v2320 = vunpack.c.l.s4 1966171168
    %v2321 = vunpack.c.0.s8 %v2320
    %v2322 = vlaneseq
    %v2323 = vshrl.u32 %v2322, 7
    %v2324 = vsub.s32 %v2321, %v2323
    %v2325 = vrot.slane %v2309, %v2324
    %v2327 = vunpack.c.l.s4 1966171168
    %v2328 = vunpack.c.0.s8 %v2327
    %v2329 = vlaneseq
    %v2330 = vshrl.u32 %v2329, 7
    %v2331 = vsub.s32 %v2328, %v2330
    %v2332 = vrot.slane %v2316, %v2331
    %v2334 = vunpack.c.l.s4 1966171168
    %v2335 = vunpack.c.0.s8 %v2334
    %v2336 = vlaneseq
    %v2337 = vshrl.u32 %v2336, 7
    %v2338 = vsub.s32 %v2335, %v2337
    %v2339 = vrot.slane %v2317, %v2338
    %v2341 = vunpack.c.l.s4 1966171168
    %v2342 = vunpack.c.0.s8 %v2341
    %v2343 = vlaneseq
    %v2344 = vshrl.u32 %v2343, 7
    %v2345 = vsub.s32 %v2342, %v2344
    %v2346 = vrot.slane %v2318, %v2345
    %v2347 = vcombine.high %v2325, %v2325
    %v2348 = vcombine.high %v2332, %v2332
    %v2349 = vcombine.high %v2339, %v2339
    %v2350 = vcombine.high %v2346, %v2346
    %v2351 = vcombine.high %v1109, %v1109
    %v2353 = vunpack.c.l.s4 1966171168
    %v2354 = vunpack.c.0.s8 %v2353
    %v2355 = vlaneseq
    %v2356 = vshrl.u32 %v2355, 7
    %v2357 = vsub.s32 %v2354, %v2356
    %v2358 = vrot.slane %v1109, %v2357
    %v2360 = vunpack.c.l.s4 1966171168
    %v2361 = vunpack.c.0.s8 %v2360
    %v2362 = vlaneseq
    %v2363 = vshrl.u32 %v2362, 7
    %v2364 = vsub.s32 %v2361, %v2363
    %v2365 = vrot.slane %v2351, %v2364
    %v2366 = vcombine.high %v2358, %v2358
    %v2367 = vcombine.high %v2365, %v2365
    %v2369 = vunpack.c.l.s4 1966171168
    %v2370 = vunpack.c.0.s8 %v2369
    %v2371 = vlaneseq
    %v2372 = vshrl.u32 %v2371, 7
    %v2373 = vsub.s32 %v2370, %v2372
    %v2374 = vrot.slane %v2358, %v2373
    %v2376 = vunpack.c.l.s4 1966171168
    %v2377 = vunpack.c.0.s8 %v2376
    %v2378 = vlaneseq
    %v2379 = vshrl.u32 %v2378, 7
    %v2380 = vsub.s32 %v2377, %v2379
    %v2381 = vrot.slane %v2365, %v2380
    %v2383 = vunpack.c.l.s4 1966171168
    %v2384 = vunpack.c.0.s8 %v2383
    %v2385 = vlaneseq
    %v2386 = vshrl.u32 %v2385, 7
    %v2387 = vsub.s32 %v2384, %v2386
    %v2388 = vrot.slane %v2366, %v2387
    %v2390 = vunpack.c.l.s4 1966171168
    %v2391 = vunpack.c.0.s8 %v2390
    %v2392 = vlaneseq
    %v2393 = vshrl.u32 %v2392, 7
    %v2394 = vsub.s32 %v2391, %v2393
    %v2395 = vrot.slane %v2367, %v2394
    %v2396 = vcombine.high %v2374, %v2374
    %v2397 = vcombine.high %v2381, %v2381
    %v2398 = vcombine.high %v2388, %v2388
    %v2399 = vcombine.high %v2395, %v2395
    %2416 = vst [vmem:[#allocation2 + $0x9] sm:$0x1] %v2325
    %2417 = vst [vmem:[#allocation2 + $0x19] sm:$0x1] %v2339
    %2418 = vst [vmem:[#allocation2 + $0x29] sm:$0x1] %v2347
    %2419 = vst [vmem:[#allocation2 + $0x39] sm:$0x1] %v2349
    %2420 = vst [vmem:[#allocation2 + $0x49] sm:$0x1] %v2332
    %2421 = vst [vmem:[#allocation2 + $0x59] sm:$0x1] %v2346
    %2422 = vst [vmem:[#allocation2 + $0x69] sm:$0x1] %v2348
    %2423 = vst [vmem:[#allocation2 + $0x79] sm:$0x1] %v2350
    %2424 = vst [vmem:[#allocation2 + $0x89] sm:$0x1] %v2374
    %2425 = vst [vmem:[#allocation2 + $0x99] sm:$0x1] %v2388
    %2426 = vst [vmem:[#allocation2 + $0xa9] sm:$0x1] %v2396
    %2427 = vst [vmem:[#allocation2 + $0xb9] sm:$0x1] %v2398
    %2428 = vst [vmem:[#allocation2 + $0xc9] sm:$0x1] %v2381
    %2429 = vst [vmem:[#allocation2 + $0xd9] sm:$0x1] %v2395
    %2430 = vst [vmem:[#allocation2 + $0xe9] sm:$0x1] %v2397
    %2431 = vst [vmem:[#allocation2 + $0xf9] sm:$0x1] %v2399
    %p2433 = scmp.lt.u32.totalorder 10, 8
    %p2434 = pneg %p2433
    // Predicated region
    $region22: #{rq_prompt_forward.3} parent=1 // pred_check
      _
    $region23: #{rq_prompt_forward.3} parent=1 // pred_check_branch
      %2436 = sbr.rel (%p2433) target = $region25
    $region24: #{rq_prompt_forward.3} parent=1 // pred_region
      %s2482 = sand.u32 10, 7
      %p2483 = scmp.eq.s32.totalorder %s2482, 0
      %p2484 = pneg %p2483
      // Predicated region
      $region37: #{rq_prompt_forward.3} parent=24 // pred_check
        _
      $region38: #{rq_prompt_forward.3} parent=24 // pred_check_branch
        %2486 = sbr.rel (%p2483) target = $region40
      $region39: #{rq_prompt_forward.3} parent=24 // pred_region
        %s2487 = sand.u32 10, 7
        %s2488 = ssub.s32 10, %s2487
        %s2489 = scalar_lea.vmem [#allocation2], %s2488
        %s2490 = ssub.s32 10, %s2487
        %s2491 = scalar_lea.vmem %s6, %s2490
        loop: start=0, step=1, limit=1
        $region41: #{rq_prompt_forward.3} parent=39 // loop_pre_header
          _
        $region42: #{rq_prompt_forward.3} parent=39 // loop_header
          %s2493 = sphi 0, %s2497
          %p2494 = scmp.ge.s32.totalorder %s2493, 1
          %s2498 = sphi [#allocation2], [#allocation2]
          %s2499 = sphi %s6, %s6
        $region43: #{rq_prompt_forward.3} parent=39 // loop_header_branch
          %2496 = sbr.rel (%p2494) target = $region47
        $region44: #{rq_prompt_forward.3} parent=39 // loop_body
          %v2500 = vld [vmem:[%s2498] sm:$0xff]
          %2501 = vst [vmem:[%s2499] sm:$0xff] %v2500
          %v2502 = vld [vmem:[%s2498 + $0x10] sm:$0xff]
          %2503 = vst [vmem:[%s2499 + $0x30] sm:$0xff] %v2502
          %v2504 = vld [vmem:[%s2498 + $0x20] sm:$0xff]
          %2505 = vst [vmem:[%s2499 + $0x60] sm:$0xff] %v2504
          %v2506 = vld [vmem:[%s2498 + $0x30] sm:$0xff]
          %2507 = vst [vmem:[%s2499 + $0x90] sm:$0xff] %v2506
          %v2508 = vld [vmem:[%s2498 + $0x40] sm:$0xff]
          %2509 = vst [vmem:[%s2499 + $0xc0] sm:$0xff] %v2508
          %v2510 = vld [vmem:[%s2498 + $0x50] sm:$0xff]
          %2511 = vst [vmem:[%s2499 + $0xf0] sm:$0xff] %v2510
          %v2512 = vld [vmem:[%s2498 + $0x60] sm:$0xff]
          %2513 = vst [vmem:[%s2499 + $0x120] sm:$0xff] %v2512
          %v2514 = vld [vmem:[%s2498 + $0x70] sm:$0xff]
          %2515 = vst [vmem:[%s2499 + $0x150] sm:$0xff] %v2514
          %v2516 = vld [vmem:[%s2498 + $0x80] sm:$0xff]
          %2517 = vst [vmem:[%s2499 + $0x180] sm:$0xff] %v2516
          %v2518 = vld [vmem:[%s2498 + $0x90] sm:$0xff]
          %2519 = vst [vmem:[%s2499 + $0x1b0] sm:$0xff] %v2518
          %v2520 = vld [vmem:[%s2498 + $0xa0] sm:$0xff]
          %2521 = vst [vmem:[%s2499 + $0x1e0] sm:$0xff] %v2520
          %v2522 = vld [vmem:[%s2498 + $0xb0] sm:$0xff]
          %2523 = vst [vmem:[%s2499 + $0x210] sm:$0xff] %v2522
          %v2524 = vld [vmem:[%s2498 + $0xc0] sm:$0xff]
          %2525 = vst [vmem:[%s2499 + $0x240] sm:$0xff] %v2524
          %v2526 = vld [vmem:[%s2498 + $0xd0] sm:$0xff]
          %2527 = vst [vmem:[%s2499 + $0x270] sm:$0xff] %v2526
          %v2528 = vld [vmem:[%s2498 + $0xe0] sm:$0xff]
          %2529 = vst [vmem:[%s2499 + $0x2a0] sm:$0xff] %v2528
          %v2530 = vld [vmem:[%s2498 + $0xf0] sm:$0xff]
          %2531 = vst [vmem:[%s2499 + $0x2d0] sm:$0xff] %v2530
        $region45: #{rq_prompt_forward.3} parent=39 // loop_footer
          %s2497 = sadd.s32 1, %s2493
        $region46: #{rq_prompt_forward.3} parent=39 // loop_footer_branch
          %2492 = sbr.rel target = $region42
        $region47: #{rq_prompt_forward.3} parent=39 // loop_exit
          _
        %s2532 = sshll.u32 1, %s2487
        %s2533 = ssub.s32 %s2532, 1
        loop: start=0, step=1, limit=1
        $region48: #{rq_prompt_forward.3} parent=39 // loop_pre_header
          _
        $region49: #{rq_prompt_forward.3} parent=39 // loop_header
          %s2535 = sphi 0, %s2539
          %p2536 = scmp.ge.s32.totalorder %s2535, 1
          %s2540 = sphi %s2489, %s2489
          %s2541 = sphi %s2491, %s2491
        $region50: #{rq_prompt_forward.3} parent=39 // loop_header_branch
          %2538 = sbr.rel (%p2536) target = $region54
        $region51: #{rq_prompt_forward.3} parent=39 // loop_body
          %v2542 = vld [vmem:[%s2540] sm:%s2533]
          %2543 = vst [vmem:[%s2541] sm:%s2533] %v2542
          %v2544 = vld [vmem:[%s2540 + $0x10] sm:%s2533]
          %2545 = vst [vmem:[%s2541 + $0x30] sm:%s2533] %v2544
          %v2546 = vld [vmem:[%s2540 + $0x20] sm:%s2533]
          %2547 = vst [vmem:[%s2541 + $0x60] sm:%s2533] %v2546
          %v2548 = vld [vmem:[%s2540 + $0x30] sm:%s2533]
          %2549 = vst [vmem:[%s2541 + $0x90] sm:%s2533] %v2548
          %v2550 = vld [vmem:[%s2540 + $0x40] sm:%s2533]
          %2551 = vst [vmem:[%s2541 + $0xc0] sm:%s2533] %v2550
          %v2552 = vld [vmem:[%s2540 + $0x50] sm:%s2533]
          %2553 = vst [vmem:[%s2541 + $0xf0] sm:%s2533] %v2552
          %v2554 = vld [vmem:[%s2540 + $0x60] sm:%s2533]
          %2555 = vst [vmem:[%s2541 + $0x120] sm:%s2533] %v2554
          %v2556 = vld [vmem:[%s2540 + $0x70] sm:%s2533]
          %2557 = vst [vmem:[%s2541 + $0x150] sm:%s2533] %v2556
          %v2558 = vld [vmem:[%s2540 + $0x80] sm:%s2533]
          %2559 = vst [vmem:[%s2541 + $0x180] sm:%s2533] %v2558
          %v2560 = vld [vmem:[%s2540 + $0x90] sm:%s2533]
          %2561 = vst [vmem:[%s2541 + $0x1b0] sm:%s2533] %v2560
          %v2562 = vld [vmem:[%s2540 + $0xa0] sm:%s2533]
          %2563 = vst [vmem:[%s2541 + $0x1e0] sm:%s2533] %v2562
          %v2564 = vld [vmem:[%s2540 + $0xb0] sm:%s2533]
          %2565 = vst [vmem:[%s2541 + $0x210] sm:%s2533] %v2564
          %v2566 = vld [vmem:[%s2540 + $0xc0] sm:%s2533]
          %2567 = vst [vmem:[%s2541 + $0x240] sm:%s2533] %v2566
          %v2568 = vld [vmem:[%s2540 + $0xd0] sm:%s2533]
          %2569 = vst [vmem:[%s2541 + $0x270] sm:%s2533] %v2568
          %v2570 = vld [vmem:[%s2540 + $0xe0] sm:%s2533]
          %2571 = vst [vmem:[%s2541 + $0x2a0] sm:%s2533] %v2570
          %v2572 = vld [vmem:[%s2540 + $0xf0] sm:%s2533]
          %2573 = vst [vmem:[%s2541 + $0x2d0] sm:%s2533] %v2572
        $region52: #{rq_prompt_forward.3} parent=39 // loop_footer
          %s2539 = sadd.s32 1, %s2535
        $region53: #{rq_prompt_forward.3} parent=39 // loop_footer_branch
          %2534 = sbr.rel target = $region49
        $region54: #{rq_prompt_forward.3} parent=39 // loop_exit
          _
      $region40: #{rq_prompt_forward.3} parent=24 // pred_fallthru
        _
    $region25: #{rq_prompt_forward.3} parent=1 // pred_fallthru
      _
    // Predicated region
    $region26: #{rq_prompt_forward.3} parent=1 // pred_check
      %p2437 = pneg %p2433
    $region27: #{rq_prompt_forward.3} parent=1 // pred_check_branch
      %2439 = sbr.rel (%p2437) target = $region29
    $region28: #{rq_prompt_forward.3} parent=1 // pred_region
      %s2440 = sshll.u32 1, 10
      %s2441 = ssub.s32 %s2440, 1
      loop: start=0, step=1, limit=1
      $region30: #{rq_prompt_forward.3} parent=28 // loop_pre_header
        _
      $region31: #{rq_prompt_forward.3} parent=28 // loop_header
        %s2443 = sphi 0, %s2447
        %p2444 = scmp.ge.s32.totalorder %s2443, 1
        %s2448 = sphi [#allocation2], [#allocation2]
        %s2449 = sphi %s6, %s6
      $region32: #{rq_prompt_forward.3} parent=28 // loop_header_branch
        %2446 = sbr.rel (%p2444) target = $region36
      $region33: #{rq_prompt_forward.3} parent=28 // loop_body
        %v2450 = vld [vmem:[%s2448] sm:%s2441]
        %2451 = vst [vmem:[%s2449] sm:%s2441] %v2450
        %v2452 = vld [vmem:[%s2448 + $0x10] sm:%s2441]
        %2453 = vst [vmem:[%s2449 + $0x30] sm:%s2441] %v2452
        %v2454 = vld [vmem:[%s2448 + $0x20] sm:%s2441]
        %2455 = vst [vmem:[%s2449 + $0x60] sm:%s2441] %v2454
        %v2456 = vld [vmem:[%s2448 + $0x30] sm:%s2441]
        %2457 = vst [vmem:[%s2449 + $0x90] sm:%s2441] %v2456
        %v2458 = vld [vmem:[%s2448 + $0x40] sm:%s2441]
        %2459 = vst [vmem:[%s2449 + $0xc0] sm:%s2441] %v2458
        %v2460 = vld [vmem:[%s2448 + $0x50] sm:%s2441]
        %2461 = vst [vmem:[%s2449 + $0xf0] sm:%s2441] %v2460
        %v2462 = vld [vmem:[%s2448 + $0x60] sm:%s2441]
        %2463 = vst [vmem:[%s2449 + $0x120] sm:%s2441] %v2462
        %v2464 = vld [vmem:[%s2448 + $0x70] sm:%s2441]
        %2465 = vst [vmem:[%s2449 + $0x150] sm:%s2441] %v2464
        %v2466 = vld [vmem:[%s2448 + $0x80] sm:%s2441]
        %2467 = vst [vmem:[%s2449 + $0x180] sm:%s2441] %v2466
        %v2468 = vld [vmem:[%s2448 + $0x90] sm:%s2441]
        %2469 = vst [vmem:[%s2449 + $0x1b0] sm:%s2441] %v2468
        %v2470 = vld [vmem:[%s2448 + $0xa0] sm:%s2441]
        %2471 = vst [vmem:[%s2449 + $0x1e0] sm:%s2441] %v2470
        %v2472 = vld [vmem:[%s2448 + $0xb0] sm:%s2441]
        %2473 = vst [vmem:[%s2449 + $0x210] sm:%s2441] %v2472
        %v2474 = vld [vmem:[%s2448 + $0xc0] sm:%s2441]
        %2475 = vst [vmem:[%s2449 + $0x240] sm:%s2441] %v2474
        %v2476 = vld [vmem:[%s2448 + $0xd0] sm:%s2441]
        %2477 = vst [vmem:[%s2449 + $0x270] sm:%s2441] %v2476
        %v2478 = vld [vmem:[%s2448 + $0xe0] sm:%s2441]
        %2479 = vst [vmem:[%s2449 + $0x2a0] sm:%s2441] %v2478
        %v2480 = vld [vmem:[%s2448 + $0xf0] sm:%s2441]
        %2481 = vst [vmem:[%s2449 + $0x2d0] sm:%s2441] %v2480
      $region34: #{rq_prompt_forward.3} parent=28 // loop_footer
        %s2447 = sadd.s32 1, %s2443
      $region35: #{rq_prompt_forward.3} parent=28 // loop_footer_branch
        %2442 = sbr.rel target = $region31
      $region36: #{rq_prompt_forward.3} parent=28 // loop_exit
        _
    $region29: #{rq_prompt_forward.3} parent=1 // pred_fallthru
      _
    // Predicated region
    $region55: #{rq_prompt_forward.3} parent=1 // pred_check
      _
    $region56: #{rq_prompt_forward.3} parent=1 // pred_check_branch
      %2576 = sbr.rel (0) target = $region58
    $region57: #{rq_prompt_forward.3} parent=1 // pred_region
      %2577 = vsyncadd [#allocation3], 2560
    $region58: #{rq_prompt_forward.3} parent=1 // pred_fallthru
      _
    %s2578 = sadd.f32 %s290, %s603
    %s2579 = scalar_lea.smem [#allocation4], 0
    %2580 = sst [smem:[%s2579]] %s2578
    %s2581 = smul.u32 16, 10
    %s2582 = smul.u32 %s2581, 1
    %s2583 = sshll.u32 %s2582, 4
    %2584 = dma.done [#allocation3], %s2583
    // Predicated region
    $region59: #{rq_prompt_forward.3} parent=1 // pred_check
      _
    $region60: #{rq_prompt_forward.3} parent=1 // pred_check_branch
      %2586 = sbr.rel (0) target = $region62
    $region61: #{rq_prompt_forward.3} parent=1 // pred_region
      %s2588 = ssub.s32 16, 16
      %2589 = vsyncadd [#allocation5], %s2588
      %2592 = dma.smem_to_hbm [#allocation4], 16, %s7, [#allocation5]
    $region62: #{rq_prompt_forward.3} parent=1 // pred_fallthru
      _
    // Predicated region
    $region63: #{rq_prompt_forward.3} parent=1 // pred_check
      _
    $region64: #{rq_prompt_forward.3} parent=1 // pred_check_branch
      %2594 = sbr.rel (0) target = $region66
    $region65: #{rq_prompt_forward.3} parent=1 // pred_region
      %2595 = dma.done [#allocation5], 16
    $region66: #{rq_prompt_forward.3} parent=1 // pred_fallthru
      _
    %2596 = sfence
    %2597 = vsyncpa [#allocation5], 1
  %2598 = vsyncmov [#allocation3]
  %s2599 = vpop.sfrf %2598
  %p2600 = scmp.eq.s32.totalorder %s2599, 0
  %p2601 = pneg %p2600
  %2603 = shalt.err (%p2601)

</llo_original>
